<compile_context>
chip_gen: v6e
topology: v6e:2x2x1
jax: 0.10.0
libtpu: 0.0.40
codegen_flags: <defaults>
</compile_context>

<pallas_src>
import functools

import jax
import jax.numpy as jnp
import numpy as np
from jax.experimental import pallas as pl
from jax.experimental.pallas import tpu as pltpu

EPS = 1e-3  # nn.BatchNorm2d(chann, eps=0.001)


# ----------------------------------------------------------------------------
# Fused Pallas kernel: the whole non_bottleneck_1d block for one batch element.
# ----------------------------------------------------------------------------
def _nb1d_kernel(x_ref, w_ref, s_ref, o_ref, buf, *, H, W, C, dil, P):
    """x_ref: (1, H*W, C) f32 input tile.
    w_ref: (12, C, C) bf16 = 4 convs x 3 taps, (Cin, Cout), BN scale folded in.
    s_ref: (4, 1, C) f32 per-conv shift (bias, or BN-folded bias).
    o_ref: (1, H*W, C) f32 output tile.
    buf  : (H*W + 2*P, C) f32 scratch; P = W * max(1, dil) rows of zero halo on
           each side covers every conv's receptive field."""
    HW = H * W

    # Halo regions are only ever read, never written -> zero the buffer once
    # per invocation (safe under "parallel" grid semantics).
    buf[...] = jnp.zeros_like(buf)

    x = x_ref[0]                                                # (HW, C) f32
    # w-position of every flattened row, for masking 1x3 taps at row edges.
    wpos = jax.lax.broadcasted_iota(jnp.int32, (HW, 1), 0) % W

    def conv3(y, idx, step, wmask_d=None):
        """3-tap separable conv (+ folded BN / bias) as 3 shifted-slice matmuls.

        step    : flattened-row offset between taps (W*d for a 3x1 conv along H,
                  d for a 1x3 conv along W).
        wmask_d : for 1x3 convs, taps whose shift crossed an image-row boundary
                  must read padding -> mask those contributions to zero.
        """
        buf[pl.ds(P, HW), :] = y                                # write interior
        yb = y.astype(jnp.bfloat16)
        s0 = buf[pl.ds(P - step, HW), :].astype(jnp.bfloat16)   # tap at -step
        s2 = buf[pl.ds(P + step, HW), :].astype(jnp.bfloat16)   # tap at +step
        acc = jnp.dot(yb, w_ref[3 * idx + 1], preferred_element_type=jnp.float32)
        c0 = jnp.dot(s0, w_ref[3 * idx + 0], preferred_element_type=jnp.float32)
        c2 = jnp.dot(s2, w_ref[3 * idx + 2], preferred_element_type=jnp.float32)
        if wmask_d is not None:
            c0 = jnp.where(wpos >= wmask_d, c0, 0.0)
            c2 = jnp.where(wpos < W - wmask_d, c2, 0.0)
        return acc + c0 + c2 + s_ref[idx]                       # (HW, C) f32

    y = jnp.maximum(conv3(x, 0, W), 0.0)                 # conv3x1_1 + ReLU
    y = jnp.maximum(conv3(y, 1, 1, wmask_d=1), 0.0)      # conv1x3_1 + BN1 + ReLU
    y = jnp.maximum(conv3(y, 2, W * dil), 0.0)           # conv3x1_2 + ReLU
    y = conv3(y, 3, dil, wmask_d=dil) + x                # conv1x3_2 + BN2 + residual
    o_ref[0] = jnp.maximum(y, 0.0).astype(o_ref.dtype)   # final ReLU


# ----------------------------------------------------------------------------
# Parameter folding (BN running-stats -> weight scale + shift), wrapper call.
# ----------------------------------------------------------------------------
def _fold_params(p):
    """Returns (w_stack (12, Cin, Cout) bf16, s_stack (4, 1, C) f32)."""

    def taps(w):  # (O, I, kh, kw) with kh*kw == 3  ->  (3, I, O)
        o, i = w.shape[:2]
        return jnp.transpose(w.reshape(o, i, 3), (2, 1, 0))

    def fold_bn(w3, b, bn):
        g, be, m, v = bn
        sc = g / jnp.sqrt(v + EPS)
        return w3 * sc[None, None, :], (b - m) * sc + be

    w1 = taps(p["conv3x1_1"][0]); s1 = p["conv3x1_1"][1]
    w2, s2 = fold_bn(taps(p["conv1x3_1"][0]), p["conv1x3_1"][1], p["bn1"])
    w3 = taps(p["conv3x1_2"][0]); s3 = p["conv3x1_2"][1]
    w4, s4 = fold_bn(taps(p["conv1x3_2"][0]), p["conv1x3_2"][1], p["bn2"])

    c = w1.shape[-1]
    w_stack = jnp.concatenate([w1, w2, w3, w4], axis=0).astype(jnp.bfloat16)
    s_stack = jnp.stack([s1, s2, s3, s4], axis=0).reshape(4, 1, c).astype(jnp.float32)
    return w_stack, s_stack


def non_bottleneck_1d_forward(x_nchw, params, dilated=1):
    """PyTorch-equivalent forward (eval semantics, dropout p == 0)."""
    n, c, h, w = x_nchw.shape
    hw = h * w
    pad_rows = w * max(1, int(dilated))                  # halo rows each side

    w_stack, s_stack = _fold_params(params)
    x2d = jnp.transpose(x_nchw, (0, 2, 3, 1)).reshape(n, hw, c)  # NCHW -> (N,HW,C)

    kernel = functools.partial(_nb1d_kernel, H=h, W=w, C=c,
                               dil=int(dilated), P=pad_rows)
    out = pl.pallas_call(
        kernel,
        out_shape=jax.ShapeDtypeStruct((n, hw, c), jnp.float32),
        grid_spec=pltpu.PrefetchScalarGridSpec(
            num_scalar_prefetch=0,
            grid=(n,),
            in_specs=[
                pl.BlockSpec((1, hw, c), lambda i: (i, 0, 0)),     # input image
                pl.BlockSpec((12, c, c), lambda i: (0, 0, 0)),     # folded weights
                pl.BlockSpec((4, 1, c), lambda i: (0, 0, 0)),      # shifts
            ],
            out_specs=pl.BlockSpec((1, hw, c), lambda i: (i, 0, 0)),
            scratch_shapes=[pltpu.VMEM((hw + 2 * pad_rows, c), jnp.float32)],
        ),
        compiler_params=pltpu.CompilerParams(
            dimension_semantics=("parallel",)),
    )(x2d, w_stack, s_stack)

    return jnp.transpose(out.reshape(n, h, w, c), (0, 3, 1, 2))   # -> NCHW


# ----------------------------------------------------------------------------
# Pure-JAX reference (PyTorch eval semantics) and deterministic init.
# ----------------------------------------------------------------------------
def _ref_forward(x, p, dilated):
    d = int(dilated)

    def conv(z, wb, pad, rhs_dil):
        w, b = wb
        y = jax.lax.conv_general_dilated(
            z, w, window_strides=(1, 1), padding=pad, rhs_dilation=rhs_dil,
            dimension_numbers=("NCHW", "OIHW", "NCHW"))
        return y + b[None, :, None, None]

    def bn(z, bnp):
        g, be, m, v = bnp
        inv = g / jnp.sqrt(v + EPS)
        return (z - m[None, :, None, None]) * inv[None, :, None, None] \
            + be[None, :, None, None]

    out = jax.nn.relu(conv(x, p["conv3x1_1"], [(1, 1), (0, 0)], (1, 1)))
    out = jax.nn.relu(bn(conv(out, p["conv1x3_1"], [(0, 0), (1, 1)], (1, 1)),
                         p["bn1"]))
    out = jax.nn.relu(conv(out, p["conv3x1_2"], [(d, d), (0, 0)], (d, 1)))
    out = bn(conv(out, p["conv1x3_2"], [(0, 0), (d, d)], (1, d)), p["bn2"])
    return jax.nn.relu(out + x)            # dropout p == 0 -> skipped


def init_nb1d_params(key, chann):
    ks = jax.random.split(key, 10)

    def conv_init(kw, kb, shape):
        fan = shape[1] * shape[2] * shape[3]
        w = jax.random.normal(kw, shape, jnp.float32) / np.sqrt(fan)
        b = 0.05 * jax.random.normal(kb, (shape[0],), jnp.float32)
        return (w, b)

    def bn_init(k):
        k1, k2, k3, k4 = jax.random.split(k, 4)
        gamma = 1.0 + 0.1 * jax.random.normal(k1, (chann,), jnp.float32)
        beta = 0.1 * jax.random.normal(k2, (chann,), jnp.float32)
        mean = 0.1 * jax.random.normal(k3, (chann,), jnp.float32)
        var = jax.random.uniform(k4, (chann,), jnp.float32, minval=0.5, maxval=1.5)
        return (gamma, beta, mean, var)

    return {
        "conv3x1_1": conv_init(ks[0], ks[1], (chann, chann, 3, 1)),
        "conv1x3_1": conv_init(ks[2], ks[3], (chann, chann, 1, 3)),
        "bn1": bn_init(ks[8]),
        "conv3x1_2": conv_init(ks[4], ks[5], (chann, chann, 3, 1)),
        "conv1x3_2": conv_init(ks[6], ks[7], (chann, chann, 1, 3)),
        "bn2": bn_init(ks[9]),
    }


# ----------------------------------------------------------------------------
if __name__ == "__main__":
    # non_bottleneck_1d(chann=128, dropprob=0.0, dilated=2) on a small map.
    N, CHANN, H, W = 2, 128, 16, 16
    DILATED = 2

    key = jax.random.PRNGKey(0)
    kp, kx = jax.random.split(key)
    params = init_nb1d_params(kp, CHANN)
    x = jax.random.normal(kx, (N, CHANN, H, W), jnp.float32)     # NCHW

    fwd = jax.jit(functools.partial(non_bottleneck_1d_forward, dilated=DILATED))
    out = jax.block_until_ready(fwd(x, params))

    assert out.shape == (N, CHANN, H, W), out.shape
    assert out.dtype == jnp.float32
    assert bool(jnp.all(jnp.isfinite(out)))

    # Validate against a pure-JAX f32 reference (loose tol: bf16 MXU operands).
    ref = jax.block_until_ready(_ref_forward(x, params, DILATED))
    np.testing.assert_allclose(np.asarray(out), np.asarray(ref),
                               rtol=0.1, atol=0.1)

    print("KERNEL_OK")
</pallas_src>

<mosaic_0001>
module attributes {stable_mosaic.version = 11 : i64} {
  func.func @_nb1d_kernel(%arg0: i32, %arg1: memref<1x256x128xf32, #tpu.memory_space<vmem>>, %arg2: memref<12x128x128xbf16, #tpu.memory_space<vmem>>, %arg3: memref<4x1x128xf32, #tpu.memory_space<vmem>>, %arg4: memref<1x256x128xf32, #tpu.memory_space<vmem>>, %arg5: memref<320x128xf32, #tpu.memory_space<vmem>>) attributes {dimension_semantics = [#tpu.dimension_semantics<parallel>], iteration_bounds = array<i64: 2>, scalar_prefetch = 0 : i64, scratch_operands = 1 : i64, tpu.core_type = #tpu.core_type<tc>, window_params = [{transform_indices = @transform_0, window_bounds = array<i64: 1, 256, 128>}, {pipeline_mode = #tpu.pipeline_mode<synchronous>, transform_indices = @transform_1, window_bounds = array<i64: 12, 128, 128>}, {pipeline_mode = #tpu.pipeline_mode<synchronous>, transform_indices = @transform_2, window_bounds = array<i64: 4, 1, 128>}, {transform_indices = @transform_3, window_bounds = array<i64: 1, 256, 128>}]} {
    %cst = arith.constant 0.000000e+00 : f32
    %0 = vector.broadcast %cst : f32 to vector<320x128xf32>
    %c0 = arith.constant 0 : index
    %c0_0 = arith.constant 0 : index
    %1 = vector.load %arg5[%c0, %c0_0] : memref<320x128xf32, #tpu.memory_space<vmem>>, vector<320x128xf32>
    tpu.vector_store %arg5[%c0, %c0_0], %0 {strides = array<i32>} : memref<320x128xf32, #tpu.memory_space<vmem>>, vector<320x128xf32>,
    %c0_1 = arith.constant 0 : index
    %c0_2 = arith.constant 0 : index
    %c0_3 = arith.constant 0 : index
    %2 = vector.load %arg1[%c0_1, %c0_2, %c0_3] : memref<1x256x128xf32, #tpu.memory_space<vmem>>, vector<1x256x128xf32>
    %3 = vector.shape_cast %2 : vector<1x256x128xf32> to vector<256x128xf32>
    %4 = tpu.iota {dimensions = array<i32: 0>} : vector<256x1xi32>
    %c16_i32 = arith.constant 16 : i32
    %c0_i32 = arith.constant 0 : i32
    %5 = arith.cmpi eq, %c16_i32, %c0_i32 : i32
    %c1_i32 = arith.constant 1 : i32
    %6 = arith.select %5, %c1_i32, %c16_i32 : i32
    %7 = vector.broadcast %6 : i32 to vector<256x1xi32>
    %8 = arith.remsi %4, %7 : vector<256x1xi32>
    %c0_i32_4 = arith.constant 0 : i32
    %9 = vector.broadcast %c0_i32_4 : i32 to vector<256x1xi32>
    %10 = arith.cmpi ne, %8, %9 : vector<256x1xi32>
    %c0_i32_5 = arith.constant 0 : i32
    %11 = vector.broadcast %c0_i32_5 : i32 to vector<256x1xi32>
    %12 = arith.cmpi slt, %8, %11 : vector<256x1xi32>
    %c0_i32_6 = arith.constant 0 : i32
    %13 = arith.cmpi slt, %6, %c0_i32_6 : i32
    %14 = vector.broadcast %13 : i1 to vector<256x1xi1>
    %15 = vector.broadcast %14 : vector<256x1xi1> to vector<256x1xi1>
    %16 = arith.xori %12, %15 : vector<256x1xi1>
    %17 = arith.andi %16, %10 : vector<256x1xi1>
    %18 = vector.broadcast %6 : i32 to vector<256x1xi32>
    %19 = arith.addi %8, %18 : vector<256x1xi32>
    %20 = arith.select %17, %19, %8 : vector<256x1xi1>, vector<256x1xi32>
    %c32 = arith.constant 32 : index
    %c0_7 = arith.constant 0 : index
    %21 = vector.load %arg5[%c32, %c0_7] : memref<320x128xf32, #tpu.memory_space<vmem>>, vector<256x128xf32>
    tpu.vector_store %arg5[%c32, %c0_7], %3 {strides = array<i32>} : memref<320x128xf32, #tpu.memory_space<vmem>>, vector<256x128xf32>,
    %22 = arith.truncf %3 : vector<256x128xf32> to vector<256x128xbf16>
    %c16 = arith.constant 16 : index
    %c0_8 = arith.constant 0 : index
    %23 = vector.load %arg5[%c16, %c0_8] : memref<320x128xf32, #tpu.memory_space<vmem>>, vector<256x128xf32>
    %24 = arith.truncf %23 : vector<256x128xf32> to vector<256x128xbf16>
    %c48 = arith.constant 48 : index
    %c0_9 = arith.constant 0 : index
    %25 = vector.load %arg5[%c48, %c0_9] : memref<320x128xf32, #tpu.memory_space<vmem>>, vector<256x128xf32>
    %26 = arith.truncf %25 : vector<256x128xf32> to vector<256x128xbf16>
    %c1 = arith.constant 1 : index
    %c0_10 = arith.constant 0 : index
    %c0_11 = arith.constant 0 : index
    %27 = vector.load %arg2[%c1, %c0_10, %c0_11] : memref<12x128x128xbf16, #tpu.memory_space<vmem>>, vector<1x128x128xbf16>
    %28 = vector.shape_cast %27 : vector<1x128x128xbf16> to vector<128x128xbf16>
    %cst_12 = arith.constant dense<0.000000e+00> : vector<256x128xf32>
    %29 = tpu.matmul %22, %28, %cst_12 {dimension_numbers = #tpu.dot_dimension_numbers<[1], [0], [0], [1], [0, 0, 1, 1], [], []>} : vector<256x128xbf16>, vector<128x128xbf16>, vector<256x128xf32> -> vector<256x128xf32>
    %c0_13 = arith.constant 0 : index
    %c0_14 = arith.constant 0 : index
    %c0_15 = arith.constant 0 : index
    %30 = vector.load %arg2[%c0_13, %c0_14, %c0_15] : memref<12x128x128xbf16, #tpu.memory_space<vmem>>, vector<1x128x128xbf16>
    %31 = vector.shape_cast %30 : vector<1x128x128xbf16> to vector<128x128xbf16>
    %cst_16 = arith.constant dense<0.000000e+00> : vector<256x128xf32>
    %32 = tpu.matmul %24, %31, %cst_16 {dimension_numbers = #tpu.dot_dimension_numbers<[1], [0], [0], [1], [0, 0, 1, 1], [], []>} : vector<256x128xbf16>, vector<128x128xbf16>, vector<256x128xf32> -> vector<256x128xf32>
    %c2 = arith.constant 2 : index
    %c0_17 = arith.constant 0 : index
    %c0_18 = arith.constant 0 : index
    %33 = vector.load %arg2[%c2, %c0_17, %c0_18] : memref<12x128x128xbf16, #tpu.memory_space<vmem>>, vector<1x128x128xbf16>
    %34 = vector.shape_cast %33 : vector<1x128x128xbf16> to vector<128x128xbf16>
    %cst_19 = arith.constant dense<0.000000e+00> : vector<256x128xf32>
    %35 = tpu.matmul %26, %34, %cst_19 {dimension_numbers = #tpu.dot_dimension_numbers<[1], [0], [0], [1], [0, 0, 1, 1], [], []>} : vector<256x128xbf16>, vector<128x128xbf16>, vector<256x128xf32> -> vector<256x128xf32>
    %36 = arith.addf %29, %32 : vector<256x128xf32>
    %37 = arith.addf %36, %35 : vector<256x128xf32>
    %c0_20 = arith.constant 0 : index
    %c0_21 = arith.constant 0 : index
    %c0_22 = arith.constant 0 : index
    %38 = vector.load %arg3[%c0_20, %c0_21, %c0_22] : memref<4x1x128xf32, #tpu.memory_space<vmem>>, vector<1x1x128xf32>
    %39 = vector.shape_cast %38 : vector<1x1x128xf32> to vector<1x128xf32>
    %40 = vector.broadcast %39 : vector<1x128xf32> to vector<256x128xf32>
    %41 = arith.addf %37, %40 : vector<256x128xf32>
    %cst_23 = arith.constant 0.000000e+00 : f32
    %42 = vector.broadcast %cst_23 : f32 to vector<256x128xf32>
    %43 = arith.maximumf %41, %42 : vector<256x128xf32>
    %c32_24 = arith.constant 32 : index
    %c0_25 = arith.constant 0 : index
    %44 = vector.load %arg5[%c32_24, %c0_25] : memref<320x128xf32, #tpu.memory_space<vmem>>, vector<256x128xf32>
    tpu.vector_store %arg5[%c32_24, %c0_25], %43 {strides = array<i32>} : memref<320x128xf32, #tpu.memory_space<vmem>>, vector<256x128xf32>,
    %45 = arith.truncf %43 : vector<256x128xf32> to vector<256x128xbf16>
    %c31 = arith.constant 31 : index
    %c0_26 = arith.constant 0 : index
    %46 = vector.load %arg5[%c31, %c0_26] : memref<320x128xf32, #tpu.memory_space<vmem>>, vector<256x128xf32>
    %47 = arith.truncf %46 : vector<256x128xf32> to vector<256x128xbf16>
    %c33 = arith.constant 33 : index
    %c0_27 = arith.constant 0 : index
    %48 = vector.load %arg5[%c33, %c0_27] : memref<320x128xf32, #tpu.memory_space<vmem>>, vector<256x128xf32>
    %49 = arith.truncf %48 : vector<256x128xf32> to vector<256x128xbf16>
    %c4 = arith.constant 4 : index
    %c0_28 = arith.constant 0 : index
    %c0_29 = arith.constant 0 : index
    %50 = vector.load %arg2[%c4, %c0_28, %c0_29] : memref<12x128x128xbf16, #tpu.memory_space<vmem>>, vector<1x128x128xbf16>
    %51 = vector.shape_cast %50 : vector<1x128x128xbf16> to vector<128x128xbf16>
    %cst_30 = arith.constant dense<0.000000e+00> : vector<256x128xf32>
    %52 = tpu.matmul %45, %51, %cst_30 {dimension_numbers = #tpu.dot_dimension_numbers<[1], [0], [0], [1], [0, 0, 1, 1], [], []>} : vector<256x128xbf16>, vector<128x128xbf16>, vector<256x128xf32> -> vector<256x128xf32>
    %c3 = arith.constant 3 : index
    %c0_31 = arith.constant 0 : index
    %c0_32 = arith.constant 0 : index
    %53 = vector.load %arg2[%c3, %c0_31, %c0_32] : memref<12x128x128xbf16, #tpu.memory_space<vmem>>, vector<1x128x128xbf16>
    %54 = vector.shape_cast %53 : vector<1x128x128xbf16> to vector<128x128xbf16>
    %cst_33 = arith.constant dense<0.000000e+00> : vector<256x128xf32>
    %55 = tpu.matmul %47, %54, %cst_33 {dimension_numbers = #tpu.dot_dimension_numbers<[1], [0], [0], [1], [0, 0, 1, 1], [], []>} : vector<256x128xbf16>, vector<128x128xbf16>, vector<256x128xf32> -> vector<256x128xf32>
    %c5 = arith.constant 5 : index
    %c0_34 = arith.constant 0 : index
    %c0_35 = arith.constant 0 : index
    %56 = vector.load %arg2[%c5, %c0_34, %c0_35] : memref<12x128x128xbf16, #tpu.memory_space<vmem>>, vector<1x128x128xbf16>
    %57 = vector.shape_cast %56 : vector<1x128x128xbf16> to vector<128x128xbf16>
    %cst_36 = arith.constant dense<0.000000e+00> : vector<256x128xf32>
    %58 = tpu.matmul %49, %57, %cst_36 {dimension_numbers = #tpu.dot_dimension_numbers<[1], [0], [0], [1], [0, 0, 1, 1], [], []>} : vector<256x128xbf16>, vector<128x128xbf16>, vector<256x128xf32> -> vector<256x128xf32>
    %c1_i32_37 = arith.constant 1 : i32
    %59 = vector.broadcast %c1_i32_37 : i32 to vector<256x1xi32>
    %60 = arith.cmpi sge, %20, %59 : vector<256x1xi32>
    %cst_38 = arith.constant 0.000000e+00 : f32
    %61 = vector.shape_cast %60 : vector<256x1xi1> to vector<256x1xi1>
    %62 = vector.broadcast %61 : vector<256x1xi1> to vector<256x128xi1>
    %63 = vector.broadcast %cst_38 : f32 to vector<256x128xf32>
    %64 = arith.select %62, %55, %63 : vector<256x128xi1>, vector<256x128xf32>
    %c15_i32 = arith.constant 15 : i32
    %65 = vector.broadcast %c15_i32 : i32 to vector<256x1xi32>
    %66 = arith.cmpi slt, %20, %65 : vector<256x1xi32>
    %cst_39 = arith.constant 0.000000e+00 : f32
    %67 = vector.shape_cast %66 : vector<256x1xi1> to vector<256x1xi1>
    %68 = vector.broadcast %67 : vector<256x1xi1> to vector<256x128xi1>
    %69 = vector.broadcast %cst_39 : f32 to vector<256x128xf32>
    %70 = arith.select %68, %58, %69 : vector<256x128xi1>, vector<256x128xf32>
    %71 = arith.addf %52, %64 : vector<256x128xf32>
    %72 = arith.addf %71, %70 : vector<256x128xf32>
    %c1_40 = arith.constant 1 : index
    %c0_41 = arith.constant 0 : index
    %c0_42 = arith.constant 0 : index
    %73 = vector.load %arg3[%c1_40, %c0_41, %c0_42] : memref<4x1x128xf32, #tpu.memory_space<vmem>>, vector<1x1x128xf32>
    %74 = vector.shape_cast %73 : vector<1x1x128xf32> to vector<1x128xf32>
    %75 = vector.broadcast %74 : vector<1x128xf32> to vector<256x128xf32>
    %76 = arith.addf %72, %75 : vector<256x128xf32>
    %cst_43 = arith.constant 0.000000e+00 : f32
    %77 = vector.broadcast %cst_43 : f32 to vector<256x128xf32>
    %78 = arith.maximumf %76, %77 : vector<256x128xf32>
    %c32_44 = arith.constant 32 : index
    %c0_45 = arith.constant 0 : index
    %79 = vector.load %arg5[%c32_44, %c0_45] : memref<320x128xf32, #tpu.memory_space<vmem>>, vector<256x128xf32>
    tpu.vector_store %arg5[%c32_44, %c0_45], %78 {strides = array<i32>} : memref<320x128xf32, #tpu.memory_space<vmem>>, vector<256x128xf32>,
    %80 = arith.truncf %78 : vector<256x128xf32> to vector<256x128xbf16>
    %c0_46 = arith.constant 0 : index
    %c0_47 = arith.constant 0 : index
    %81 = vector.load %arg5[%c0_46, %c0_47] : memref<320x128xf32, #tpu.memory_space<vmem>>, vector<256x128xf32>
    %82 = arith.truncf %81 : vector<256x128xf32> to vector<256x128xbf16>
    %c64 = arith.constant 64 : index
    %c0_48 = arith.constant 0 : index
    %83 = vector.load %arg5[%c64, %c0_48] : memref<320x128xf32, #tpu.memory_space<vmem>>, vector<256x128xf32>
    %84 = arith.truncf %83 : vector<256x128xf32> to vector<256x128xbf16>
    %c7 = arith.constant 7 : index
    %c0_49 = arith.constant 0 : index
    %c0_50 = arith.constant 0 : index
    %85 = vector.load %arg2[%c7, %c0_49, %c0_50] : memref<12x128x128xbf16, #tpu.memory_space<vmem>>, vector<1x128x128xbf16>
    %86 = vector.shape_cast %85 : vector<1x128x128xbf16> to vector<128x128xbf16>
    %cst_51 = arith.constant dense<0.000000e+00> : vector<256x128xf32>
    %87 = tpu.matmul %80, %86, %cst_51 {dimension_numbers = #tpu.dot_dimension_numbers<[1], [0], [0], [1], [0, 0, 1, 1], [], []>} : vector<256x128xbf16>, vector<128x128xbf16>, vector<256x128xf32> -> vector<256x128xf32>
    %c6 = arith.constant 6 : index
    %c0_52 = arith.constant 0 : index
    %c0_53 = arith.constant 0 : index
    %88 = vector.load %arg2[%c6, %c0_52, %c0_53] : memref<12x128x128xbf16, #tpu.memory_space<vmem>>, vector<1x128x128xbf16>
    %89 = vector.shape_cast %88 : vector<1x128x128xbf16> to vector<128x128xbf16>
    %cst_54 = arith.constant dense<0.000000e+00> : vector<256x128xf32>
    %90 = tpu.matmul %82, %89, %cst_54 {dimension_numbers = #tpu.dot_dimension_numbers<[1], [0], [0], [1], [0, 0, 1, 1], [], []>} : vector<256x128xbf16>, vector<128x128xbf16>, vector<256x128xf32> -> vector<256x128xf32>
    %c8 = arith.constant 8 : index
    %c0_55 = arith.constant 0 : index
    %c0_56 = arith.constant 0 : index
    %91 = vector.load %arg2[%c8, %c0_55, %c0_56] : memref<12x128x128xbf16, #tpu.memory_space<vmem>>, vector<1x128x128xbf16>
    %92 = vector.shape_cast %91 : vector<1x128x128xbf16> to vector<128x128xbf16>
    %cst_57 = arith.constant dense<0.000000e+00> : vector<256x128xf32>
    %93 = tpu.matmul %84, %92, %cst_57 {dimension_numbers = #tpu.dot_dimension_numbers<[1], [0], [0], [1], [0, 0, 1, 1], [], []>} : vector<256x128xbf16>, vector<128x128xbf16>, vector<256x128xf32> -> vector<256x128xf32>
    %94 = arith.addf %87, %90 : vector<256x128xf32>
    %95 = arith.addf %94, %93 : vector<256x128xf32>
    %c2_58 = arith.constant 2 : index
    %c0_59 = arith.constant 0 : index
    %c0_60 = arith.constant 0 : index
    %96 = vector.load %arg3[%c2_58, %c0_59, %c0_60] : memref<4x1x128xf32, #tpu.memory_space<vmem>>, vector<1x1x128xf32>
    %97 = vector.shape_cast %96 : vector<1x1x128xf32> to vector<1x128xf32>
    %98 = vector.broadcast %97 : vector<1x128xf32> to vector<256x128xf32>
    %99 = arith.addf %95, %98 : vector<256x128xf32>
    %cst_61 = arith.constant 0.000000e+00 : f32
    %100 = vector.broadcast %cst_61 : f32 to vector<256x128xf32>
    %101 = arith.maximumf %99, %100 : vector<256x128xf32>
    %c32_62 = arith.constant 32 : index
    %c0_63 = arith.constant 0 : index
    %102 = vector.load %arg5[%c32_62, %c0_63] : memref<320x128xf32, #tpu.memory_space<vmem>>, vector<256x128xf32>
    tpu.vector_store %arg5[%c32_62, %c0_63], %101 {strides = array<i32>} : memref<320x128xf32, #tpu.memory_space<vmem>>, vector<256x128xf32>,
    %103 = arith.truncf %101 : vector<256x128xf32> to vector<256x128xbf16>
    %c30 = arith.constant 30 : index
    %c0_64 = arith.constant 0 : index
    %104 = vector.load %arg5[%c30, %c0_64] : memref<320x128xf32, #tpu.memory_space<vmem>>, vector<256x128xf32>
    %105 = arith.truncf %104 : vector<256x128xf32> to vector<256x128xbf16>
    %c34 = arith.constant 34 : index
    %c0_65 = arith.constant 0 : index
    %106 = vector.load %arg5[%c34, %c0_65] : memref<320x128xf32, #tpu.memory_space<vmem>>, vector<256x128xf32>
    %107 = arith.truncf %106 : vector<256x128xf32> to vector<256x128xbf16>
    %c10 = arith.constant 10 : index
    %c0_66 = arith.constant 0 : index
    %c0_67 = arith.constant 0 : index
    %108 = vector.load %arg2[%c10, %c0_66, %c0_67] : memref<12x128x128xbf16, #tpu.memory_space<vmem>>, vector<1x128x128xbf16>
    %109 = vector.shape_cast %108 : vector<1x128x128xbf16> to vector<128x128xbf16>
    %cst_68 = arith.constant dense<0.000000e+00> : vector<256x128xf32>
    %110 = tpu.matmul %103, %109, %cst_68 {dimension_numbers = #tpu.dot_dimension_numbers<[1], [0], [0], [1], [0, 0, 1, 1], [], []>} : vector<256x128xbf16>, vector<128x128xbf16>, vector<256x128xf32> -> vector<256x128xf32>
    %c9 = arith.constant 9 : index
    %c0_69 = arith.constant 0 : index
    %c0_70 = arith.constant 0 : index
    %111 = vector.load %arg2[%c9, %c0_69, %c0_70] : memref<12x128x128xbf16, #tpu.memory_space<vmem>>, vector<1x128x128xbf16>
    %112 = vector.shape_cast %111 : vector<1x128x128xbf16> to vector<128x128xbf16>
    %cst_71 = arith.constant dense<0.000000e+00> : vector<256x128xf32>
    %113 = tpu.matmul %105, %112, %cst_71 {dimension_numbers = #tpu.dot_dimension_numbers<[1], [0], [0], [1], [0, 0, 1, 1], [], []>} : vector<256x128xbf16>, vector<128x128xbf16>, vector<256x128xf32> -> vector<256x128xf32>
    %c11 = arith.constant 11 : index
    %c0_72 = arith.constant 0 : index
    %c0_73 = arith.constant 0 : index
    %114 = vector.load %arg2[%c11, %c0_72, %c0_73] : memref<12x128x128xbf16, #tpu.memory_space<vmem>>, vector<1x128x128xbf16>
    %115 = vector.shape_cast %114 : vector<1x128x128xbf16> to vector<128x128xbf16>
    %cst_74 = arith.constant dense<0.000000e+00> : vector<256x128xf32>
    %116 = tpu.matmul %107, %115, %cst_74 {dimension_numbers = #tpu.dot_dimension_numbers<[1], [0], [0], [1], [0, 0, 1, 1], [], []>} : vector<256x128xbf16>, vector<128x128xbf16>, vector<256x128xf32> -> vector<256x128xf32>
    %c2_i32 = arith.constant 2 : i32
    %117 = vector.broadcast %c2_i32 : i32 to vector<256x1xi32>
    %118 = arith.cmpi sge, %20, %117 : vector<256x1xi32>
    %cst_75 = arith.constant 0.000000e+00 : f32
    %119 = vector.shape_cast %118 : vector<256x1xi1> to vector<256x1xi1>
    %120 = vector.broadcast %119 : vector<256x1xi1> to vector<256x128xi1>
    %121 = vector.broadcast %cst_75 : f32 to vector<256x128xf32>
    %122 = arith.select %120, %113, %121 : vector<256x128xi1>, vector<256x128xf32>
    %c14_i32 = arith.constant 14 : i32
    %123 = vector.broadcast %c14_i32 : i32 to vector<256x1xi32>
    %124 = arith.cmpi slt, %20, %123 : vector<256x1xi32>
    %cst_76 = arith.constant 0.000000e+00 : f32
    %125 = vector.shape_cast %124 : vector<256x1xi1> to vector<256x1xi1>
    %126 = vector.broadcast %125 : vector<256x1xi1> to vector<256x128xi1>
    %127 = vector.broadcast %cst_76 : f32 to vector<256x128xf32>
    %128 = arith.select %126, %116, %127 : vector<256x128xi1>, vector<256x128xf32>
    %129 = arith.addf %110, %122 : vector<256x128xf32>
    %130 = arith.addf %129, %128 : vector<256x128xf32>
    %c3_77 = arith.constant 3 : index
    %c0_78 = arith.constant 0 : index
    %c0_79 = arith.constant 0 : index
    %131 = vector.load %arg3[%c3_77, %c0_78, %c0_79] : memref<4x1x128xf32, #tpu.memory_space<vmem>>, vector<1x1x128xf32>
    %132 = vector.shape_cast %131 : vector<1x1x128xf32> to vector<1x128xf32>
    %133 = vector.broadcast %132 : vector<1x128xf32> to vector<256x128xf32>
    %134 = arith.addf %130, %133 : vector<256x128xf32>
    %135 = arith.addf %134, %3 : vector<256x128xf32>
    %cst_80 = arith.constant 0.000000e+00 : f32
    %136 = vector.broadcast %cst_80 : f32 to vector<256x128xf32>
    %137 = arith.maximumf %135, %136 : vector<256x128xf32>
    %c0_81 = arith.constant 0 : index
    %c0_82 = arith.constant 0 : index
    %c0_83 = arith.constant 0 : index
    %138 = vector.load %arg4[%c0_81, %c0_82, %c0_83] : memref<1x256x128xf32, #tpu.memory_space<vmem>>, vector<1x256x128xf32>
    %139 = vector.shape_cast %138 : vector<1x256x128xf32> to vector<256x128xf32>
    %140 = vector.shape_cast %137 : vector<256x128xf32> to vector<1x256x128xf32>
    tpu.vector_store %arg4[%c0_81, %c0_82, %c0_83], %140 {strides = array<i32>} : memref<1x256x128xf32, #tpu.memory_space<vmem>>, vector<1x256x128xf32>,
    return
  }
  func.func @transform_0(%arg0: i32) -> (i32, i32, i32) {
    %c0_i32 = arith.constant 0 : i32
    %c0_i32_0 = arith.constant 0 : i32
    %c0_i32_1 = arith.constant 0 : i32
    return %arg0, %c0_i32, %c0_i32_0 : i32, i32, i32
  }
  func.func @transform_1(%arg0: i32) -> (i32, i32, i32) {
    %c0_i32 = arith.constant 0 : i32
    %c0_i32_0 = arith.constant 0 : i32
    %c0_i32_1 = arith.constant 0 : i32
    %c0_i32_2 = arith.constant 0 : i32
    return %c0_i32, %c0_i32_0, %c0_i32_1 : i32, i32, i32
  }
  func.func @transform_2(%arg0: i32) -> (i32, i32, i32) {
    %c0_i32 = arith.constant 0 : i32
    %c0_i32_0 = arith.constant 0 : i32
    %c0_i32_1 = arith.constant 0 : i32
    %c0_i32_2 = arith.constant 0 : i32
    return %c0_i32, %c0_i32_0, %c0_i32_1 : i32, i32, i32
  }
  func.func @transform_3(%arg0: i32) -> (i32, i32, i32) {
    %c0_i32 = arith.constant 0 : i32
    %c0_i32_0 = arith.constant 0 : i32
    %c0_i32_1 = arith.constant 0 : i32
    return %arg0, %c0_i32, %c0_i32_0 : i32, i32, i32
  }
}

</mosaic_0001>

<llo_original>
// kernel: non_bottleneck_1d_forward.1
$region0: #{non_bottleneck_1d_forward.1}
  #allocation0 [shape = 'u32[]', space=smem, size = 0x4, offset = 0x4, fixed_abs, tag = 'smem constant byte address 0x4 - core index']
  #allocation1 [shape = 'u32[144,128]{1,0:T(1,128)}', space=vmem, size = 0x12000, scoped, tag = 'internal scratch']
  #allocation2 [shape = 'f32[320,128]{1,0:T(8,128)}', space=vmem, size = 0x28000, scoped, tag = 'scratch operand']
  %s0 = inlined_call_operand.vmem [shape: f32[2,256,128], index: 0, kind: input, shape index: {}]
  %s1 = inlined_call_operand.vmem [shape: bf16[12,128,128], index: 1, kind: input, shape index: {}]
  %s2 = inlined_call_operand.vmem [shape: f32[4,1,128], index: 2, kind: input, shape index: {}]
  %s3 = inlined_call_operand.hbm [shape: f32[2,256,128], index: 3, kind: output, shape index: {}]
  %s4 = sld [smem:[#allocation0]]
  $region45: #{non_bottleneck_1d_forward.1} parent=0
    _
  %s6 = ssub.s32 1, %s4
  %s7 = scalar_select 0, %s6, %s4
  $region1: #{non_bottleneck_1d_forward.1} parent=0
    #allocation3 [shape = 'u8[262144]{0}', space=vmem, size = 0x40000, scoped, tag = 'output window, operand 0']
    #allocation4 [shape = 's32[2]{0}', space=sflag, size = 0x8, scoped, tag = 'scoped memory for non_bottleneck_1d_forward.1']
    %8 = vsyncpa [#allocation4], 0
    %s9 = scalar_lea.sflag [#allocation4], 1
    %10 = vsyncpa %s9, 0
    loop: start=0, step=1, limit=4
    $region2: #{non_bottleneck_1d_forward.1} parent=1 // loop_pre_header
      _
    $region3: #{non_bottleneck_1d_forward.1} parent=1 // loop_header
      %s12 = sphi 0, %s16
      %p13 = scmp.ge.s32.totalorder %s12, 4
      %s22 = sphi 0, %s24
      %s25 = sphi 0, %s22
      %s26 = sphi 0, %s25
      %s42 = sphi 0, %s26
      %s46 = sphi 0, %s46
      %s48 = sphi 0, %s46
      %s49 = sphi 0, %s48
      %s63 = sphi 0, %s49
      %s67 = sphi 0, %s67
      %s69 = sphi 0, %s67
      %s70 = sphi 0, %s69
      %s84 = sphi 0, %s70
      %s90 = sphi 0, %s92
      %s93 = sphi 0, %s90
      %s94 = sphi 0, %s93
      %s110 = sphi 0, %s94
    $region4: #{non_bottleneck_1d_forward.1} parent=1 // loop_header_branch
      %15 = sbr.rel (%p13) target = $region8
    $region5: #{non_bottleneck_1d_forward.1} parent=1 // loop_body
      %s17 = ssub.s32 %s12, 1
      %s18 = ssub.s32 %s12, 2
      %s19 = sadd.s32 %s12, 1
      %s20 = ssub.s32 %s12, %s19
      %p21 = scmp.eq.s32.totalorder %s20, 0
      %s23 = sadd.s32 %s22, 1
      %s24 = scalar_select %p21, %s22, %s23
      %p27 = pneg %p21
      %p28 = scmp.eq.s32.totalorder %s12, 1
      %p29 = por %p27, %p28
      %p30 = scmp.ne.s32.totalorder %s22, %s25
      %p31 = scmp.eq.s32.totalorder %s12, 0
      %p32 = por %p30, %p31
      %p33 = scmp.ne.s32.totalorder %s22, %s25
      %p34 = scmp.eq.s32.totalorder %s17, 1
      %p35 = por %p33, %p34
      %p36 = scmp.ne.s32.totalorder %s25, %s26
      %p37 = scmp.eq.s32.totalorder %s17, 0
      %p38 = por %p36, %p37
      %p39 = scmp.ne.s32.totalorder %s25, %s26
      %p40 = scmp.eq.s32.totalorder %s18, 1
      %p41 = por %p39, %p40
      %p43 = scmp.ne.s32.totalorder %s26, %s42
      %p44 = scmp.eq.s32.totalorder %s18, 0
      %p45 = por %p43, %p44
      %s47 = sadd.s32 %s46, 1
      %p50 = scmp.eq.s32.totalorder %s12, 1
      %p51 = scmp.ne.s32.totalorder %s46, %s48
      %p52 = scmp.eq.s32.totalorder %s12, 0
      %p53 = por %p51, %p52
      %p54 = scmp.ne.s32.totalorder %s46, %s48
      %p55 = scmp.eq.s32.totalorder %s17, 1
      %p56 = por %p54, %p55
      %p57 = scmp.ne.s32.totalorder %s48, %s49
      %p58 = scmp.eq.s32.totalorder %s17, 0
      %p59 = por %p57, %p58
      %p60 = scmp.ne.s32.totalorder %s48, %s49
      %p61 = scmp.eq.s32.totalorder %s18, 1
      %p62 = por %p60, %p61
      %p64 = scmp.ne.s32.totalorder %s49, %s63
      %p65 = scmp.eq.s32.totalorder %s18, 0
      %p66 = por %p64, %p65
      %s68 = sadd.s32 %s67, 1
      %p71 = scmp.eq.s32.totalorder %s12, 1
      %p72 = scmp.ne.s32.totalorder %s67, %s69
      %p73 = scmp.eq.s32.totalorder %s12, 0
      %p74 = por %p72, %p73
      %p75 = scmp.ne.s32.totalorder %s67, %s69
      %p76 = scmp.eq.s32.totalorder %s17, 1
      %p77 = por %p75, %p76
      %p78 = scmp.ne.s32.totalorder %s69, %s70
      %p79 = scmp.eq.s32.totalorder %s17, 0
      %p80 = por %p78, %p79
      %p81 = scmp.ne.s32.totalorder %s69, %s70
      %p82 = scmp.eq.s32.totalorder %s18, 1
      %p83 = por %p81, %p82
      %p85 = scmp.ne.s32.totalorder %s70, %s84
      %p86 = scmp.eq.s32.totalorder %s18, 0
      %p87 = por %p85, %p86
      %s88 = ssub.s32 %s12, %s19
      %p89 = scmp.eq.s32.totalorder %s88, 0
      %s91 = sadd.s32 %s90, 1
      %s92 = scalar_select %p89, %s90, %s91
      %p95 = pneg %p89
      %p96 = scmp.eq.s32.totalorder %s12, 1
      %p97 = por %p95, %p96
      %p98 = scmp.ne.s32.totalorder %s90, %s93
      %p99 = scmp.eq.s32.totalorder %s12, 0
      %p100 = por %p98, %p99
      %p101 = scmp.ne.s32.totalorder %s90, %s93
      %p102 = scmp.eq.s32.totalorder %s17, 1
      %p103 = por %p101, %p102
      %p104 = scmp.ne.s32.totalorder %s93, %s94
      %p105 = scmp.eq.s32.totalorder %s17, 0
      %p106 = por %p104, %p105
      %p107 = scmp.ne.s32.totalorder %s93, %s94
      %p108 = scmp.eq.s32.totalorder %s18, 1
      %p109 = por %p107, %p108
      %p111 = scmp.ne.s32.totalorder %s94, %s110
      %p112 = scmp.eq.s32.totalorder %s18, 0
      %p113 = por %p111, %p112
      %p114 = scmp.le.s32.totalorder 1, %s12
      %p115 = scmp.lt.s32.totalorder %s12, 3
      %p116 = pnand %p114, %p115
      %p117 = pneg %p116
      // Predicated region
      $region9: #{non_bottleneck_1d_forward.1} parent=5 // pred_check
        _
      $region10: #{non_bottleneck_1d_forward.1} parent=5 // pred_check_branch
        %119 = sbr.rel (%p116) target = $region12
      $region11: #{non_bottleneck_1d_forward.1} parent=5 // pred_region
        %s120 = ssub.s32 %s12, 1
        // Predicated region
        $region13: #{non_bottleneck_1d_forward.1} parent=11 // pred_check
          %p121 = pneg %p59
        $region14: #{non_bottleneck_1d_forward.1} parent=11 // pred_check_branch
          %123 = sbr.rel (%p121) target = $region16
        $region15: #{non_bottleneck_1d_forward.1} parent=11 // pred_region
          _
        $region16: #{non_bottleneck_1d_forward.1} parent=11 // pred_fallthru
          _
        // Predicated region
        $region17: #{non_bottleneck_1d_forward.1} parent=11 // pred_check
          %p124 = pneg %p80
        $region18: #{non_bottleneck_1d_forward.1} parent=11 // pred_check_branch
          %126 = sbr.rel (%p124) target = $region20
        $region19: #{non_bottleneck_1d_forward.1} parent=11 // pred_region
          _
        $region20: #{non_bottleneck_1d_forward.1} parent=11 // pred_fallthru
          _
      $region12: #{non_bottleneck_1d_forward.1} parent=5 // pred_fallthru
        _
      %p127 = scmp.lt.s32.totalorder %s12, 2
      // Predicated region
      $region21: #{non_bottleneck_1d_forward.1} parent=5 // pred_check
        %p128 = pneg %p127
      $region22: #{non_bottleneck_1d_forward.1} parent=5 // pred_check_branch
        %130 = sbr.rel (%p128) target = $region24
      $region23: #{non_bottleneck_1d_forward.1} parent=5 // pred_region
        // Predicated region
        $region25: #{non_bottleneck_1d_forward.1} parent=23 // pred_check
          %p131 = pneg %p32
        $region26: #{non_bottleneck_1d_forward.1} parent=23 // pred_check_branch
          %133 = sbr.rel (%p131) target = $region28
        $region27: #{non_bottleneck_1d_forward.1} parent=23 // pred_region
          %p134 = scmp.lt.s32.totalorder %s12, 1
          %s135 = scalar_select %p134, %s12, 1
          %s136 = smul.addr %s135, 32
          %s137 = smul.addr %s136, 8
          %s138 = scalar_lea.vmem %s0, %s137
        $region28: #{non_bottleneck_1d_forward.1} parent=23 // pred_fallthru
          _
      $region24: #{non_bottleneck_1d_forward.1} parent=5 // pred_fallthru
        _
      %p139 = scmp.le.s32.totalorder 1, %s12
      %p140 = scmp.lt.s32.totalorder %s12, 3
      %p141 = pnand %p139, %p140
      %p142 = pneg %p141
      // Predicated region
      $region29: #{non_bottleneck_1d_forward.1} parent=5 // pred_check
        _
      $region30: #{non_bottleneck_1d_forward.1} parent=5 // pred_check_branch
        %144 = sbr.rel (%p141) target = $region32
      $region31: #{non_bottleneck_1d_forward.1} parent=5 // pred_region
        %s145 = ssub.s32 %s12, 1
        %p146 = scmp.lt.s32.totalorder %s17, 1
        %s147 = scalar_select %p146, %s17, 1
        %s148 = smul.addr %s147, 32
        %s149 = smul.addr %s148, 8
        %s150 = scalar_lea.vmem %s0, %s149
        %p151 = pneg %p38
        %p152 = pneg %p35
        %p153 = pneg %p59
        %p154 = pneg %p56
        %p155 = pneg %p80
        %p156 = pneg %p77
        %p157 = pneg %p106
        %p158 = pneg %p103
        %s159 = sand.u32 %s93, 1
        %s160 = scalar_lea.sflag [#allocation4], %s159
        %s161 = sand.u32 %s93, 1
        %s162 = smul.addr %s161, 256
        %s163 = scalar_lea.vmem [#allocation3], %s162
        %p164 = scmp.lt.s32.totalorder %s17, 1
        %s165 = scalar_select %p164, %s17, 1
        %s166 = smul.addr %s165, 32
        %s167 = smul.addr %s166, 8
        %s168 = scalar_lea.vmem %s0, %s167
        %170 = vst [vmem:[#allocation2] sm:$0xff] 0.0
        %171 = vst [vmem:[#allocation2 + $0x8] sm:$0xff] 0.0
        %172 = vst [vmem:[#allocation2 + $0x10] sm:$0xff] 0.0
        %173 = vst [vmem:[#allocation2 + $0x18] sm:$0xff] 0.0
        %174 = vst [vmem:[#allocation2 + $0x20] sm:$0xff] 0.0
        %175 = vst [vmem:[#allocation2 + $0x28] sm:$0xff] 0.0
        %176 = vst [vmem:[#allocation2 + $0x30] sm:$0xff] 0.0
        %177 = vst [vmem:[#allocation2 + $0x38] sm:$0xff] 0.0
        %178 = vst [vmem:[#allocation2 + $0x40] sm:$0xff] 0.0
        %179 = vst [vmem:[#allocation2 + $0x48] sm:$0xff] 0.0
        %180 = vst [vmem:[#allocation2 + $0x50] sm:$0xff] 0.0
        %181 = vst [vmem:[#allocation2 + $0x58] sm:$0xff] 0.0
        %182 = vst [vmem:[#allocation2 + $0x60] sm:$0xff] 0.0
        %183 = vst [vmem:[#allocation2 + $0x68] sm:$0xff] 0.0
        %184 = vst [vmem:[#allocation2 + $0x70] sm:$0xff] 0.0
        %185 = vst [vmem:[#allocation2 + $0x78] sm:$0xff] 0.0
        %186 = vst [vmem:[#allocation2 + $0x80] sm:$0xff] 0.0
        %187 = vst [vmem:[#allocation2 + $0x88] sm:$0xff] 0.0
        %188 = vst [vmem:[#allocation2 + $0x90] sm:$0xff] 0.0
        %189 = vst [vmem:[#allocation2 + $0x98] sm:$0xff] 0.0
        %190 = vst [vmem:[#allocation2 + $0xa0] sm:$0xff] 0.0
        %191 = vst [vmem:[#allocation2 + $0xa8] sm:$0xff] 0.0
        %192 = vst [vmem:[#allocation2 + $0xb0] sm:$0xff] 0.0
        %193 = vst [vmem:[#allocation2 + $0xb8] sm:$0xff] 0.0
        %194 = vst [vmem:[#allocation2 + $0xc0] sm:$0xff] 0.0
        %195 = vst [vmem:[#allocation2 + $0xc8] sm:$0xff] 0.0
        %196 = vst [vmem:[#allocation2 + $0xd0] sm:$0xff] 0.0
        %197 = vst [vmem:[#allocation2 + $0xd8] sm:$0xff] 0.0
        %198 = vst [vmem:[#allocation2 + $0xe0] sm:$0xff] 0.0
        %199 = vst [vmem:[#allocation2 + $0xe8] sm:$0xff] 0.0
        %200 = vst [vmem:[#allocation2 + $0xf0] sm:$0xff] 0.0
        %201 = vst [vmem:[#allocation2 + $0xf8] sm:$0xff] 0.0
        %202 = vst [vmem:[#allocation2 + $0x100] sm:$0xff] 0.0
        %203 = vst [vmem:[#allocation2 + $0x108] sm:$0xff] 0.0
        %204 = vst [vmem:[#allocation2 + $0x110] sm:$0xff] 0.0
        %205 = vst [vmem:[#allocation2 + $0x118] sm:$0xff] 0.0
        %206 = vst [vmem:[#allocation2 + $0x120] sm:$0xff] 0.0
        %207 = vst [vmem:[#allocation2 + $0x128] sm:$0xff] 0.0
        %208 = vst [vmem:[#allocation2 + $0x130] sm:$0xff] 0.0
        %209 = vst [vmem:[#allocation2 + $0x138] sm:$0xff] 0.0
        %v210 = vld [vmem:[%s168] sm:$0xff]
        %v211 = vld [vmem:[%s168 + $0x8] sm:$0xff]
        %v212 = vld [vmem:[%s168 + $0x10] sm:$0xff]
        %v213 = vld [vmem:[%s168 + $0x18] sm:$0xff]
        %v214 = vld [vmem:[%s168 + $0x20] sm:$0xff]
        %v215 = vld [vmem:[%s168 + $0x28] sm:$0xff]
        %v216 = vld [vmem:[%s168 + $0x30] sm:$0xff]
        %v217 = vld [vmem:[%s168 + $0x38] sm:$0xff]
        %v218 = vld [vmem:[%s168 + $0x40] sm:$0xff]
        %v219 = vld [vmem:[%s168 + $0x48] sm:$0xff]
        %v220 = vld [vmem:[%s168 + $0x50] sm:$0xff]
        %v221 = vld [vmem:[%s168 + $0x58] sm:$0xff]
        %v222 = vld [vmem:[%s168 + $0x60] sm:$0xff]
        %v223 = vld [vmem:[%s168 + $0x68] sm:$0xff]
        %v224 = vld [vmem:[%s168 + $0x70] sm:$0xff]
        %v225 = vld [vmem:[%s168 + $0x78] sm:$0xff]
        %v226 = vld [vmem:[%s168 + $0x80] sm:$0xff]
        %v227 = vld [vmem:[%s168 + $0x88] sm:$0xff]
        %v228 = vld [vmem:[%s168 + $0x90] sm:$0xff]
        %v229 = vld [vmem:[%s168 + $0x98] sm:$0xff]
        %v230 = vld [vmem:[%s168 + $0xa0] sm:$0xff]
        %v231 = vld [vmem:[%s168 + $0xa8] sm:$0xff]
        %v232 = vld [vmem:[%s168 + $0xb0] sm:$0xff]
        %v233 = vld [vmem:[%s168 + $0xb8] sm:$0xff]
        %v234 = vld [vmem:[%s168 + $0xc0] sm:$0xff]
        %v235 = vld [vmem:[%s168 + $0xc8] sm:$0xff]
        %v236 = vld [vmem:[%s168 + $0xd0] sm:$0xff]
        %v237 = vld [vmem:[%s168 + $0xd8] sm:$0xff]
        %v238 = vld [vmem:[%s168 + $0xe0] sm:$0xff]
        %v239 = vld [vmem:[%s168 + $0xe8] sm:$0xff]
        %v240 = vld [vmem:[%s168 + $0xf0] sm:$0xff]
        %v241 = vld [vmem:[%s168 + $0xf8] sm:$0xff]
        %v242 = vlaneseq
        %v243 = vshrl.u32 %v242, 7
        %v244 = vadd.s32 %v243, 8
        %v245 = vadd.s32 %v243, 16
        %v246 = vadd.s32 %v243, 24
        %v247 = vadd.s32 %v243, 32
        %v248 = vadd.s32 %v243, 40
        %v249 = vadd.s32 %v243, 48
        %v250 = vadd.s32 %v243, 56
        %v251 = vadd.s32 %v243, 64
        %v252 = vadd.s32 %v243, 72
        %v253 = vadd.s32 %v243, 80
        %v254 = vadd.s32 %v243, 88
        %v255 = vadd.s32 %v243, 96
        %v256 = vadd.s32 %v243, 104
        %v257 = vadd.s32 %v243, 112
        %v258 = vadd.s32 %v243, 120
        %v259 = vadd.s32 %v243, 128
        %v260 = vadd.s32 %v243, 136
        %v261 = vadd.s32 %v243, 144
        %v262 = vadd.s32 %v243, 152
        %v263 = vadd.s32 %v243, 160
        %v264 = vadd.s32 %v243, 168
        %v265 = vadd.s32 %v243, 176
        %v266 = vadd.s32 %v243, 184
        %v267 = vadd.s32 %v243, 192
        %v268 = vadd.s32 %v243, 200
        %v269 = vadd.s32 %v243, 208
        %v270 = vadd.s32 %v243, 216
        %v271 = vadd.s32 %v243, 224
        %v272 = vadd.s32 %v243, 232
        %v273 = vadd.s32 %v243, 240
        %v274 = vadd.s32 %v243, 248
        %vm275 = vcmp.lt.s32.totalorder %v243, 0
        %v276 = vsub.s32 0, %v243
        %v277 = vsel %vm275, %v276, %v243
        %v278 = vshrl.u32 %v277, 4
        %v279 = vand.u32 %v277, 15
        %v280 = vsub.s32 0, %v279
        %v281 = vsel %vm275, %v280, %v279
        %vm282 = vcmp.lt.s32.totalorder %v244, 0
        %v283 = vsub.s32 0, %v244
        %v284 = vsel %vm282, %v283, %v244
        %v285 = vshrl.u32 %v284, 4
        %v286 = vand.u32 %v284, 15
        %v287 = vsub.s32 0, %v286
        %v288 = vsel %vm282, %v287, %v286
        %vm289 = vcmp.lt.s32.totalorder %v245, 0
        %v290 = vsub.s32 0, %v245
        %v291 = vsel %vm289, %v290, %v245
        %v292 = vshrl.u32 %v291, 4
        %v293 = vand.u32 %v291, 15
        %v294 = vsub.s32 0, %v293
        %v295 = vsel %vm289, %v294, %v293
        %vm296 = vcmp.lt.s32.totalorder %v246, 0
        %v297 = vsub.s32 0, %v246
        %v298 = vsel %vm296, %v297, %v246
        %v299 = vshrl.u32 %v298, 4
        %v300 = vand.u32 %v298, 15
        %v301 = vsub.s32 0, %v300
        %v302 = vsel %vm296, %v301, %v300
        %vm303 = vcmp.lt.s32.totalorder %v247, 0
        %v304 = vsub.s32 0, %v247
        %v305 = vsel %vm303, %v304, %v247
        %v306 = vshrl.u32 %v305, 4
        %v307 = vand.u32 %v305, 15
        %v308 = vsub.s32 0, %v307
        %v309 = vsel %vm303, %v308, %v307
        %vm310 = vcmp.lt.s32.totalorder %v248, 0
        %v311 = vsub.s32 0, %v248
        %v312 = vsel %vm310, %v311, %v248
        %v313 = vshrl.u32 %v312, 4
        %v314 = vand.u32 %v312, 15
        %v315 = vsub.s32 0, %v314
        %v316 = vsel %vm310, %v315, %v314
        %vm317 = vcmp.lt.s32.totalorder %v249, 0
        %v318 = vsub.s32 0, %v249
        %v319 = vsel %vm317, %v318, %v249
        %v320 = vshrl.u32 %v319, 4
        %v321 = vand.u32 %v319, 15
        %v322 = vsub.s32 0, %v321
        %v323 = vsel %vm317, %v322, %v321
        %vm324 = vcmp.lt.s32.totalorder %v250, 0
        %v325 = vsub.s32 0, %v250
        %v326 = vsel %vm324, %v325, %v250
        %v327 = vshrl.u32 %v326, 4
        %v328 = vand.u32 %v326, 15
        %v329 = vsub.s32 0, %v328
        %v330 = vsel %vm324, %v329, %v328
        %vm331 = vcmp.lt.s32.totalorder %v251, 0
        %v332 = vsub.s32 0, %v251
        %v333 = vsel %vm331, %v332, %v251
        %v334 = vshrl.u32 %v333, 4
        %v335 = vand.u32 %v333, 15
        %v336 = vsub.s32 0, %v335
        %v337 = vsel %vm331, %v336, %v335
        %vm338 = vcmp.lt.s32.totalorder %v252, 0
        %v339 = vsub.s32 0, %v252
        %v340 = vsel %vm338, %v339, %v252
        %v341 = vshrl.u32 %v340, 4
        %v342 = vand.u32 %v340, 15
        %v343 = vsub.s32 0, %v342
        %v344 = vsel %vm338, %v343, %v342
        %vm345 = vcmp.lt.s32.totalorder %v253, 0
        %v346 = vsub.s32 0, %v253
        %v347 = vsel %vm345, %v346, %v253
        %v348 = vshrl.u32 %v347, 4
        %v349 = vand.u32 %v347, 15
        %v350 = vsub.s32 0, %v349
        %v351 = vsel %vm345, %v350, %v349
        %vm352 = vcmp.lt.s32.totalorder %v254, 0
        %v353 = vsub.s32 0, %v254
        %v354 = vsel %vm352, %v353, %v254
        %v355 = vshrl.u32 %v354, 4
        %v356 = vand.u32 %v354, 15
        %v357 = vsub.s32 0, %v356
        %v358 = vsel %vm352, %v357, %v356
        %vm359 = vcmp.lt.s32.totalorder %v255, 0
        %v360 = vsub.s32 0, %v255
        %v361 = vsel %vm359, %v360, %v255
        %v362 = vshrl.u32 %v361, 4
        %v363 = vand.u32 %v361, 15
        %v364 = vsub.s32 0, %v363
        %v365 = vsel %vm359, %v364, %v363
        %vm366 = vcmp.lt.s32.totalorder %v256, 0
        %v367 = vsub.s32 0, %v256
        %v368 = vsel %vm366, %v367, %v256
        %v369 = vshrl.u32 %v368, 4
        %v370 = vand.u32 %v368, 15
        %v371 = vsub.s32 0, %v370
        %v372 = vsel %vm366, %v371, %v370
        %vm373 = vcmp.lt.s32.totalorder %v257, 0
        %v374 = vsub.s32 0, %v257
        %v375 = vsel %vm373, %v374, %v257
        %v376 = vshrl.u32 %v375, 4
        %v377 = vand.u32 %v375, 15
        %v378 = vsub.s32 0, %v377
        %v379 = vsel %vm373, %v378, %v377
        %vm380 = vcmp.lt.s32.totalorder %v258, 0
        %v381 = vsub.s32 0, %v258
        %v382 = vsel %vm380, %v381, %v258
        %v383 = vshrl.u32 %v382, 4
        %v384 = vand.u32 %v382, 15
        %v385 = vsub.s32 0, %v384
        %v386 = vsel %vm380, %v385, %v384
        %vm387 = vcmp.lt.s32.totalorder %v259, 0
        %v388 = vsub.s32 0, %v259
        %v389 = vsel %vm387, %v388, %v259
        %v390 = vshrl.u32 %v389, 4
        %v391 = vand.u32 %v389, 15
        %v392 = vsub.s32 0, %v391
        %v393 = vsel %vm387, %v392, %v391
        %vm394 = vcmp.lt.s32.totalorder %v260, 0
        %v395 = vsub.s32 0, %v260
        %v396 = vsel %vm394, %v395, %v260
        %v397 = vshrl.u32 %v396, 4
        %v398 = vand.u32 %v396, 15
        %v399 = vsub.s32 0, %v398
        %v400 = vsel %vm394, %v399, %v398
        %vm401 = vcmp.lt.s32.totalorder %v261, 0
        %v402 = vsub.s32 0, %v261
        %v403 = vsel %vm401, %v402, %v261
        %v404 = vshrl.u32 %v403, 4
        %v405 = vand.u32 %v403, 15
        %v406 = vsub.s32 0, %v405
        %v407 = vsel %vm401, %v406, %v405
        %vm408 = vcmp.lt.s32.totalorder %v262, 0
        %v409 = vsub.s32 0, %v262
        %v410 = vsel %vm408, %v409, %v262
        %v411 = vshrl.u32 %v410, 4
        %v412 = vand.u32 %v410, 15
        %v413 = vsub.s32 0, %v412
        %v414 = vsel %vm408, %v413, %v412
        %vm415 = vcmp.lt.s32.totalorder %v263, 0
        %v416 = vsub.s32 0, %v263
        %v417 = vsel %vm415, %v416, %v263
        %v418 = vshrl.u32 %v417, 4
        %v419 = vand.u32 %v417, 15
        %v420 = vsub.s32 0, %v419
        %v421 = vsel %vm415, %v420, %v419
        %vm422 = vcmp.lt.s32.totalorder %v264, 0
        %v423 = vsub.s32 0, %v264
        %v424 = vsel %vm422, %v423, %v264
        %v425 = vshrl.u32 %v424, 4
        %v426 = vand.u32 %v424, 15
        %v427 = vsub.s32 0, %v426
        %v428 = vsel %vm422, %v427, %v426
        %vm429 = vcmp.lt.s32.totalorder %v265, 0
        %v430 = vsub.s32 0, %v265
        %v431 = vsel %vm429, %v430, %v265
        %v432 = vshrl.u32 %v431, 4
        %v433 = vand.u32 %v431, 15
        %v434 = vsub.s32 0, %v433
        %v435 = vsel %vm429, %v434, %v433
        %vm436 = vcmp.lt.s32.totalorder %v266, 0
        %v437 = vsub.s32 0, %v266
        %v438 = vsel %vm436, %v437, %v266
        %v439 = vshrl.u32 %v438, 4
        %v440 = vand.u32 %v438, 15
        %v441 = vsub.s32 0, %v440
        %v442 = vsel %vm436, %v441, %v440
        %vm443 = vcmp.lt.s32.totalorder %v267, 0
        %v444 = vsub.s32 0, %v267
        %v445 = vsel %vm443, %v444, %v267
        %v446 = vshrl.u32 %v445, 4
        %v447 = vand.u32 %v445, 15
        %v448 = vsub.s32 0, %v447
        %v449 = vsel %vm443, %v448, %v447
        %vm450 = vcmp.lt.s32.totalorder %v268, 0
        %v451 = vsub.s32 0, %v268
        %v452 = vsel %vm450, %v451, %v268
        %v453 = vshrl.u32 %v452, 4
        %v454 = vand.u32 %v452, 15
        %v455 = vsub.s32 0, %v454
        %v456 = vsel %vm450, %v455, %v454
        %vm457 = vcmp.lt.s32.totalorder %v269, 0
        %v458 = vsub.s32 0, %v269
        %v459 = vsel %vm457, %v458, %v269
        %v460 = vshrl.u32 %v459, 4
        %v461 = vand.u32 %v459, 15
        %v462 = vsub.s32 0, %v461
        %v463 = vsel %vm457, %v462, %v461
        %vm464 = vcmp.lt.s32.totalorder %v270, 0
        %v465 = vsub.s32 0, %v270
        %v466 = vsel %vm464, %v465, %v270
        %v467 = vshrl.u32 %v466, 4
        %v468 = vand.u32 %v466, 15
        %v469 = vsub.s32 0, %v468
        %v470 = vsel %vm464, %v469, %v468
        %vm471 = vcmp.lt.s32.totalorder %v271, 0
        %v472 = vsub.s32 0, %v271
        %v473 = vsel %vm471, %v472, %v271
        %v474 = vshrl.u32 %v473, 4
        %v475 = vand.u32 %v473, 15
        %v476 = vsub.s32 0, %v475
        %v477 = vsel %vm471, %v476, %v475
        %vm478 = vcmp.lt.s32.totalorder %v272, 0
        %v479 = vsub.s32 0, %v272
        %v480 = vsel %vm478, %v479, %v272
        %v481 = vshrl.u32 %v480, 4
        %v482 = vand.u32 %v480, 15
        %v483 = vsub.s32 0, %v482
        %v484 = vsel %vm478, %v483, %v482
        %vm485 = vcmp.lt.s32.totalorder %v273, 0
        %v486 = vsub.s32 0, %v273
        %v487 = vsel %vm485, %v486, %v273
        %v488 = vshrl.u32 %v487, 4
        %v489 = vand.u32 %v487, 15
        %v490 = vsub.s32 0, %v489
        %v491 = vsel %vm485, %v490, %v489
        %vm492 = vcmp.lt.s32.totalorder %v274, 0
        %v493 = vsub.s32 0, %v274
        %v494 = vsel %vm492, %v493, %v274
        %v495 = vshrl.u32 %v494, 4
        %v496 = vand.u32 %v494, 15
        %v497 = vsub.s32 0, %v496
        %v498 = vsel %vm492, %v497, %v496
        %vm499 = vcmp.ne.s32.totalorder %v281, 0
        %vm500 = vcmp.ne.s32.totalorder %v288, 0
        %vm501 = vcmp.ne.s32.totalorder %v295, 0
        %vm502 = vcmp.ne.s32.totalorder %v302, 0
        %vm503 = vcmp.ne.s32.totalorder %v309, 0
        %vm504 = vcmp.ne.s32.totalorder %v316, 0
        %vm505 = vcmp.ne.s32.totalorder %v323, 0
        %vm506 = vcmp.ne.s32.totalorder %v330, 0
        %vm507 = vcmp.ne.s32.totalorder %v337, 0
        %vm508 = vcmp.ne.s32.totalorder %v344, 0
        %vm509 = vcmp.ne.s32.totalorder %v351, 0
        %vm510 = vcmp.ne.s32.totalorder %v358, 0
        %vm511 = vcmp.ne.s32.totalorder %v365, 0
        %vm512 = vcmp.ne.s32.totalorder %v372, 0
        %vm513 = vcmp.ne.s32.totalorder %v379, 0
        %vm514 = vcmp.ne.s32.totalorder %v386, 0
        %vm515 = vcmp.ne.s32.totalorder %v393, 0
        %vm516 = vcmp.ne.s32.totalorder %v400, 0
        %vm517 = vcmp.ne.s32.totalorder %v407, 0
        %vm518 = vcmp.ne.s32.totalorder %v414, 0
        %vm519 = vcmp.ne.s32.totalorder %v421, 0
        %vm520 = vcmp.ne.s32.totalorder %v428, 0
        %vm521 = vcmp.ne.s32.totalorder %v435, 0
        %vm522 = vcmp.ne.s32.totalorder %v442, 0
        %vm523 = vcmp.ne.s32.totalorder %v449, 0
        %vm524 = vcmp.ne.s32.totalorder %v456, 0
        %vm525 = vcmp.ne.s32.totalorder %v463, 0
        %vm526 = vcmp.ne.s32.totalorder %v470, 0
        %vm527 = vcmp.ne.s32.totalorder %v477, 0
        %vm528 = vcmp.ne.s32.totalorder %v484, 0
        %vm529 = vcmp.ne.s32.totalorder %v491, 0
        %vm530 = vcmp.ne.s32.totalorder %v498, 0
        %vm531 = vcmp.lt.s32.totalorder %v281, 0
        %vm532 = vcmp.lt.s32.totalorder %v288, 0
        %vm533 = vcmp.lt.s32.totalorder %v295, 0
        %vm534 = vcmp.lt.s32.totalorder %v302, 0
        %vm535 = vcmp.lt.s32.totalorder %v309, 0
        %vm536 = vcmp.lt.s32.totalorder %v316, 0
        %vm537 = vcmp.lt.s32.totalorder %v323, 0
        %vm538 = vcmp.lt.s32.totalorder %v330, 0
        %vm539 = vcmp.lt.s32.totalorder %v337, 0
        %vm540 = vcmp.lt.s32.totalorder %v344, 0
        %vm541 = vcmp.lt.s32.totalorder %v351, 0
        %vm542 = vcmp.lt.s32.totalorder %v358, 0
        %vm543 = vcmp.lt.s32.totalorder %v365, 0
        %vm544 = vcmp.lt.s32.totalorder %v372, 0
        %vm545 = vcmp.lt.s32.totalorder %v379, 0
        %vm546 = vcmp.lt.s32.totalorder %v386, 0
        %vm547 = vcmp.lt.s32.totalorder %v393, 0
        %vm548 = vcmp.lt.s32.totalorder %v400, 0
        %vm549 = vcmp.lt.s32.totalorder %v407, 0
        %vm550 = vcmp.lt.s32.totalorder %v414, 0
        %vm551 = vcmp.lt.s32.totalorder %v421, 0
        %vm552 = vcmp.lt.s32.totalorder %v428, 0
        %vm553 = vcmp.lt.s32.totalorder %v435, 0
        %vm554 = vcmp.lt.s32.totalorder %v442, 0
        %vm555 = vcmp.lt.s32.totalorder %v449, 0
        %vm556 = vcmp.lt.s32.totalorder %v456, 0
        %vm557 = vcmp.lt.s32.totalorder %v463, 0
        %vm558 = vcmp.lt.s32.totalorder %v470, 0
        %vm559 = vcmp.lt.s32.totalorder %v477, 0
        %vm560 = vcmp.lt.s32.totalorder %v484, 0
        %vm561 = vcmp.lt.s32.totalorder %v491, 0
        %vm562 = vcmp.lt.s32.totalorder %v498, 0
        %vm563 = vmand %vm531, %vm499
        %vm564 = vmand %vm532, %vm500
        %vm565 = vmand %vm533, %vm501
        %vm566 = vmand %vm534, %vm502
        %vm567 = vmand %vm535, %vm503
        %vm568 = vmand %vm536, %vm504
        %vm569 = vmand %vm537, %vm505
        %vm570 = vmand %vm538, %vm506
        %vm571 = vmand %vm539, %vm507
        %vm572 = vmand %vm540, %vm508
        %vm573 = vmand %vm541, %vm509
        %vm574 = vmand %vm542, %vm510
        %vm575 = vmand %vm543, %vm511
        %vm576 = vmand %vm544, %vm512
        %vm577 = vmand %vm545, %vm513
        %vm578 = vmand %vm546, %vm514
        %vm579 = vmand %vm547, %vm515
        %vm580 = vmand %vm548, %vm516
        %vm581 = vmand %vm549, %vm517
        %vm582 = vmand %vm550, %vm518
        %vm583 = vmand %vm551, %vm519
        %vm584 = vmand %vm552, %vm520
        %vm585 = vmand %vm553, %vm521
        %vm586 = vmand %vm554, %vm522
        %vm587 = vmand %vm555, %vm523
        %vm588 = vmand %vm556, %vm524
        %vm589 = vmand %vm557, %vm525
        %vm590 = vmand %vm558, %vm526
        %vm591 = vmand %vm559, %vm527
        %vm592 = vmand %vm560, %vm528
        %vm593 = vmand %vm561, %vm529
        %vm594 = vmand %vm562, %vm530
        %v595 = vadd.s32 %v281, 16
        %v596 = vadd.s32 %v288, 16
        %v597 = vadd.s32 %v295, 16
        %v598 = vadd.s32 %v302, 16
        %v599 = vadd.s32 %v309, 16
        %v600 = vadd.s32 %v316, 16
        %v601 = vadd.s32 %v323, 16
        %v602 = vadd.s32 %v330, 16
        %v603 = vadd.s32 %v337, 16
        %v604 = vadd.s32 %v344, 16
        %v605 = vadd.s32 %v351, 16
        %v606 = vadd.s32 %v358, 16
        %v607 = vadd.s32 %v365, 16
        %v608 = vadd.s32 %v372, 16
        %v609 = vadd.s32 %v379, 16
        %v610 = vadd.s32 %v386, 16
        %v611 = vadd.s32 %v393, 16
        %v612 = vadd.s32 %v400, 16
        %v613 = vadd.s32 %v407, 16
        %v614 = vadd.s32 %v414, 16
        %v615 = vadd.s32 %v421, 16
        %v616 = vadd.s32 %v428, 16
        %v617 = vadd.s32 %v435, 16
        %v618 = vadd.s32 %v442, 16
        %v619 = vadd.s32 %v449, 16
        %v620 = vadd.s32 %v456, 16
        %v621 = vadd.s32 %v463, 16
        %v622 = vadd.s32 %v470, 16
        %v623 = vadd.s32 %v477, 16
        %v624 = vadd.s32 %v484, 16
        %v625 = vadd.s32 %v491, 16
        %v626 = vadd.s32 %v498, 16
        %v627 = vsel %vm563, %v595, %v281
        %v628 = vsel %vm564, %v596, %v288
        %v629 = vsel %vm565, %v597, %v295
        %v630 = vsel %vm566, %v598, %v302
        %v631 = vsel %vm567, %v599, %v309
        %v632 = vsel %vm568, %v600, %v316
        %v633 = vsel %vm569, %v601, %v323
        %v634 = vsel %vm570, %v602, %v330
        %v635 = vsel %vm571, %v603, %v337
        %v636 = vsel %vm572, %v604, %v344
        %v637 = vsel %vm573, %v605, %v351
        %v638 = vsel %vm574, %v606, %v358
        %v639 = vsel %vm575, %v607, %v365
        %v640 = vsel %vm576, %v608, %v372
        %v641 = vsel %vm577, %v609, %v379
        %v642 = vsel %vm578, %v610, %v386
        %v643 = vsel %vm579, %v611, %v393
        %v644 = vsel %vm580, %v612, %v400
        %v645 = vsel %vm581, %v613, %v407
        %v646 = vsel %vm582, %v614, %v414
        %v647 = vsel %vm583, %v615, %v421
        %v648 = vsel %vm584, %v616, %v428
        %v649 = vsel %vm585, %v617, %v435
        %v650 = vsel %vm586, %v618, %v442
        %v651 = vsel %vm587, %v619, %v449
        %v652 = vsel %vm588, %v620, %v456
        %v653 = vsel %vm589, %v621, %v463
        %v654 = vsel %vm590, %v622, %v470
        %v655 = vsel %vm591, %v623, %v477
        %v656 = vsel %vm592, %v624, %v484
        %v657 = vsel %vm593, %v625, %v491
        %v658 = vsel %vm594, %v626, %v498
        %659 = vst [vmem:[#allocation2 + $0x20] sm:$0xff] %v210
        %660 = vst [vmem:[#allocation2 + $0x28] sm:$0xff] %v211
        %661 = vst [vmem:[#allocation2 + $0x30] sm:$0xff] %v212
        %662 = vst [vmem:[#allocation2 + $0x38] sm:$0xff] %v213
        %663 = vst [vmem:[#allocation2 + $0x40] sm:$0xff] %v214
        %664 = vst [vmem:[#allocation2 + $0x48] sm:$0xff] %v215
        %665 = vst [vmem:[#allocation2 + $0x50] sm:$0xff] %v216
        %666 = vst [vmem:[#allocation2 + $0x58] sm:$0xff] %v217
        %667 = vst [vmem:[#allocation2 + $0x60] sm:$0xff] %v218
        %668 = vst [vmem:[#allocation2 + $0x68] sm:$0xff] %v219
        %669 = vst [vmem:[#allocation2 + $0x70] sm:$0xff] %v220
        %670 = vst [vmem:[#allocation2 + $0x78] sm:$0xff] %v221
        %671 = vst [vmem:[#allocation2 + $0x80] sm:$0xff] %v222
        %672 = vst [vmem:[#allocation2 + $0x88] sm:$0xff] %v223
        %673 = vst [vmem:[#allocation2 + $0x90] sm:$0xff] %v224
        %674 = vst [vmem:[#allocation2 + $0x98] sm:$0xff] %v225
        %675 = vst [vmem:[#allocation2 + $0xa0] sm:$0xff] %v226
        %676 = vst [vmem:[#allocation2 + $0xa8] sm:$0xff] %v227
        %677 = vst [vmem:[#allocation2 + $0xb0] sm:$0xff] %v228
        %678 = vst [vmem:[#allocation2 + $0xb8] sm:$0xff] %v229
        %679 = vst [vmem:[#allocation2 + $0xc0] sm:$0xff] %v230
        %680 = vst [vmem:[#allocation2 + $0xc8] sm:$0xff] %v231
        %681 = vst [vmem:[#allocation2 + $0xd0] sm:$0xff] %v232
        %682 = vst [vmem:[#allocation2 + $0xd8] sm:$0xff] %v233
        %683 = vst [vmem:[#allocation2 + $0xe0] sm:$0xff] %v234
        %684 = vst [vmem:[#allocation2 + $0xe8] sm:$0xff] %v235
        %685 = vst [vmem:[#allocation2 + $0xf0] sm:$0xff] %v236
        %686 = vst [vmem:[#allocation2 + $0xf8] sm:$0xff] %v237
        %687 = vst [vmem:[#allocation2 + $0x100] sm:$0xff] %v238
        %688 = vst [vmem:[#allocation2 + $0x108] sm:$0xff] %v239
        %689 = vst [vmem:[#allocation2 + $0x110] sm:$0xff] %v240
        %690 = vst [vmem:[#allocation2 + $0x118] sm:$0xff] %v241
        %v691 = vpack.c.bf16 %v211, %v210
        %v692 = vpack.c.bf16 %v213, %v212
        %v693 = vpack.c.bf16 %v215, %v214
        %v694 = vpack.c.bf16 %v217, %v216
        %v695 = vpack.c.bf16 %v219, %v218
        %v696 = vpack.c.bf16 %v221, %v220
        %v697 = vpack.c.bf16 %v223, %v222
        %v698 = vpack.c.bf16 %v225, %v224
        %v699 = vpack.c.bf16 %v227, %v226
        %v700 = vpack.c.bf16 %v229, %v228
        %v701 = vpack.c.bf16 %v231, %v230
        %v702 = vpack.c.bf16 %v233, %v232
        %v703 = vpack.c.bf16 %v235, %v234
        %v704 = vpack.c.bf16 %v237, %v236
        %v705 = vpack.c.bf16 %v239, %v238
        %v706 = vpack.c.bf16 %v241, %v240
        %v707 = vld [vmem:[#allocation2 + $0x10] sm:$0xff]
        %v708 = vld [vmem:[#allocation2 + $0x18] sm:$0xff]
        %v709 = vld [vmem:[#allocation2 + $0x20] sm:$0xff]
        %v710 = vld [vmem:[#allocation2 + $0x28] sm:$0xff]
        %v711 = vld [vmem:[#allocation2 + $0x30] sm:$0xff]
        %v712 = vld [vmem:[#allocation2 + $0x38] sm:$0xff]
        %v713 = vld [vmem:[#allocation2 + $0x40] sm:$0xff]
        %v714 = vld [vmem:[#allocation2 + $0x48] sm:$0xff]
        %v715 = vld [vmem:[#allocation2 + $0x50] sm:$0xff]
        %v716 = vld [vmem:[#allocation2 + $0x58] sm:$0xff]
        %v717 = vld [vmem:[#allocation2 + $0x60] sm:$0xff]
        %v718 = vld [vmem:[#allocation2 + $0x68] sm:$0xff]
        %v719 = vld [vmem:[#allocation2 + $0x70] sm:$0xff]
        %v720 = vld [vmem:[#allocation2 + $0x78] sm:$0xff]
        %v721 = vld [vmem:[#allocation2 + $0x80] sm:$0xff]
        %v722 = vld [vmem:[#allocation2 + $0x88] sm:$0xff]
        %v723 = vld [vmem:[#allocation2 + $0x90] sm:$0xff]
        %v724 = vld [vmem:[#allocation2 + $0x98] sm:$0xff]
        %v725 = vld [vmem:[#allocation2 + $0xa0] sm:$0xff]
        %v726 = vld [vmem:[#allocation2 + $0xa8] sm:$0xff]
        %v727 = vld [vmem:[#allocation2 + $0xb0] sm:$0xff]
        %v728 = vld [vmem:[#allocation2 + $0xb8] sm:$0xff]
        %v729 = vld [vmem:[#allocation2 + $0xc0] sm:$0xff]
        %v730 = vld [vmem:[#allocation2 + $0xc8] sm:$0xff]
        %v731 = vld [vmem:[#allocation2 + $0xd0] sm:$0xff]
        %v732 = vld [vmem:[#allocation2 + $0xd8] sm:$0xff]
        %v733 = vld [vmem:[#allocation2 + $0xe0] sm:$0xff]
        %v734 = vld [vmem:[#allocation2 + $0xe8] sm:$0xff]
        %v735 = vld [vmem:[#allocation2 + $0xf0] sm:$0xff]
        %v736 = vld [vmem:[#allocation2 + $0xf8] sm:$0xff]
        %v737 = vld [vmem:[#allocation2 + $0x100] sm:$0xff]
        %v738 = vld [vmem:[#allocation2 + $0x108] sm:$0xff]
        %v739 = vpack.c.bf16 %v708, %v707
        %v740 = vpack.c.bf16 %v710, %v709
        %v741 = vpack.c.bf16 %v712, %v711
        %v742 = vpack.c.bf16 %v714, %v713
        %v743 = vpack.c.bf16 %v716, %v715
        %v744 = vpack.c.bf16 %v718, %v717
        %v745 = vpack.c.bf16 %v720, %v719
        %v746 = vpack.c.bf16 %v722, %v721
        %v747 = vpack.c.bf16 %v724, %v723
        %v748 = vpack.c.bf16 %v726, %v725
        %v749 = vpack.c.bf16 %v728, %v727
        %v750 = vpack.c.bf16 %v730, %v729
        %v751 = vpack.c.bf16 %v732, %v731
        %v752 = vpack.c.bf16 %v734, %v733
        %v753 = vpack.c.bf16 %v736, %v735
        %v754 = vpack.c.bf16 %v738, %v737
        %v755 = vld [vmem:[#allocation2 + $0x110] sm:$0xff]
        %v756 = vld [vmem:[#allocation2 + $0x118] sm:$0xff]
        %v757 = vld [vmem:[#allocation2 + $0x120] sm:$0xff]
        %v758 = vld [vmem:[#allocation2 + $0x128] sm:$0xff]
        %v759 = vpack.c.bf16 %v756, %v755
        %v760 = vpack.c.bf16 %v758, %v757
        %s761 = scalar_lea.vmem %s1, 64
        %v762 = vld [vmem:[%s761] sm:$0xf]
        %v763 = vld [vmem:[%s761 + $0x4] sm:$0xf]
        %v764 = vld [vmem:[%s761 + $0x8] sm:$0xf]
        %v765 = vld [vmem:[%s761 + $0xc] sm:$0xf]
        %v766 = vld [vmem:[%s761 + $0x10] sm:$0xf]
        %v767 = vld [vmem:[%s761 + $0x14] sm:$0xf]
        %v768 = vld [vmem:[%s761 + $0x18] sm:$0xf]
        %v769 = vld [vmem:[%s761 + $0x1c] sm:$0xf]
        %v770 = vld [vmem:[%s761 + $0x20] sm:$0xf]
        %v771 = vld [vmem:[%s761 + $0x24] sm:$0xf]
        %v772 = vld [vmem:[%s761 + $0x28] sm:$0xf]
        %v773 = vld [vmem:[%s761 + $0x2c] sm:$0xf]
        %v774 = vld [vmem:[%s761 + $0x30] sm:$0xf]
        %v775 = vld [vmem:[%s761 + $0x34] sm:$0xf]
        %v776 = vld [vmem:[%s761 + $0x38] sm:$0xf]
        %v777 = vld [vmem:[%s761 + $0x3c] sm:$0xf]
        %v778 = vld [vmem:[%s1] sm:$0xf]
        %v779 = vld [vmem:[%s1 + $0x4] sm:$0xf]
        %v780 = vld [vmem:[%s1 + $0x8] sm:$0xf]
        %v781 = vld [vmem:[%s1 + $0xc] sm:$0xf]
        %v782 = vld [vmem:[%s1 + $0x10] sm:$0xf]
        %v783 = vld [vmem:[%s1 + $0x14] sm:$0xf]
        %v784 = vld [vmem:[%s1 + $0x18] sm:$0xf]
        %v785 = vld [vmem:[%s1 + $0x1c] sm:$0xf]
        %v786 = vld [vmem:[%s1 + $0x20] sm:$0xf]
        %v787 = vld [vmem:[%s1 + $0x24] sm:$0xf]
        %v788 = vld [vmem:[%s1 + $0x28] sm:$0xf]
        %v789 = vld [vmem:[%s1 + $0x2c] sm:$0xf]
        %v790 = vld [vmem:[%s1 + $0x30] sm:$0xf]
        %v791 = vld [vmem:[%s1 + $0x34] sm:$0xf]
        %v792 = vld [vmem:[%s1 + $0x38] sm:$0xf]
        %v793 = vld [vmem:[%s1 + $0x3c] sm:$0xf]
        %v810 = vunpack.c.l.b16 %v778
        %v811 = vunpack.c.l.b16 %v779
        %v812 = vunpack.c.l.b16 %v780
        %v813 = vunpack.c.l.b16 %v781
        %v814 = vunpack.c.l.b16 %v782
        %v815 = vunpack.c.l.b16 %v783
        %v816 = vunpack.c.l.b16 %v784
        %v817 = vunpack.c.l.b16 %v785
        %v818 = vunpack.c.l.b16 %v786
        %v819 = vunpack.c.l.b16 %v787
        %v820 = vunpack.c.l.b16 %v788
        %v821 = vunpack.c.l.b16 %v789
        %v822 = vunpack.c.l.b16 %v790
        %v823 = vunpack.c.l.b16 %v791
        %v824 = vunpack.c.l.b16 %v792
        %v825 = vunpack.c.l.b16 %v793
        %v826 = vpack.c.b16 %v811, %v810
        %v827 = vpack.c.b16 %v813, %v812
        %v828 = vpack.c.b16 %v815, %v814
        %v829 = vpack.c.b16 %v817, %v816
        %v830 = vpack.c.b16 %v819, %v818
        %v831 = vpack.c.b16 %v821, %v820
        %v832 = vpack.c.b16 %v823, %v822
        %v833 = vpack.c.b16 %v825, %v824
        %842 = vmatprep.subr.bf16.mxu0 0
        %843 = vmatpush1.bf16.msra.mxu0 %v833
        %844 = vmatprep.subr.bf16.mxu0 0
        %845 = vmatpush1.bf16.msra.mxu0 %v832
        %846 = vmatprep.subr.bf16.mxu0 0
        %847 = vmatpush1.bf16.msra.mxu0 %v831
        %848 = vmatprep.subr.bf16.mxu0 0
        %849 = vmatpush1.bf16.msra.mxu0 %v830
        %850 = vmatprep.subr.bf16.mxu0 0
        %851 = vmatpush1.bf16.msra.mxu0 %v829
        %852 = vmatprep.subr.bf16.mxu0 0
        %853 = vmatpush1.bf16.msra.mxu0 %v828
        %854 = vmatprep.subr.bf16.mxu0 0
        %855 = vmatpush1.bf16.msra.mxu0 %v827
        %856 = vmatprep.subr.bf16.mxu0 0
        %857 = vmatpush1.bf16.msra.mxu0 %v826
        %858 = vmatprep.subr.bf16.mxu0 0
        %859 = vmatpush2.bf16.msra.mxu0 0
        %860 = vmatprep.subr.bf16.mxu0 0
        %861 = vmatpush2.bf16.msra.mxu0 0
        %862 = vmatprep.subr.bf16.mxu0 0
        %863 = vmatpush2.bf16.msra.mxu0 0
        %864 = vmatprep.subr.bf16.mxu0 0
        %865 = vmatpush2.bf16.msra.mxu0 0
        %866 = vmatprep.subr.bf16.mxu0 0
        %867 = vmatpush2.bf16.msra.mxu0 0
        %868 = vmatprep.subr.bf16.mxu0 0
        %869 = vmatpush2.bf16.msra.mxu0 0
        %870 = vmatprep.subr.bf16.mxu0 0
        %871 = vmatpush2.bf16.msra.mxu0 0
        %872 = vmatprep.subr.bf16.mxu0 0
        %873 = vmatpush2.bf16.msra.mxu0 0
        %874 = vmatprep.mubr.bf16.mxu0 0
        %875 = vmatmul.mubr.bf16.gmra.mxu0 %v739
        %v876 = vpop.f32.mrf.mxu0
        %v877 = vadd.f32 0.0, %v876
        %v878 = vpop.f32.mrf.mxu0
        %v879 = vpop.f32.mrf.mxu0
        %v880 = vadd.f32 0.0, %v879
        %v881 = vpop.f32.mrf.mxu0
        %882 = vmatprep.mubr.bf16.mxu0 0
        %883 = vmatmul.mubr.bf16.gmra.mxu0 %v740
        %v884 = vpop.f32.mrf.mxu0
        %v885 = vadd.f32 0.0, %v884
        %v886 = vpop.f32.mrf.mxu0
        %v887 = vpop.f32.mrf.mxu0
        %v888 = vadd.f32 0.0, %v887
        %v889 = vpop.f32.mrf.mxu0
        %890 = vmatprep.mubr.bf16.mxu0 0
        %891 = vmatmul.mubr.bf16.gmra.mxu0 %v741
        %v892 = vpop.f32.mrf.mxu0
        %v893 = vadd.f32 0.0, %v892
        %v894 = vpop.f32.mrf.mxu0
        %v895 = vpop.f32.mrf.mxu0
        %v896 = vadd.f32 0.0, %v895
        %v897 = vpop.f32.mrf.mxu0
        %898 = vmatprep.mubr.bf16.mxu0 0
        %899 = vmatmul.mubr.bf16.gmra.mxu0 %v742
        %v900 = vpop.f32.mrf.mxu0
        %v901 = vadd.f32 0.0, %v900
        %v902 = vpop.f32.mrf.mxu0
        %v903 = vpop.f32.mrf.mxu0
        %v904 = vadd.f32 0.0, %v903
        %v905 = vpop.f32.mrf.mxu0
        %906 = vmatprep.mubr.bf16.mxu0 0
        %907 = vmatmul.mubr.bf16.gmra.mxu0 %v743
        %v908 = vpop.f32.mrf.mxu0
        %v909 = vadd.f32 0.0, %v908
        %v910 = vpop.f32.mrf.mxu0
        %v911 = vpop.f32.mrf.mxu0
        %v912 = vadd.f32 0.0, %v911
        %v913 = vpop.f32.mrf.mxu0
        %914 = vmatprep.mubr.bf16.mxu0 0
        %915 = vmatmul.mubr.bf16.gmra.mxu0 %v744
        %v916 = vpop.f32.mrf.mxu0
        %v917 = vadd.f32 0.0, %v916
        %v918 = vpop.f32.mrf.mxu0
        %v919 = vpop.f32.mrf.mxu0
        %v920 = vadd.f32 0.0, %v919
        %v921 = vpop.f32.mrf.mxu0
        %922 = vmatprep.mubr.bf16.mxu0 0
        %923 = vmatmul.mubr.bf16.gmra.mxu0 %v745
        %v924 = vpop.f32.mrf.mxu0
        %v925 = vadd.f32 0.0, %v924
        %v926 = vpop.f32.mrf.mxu0
        %v927 = vpop.f32.mrf.mxu0
        %v928 = vadd.f32 0.0, %v927
        %v929 = vpop.f32.mrf.mxu0
        %930 = vmatprep.mubr.bf16.mxu0 0
        %931 = vmatmul.mubr.bf16.gmra.mxu0 %v746
        %v932 = vpop.f32.mrf.mxu0
        %v933 = vadd.f32 0.0, %v932
        %v934 = vpop.f32.mrf.mxu0
        %v935 = vpop.f32.mrf.mxu0
        %v936 = vadd.f32 0.0, %v935
        %v937 = vpop.f32.mrf.mxu0
        %938 = vmatprep.mubr.bf16.mxu0 0
        %939 = vmatmul.mubr.bf16.gmra.mxu0 %v747
        %v940 = vpop.f32.mrf.mxu0
        %v941 = vadd.f32 0.0, %v940
        %v942 = vpop.f32.mrf.mxu0
        %v943 = vpop.f32.mrf.mxu0
        %v944 = vadd.f32 0.0, %v943
        %v945 = vpop.f32.mrf.mxu0
        %946 = vmatprep.mubr.bf16.mxu0 0
        %947 = vmatmul.mubr.bf16.gmra.mxu0 %v748
        %v948 = vpop.f32.mrf.mxu0
        %v949 = vadd.f32 0.0, %v948
        %v950 = vpop.f32.mrf.mxu0
        %v951 = vpop.f32.mrf.mxu0
        %v952 = vadd.f32 0.0, %v951
        %v953 = vpop.f32.mrf.mxu0
        %954 = vmatprep.mubr.bf16.mxu0 0
        %955 = vmatmul.mubr.bf16.gmra.mxu0 %v749
        %v956 = vpop.f32.mrf.mxu0
        %v957 = vadd.f32 0.0, %v956
        %v958 = vpop.f32.mrf.mxu0
        %v959 = vpop.f32.mrf.mxu0
        %v960 = vadd.f32 0.0, %v959
        %v961 = vpop.f32.mrf.mxu0
        %962 = vmatprep.mubr.bf16.mxu0 0
        %963 = vmatmul.mubr.bf16.gmra.mxu0 %v750
        %v964 = vpop.f32.mrf.mxu0
        %v965 = vadd.f32 0.0, %v964
        %v966 = vpop.f32.mrf.mxu0
        %v967 = vpop.f32.mrf.mxu0
        %v968 = vadd.f32 0.0, %v967
        %v969 = vpop.f32.mrf.mxu0
        %970 = vmatprep.mubr.bf16.mxu0 0
        %971 = vmatmul.mubr.bf16.gmra.mxu0 %v751
        %v972 = vpop.f32.mrf.mxu0
        %v973 = vadd.f32 0.0, %v972
        %v974 = vpop.f32.mrf.mxu0
        %v975 = vpop.f32.mrf.mxu0
        %v976 = vadd.f32 0.0, %v975
        %v977 = vpop.f32.mrf.mxu0
        %978 = vmatprep.mubr.bf16.mxu0 0
        %979 = vmatmul.mubr.bf16.gmra.mxu0 %v752
        %v980 = vpop.f32.mrf.mxu0
        %v981 = vadd.f32 0.0, %v980
        %v982 = vpop.f32.mrf.mxu0
        %v983 = vpop.f32.mrf.mxu0
        %v984 = vadd.f32 0.0, %v983
        %v985 = vpop.f32.mrf.mxu0
        %986 = vmatprep.mubr.bf16.mxu0 0
        %987 = vmatmul.mubr.bf16.gmra.mxu0 %v753
        %v988 = vpop.f32.mrf.mxu0
        %v989 = vadd.f32 0.0, %v988
        %v990 = vpop.f32.mrf.mxu0
        %v991 = vpop.f32.mrf.mxu0
        %v992 = vadd.f32 0.0, %v991
        %v993 = vpop.f32.mrf.mxu0
        %994 = vmatprep.mubr.bf16.mxu0 0
        %995 = vmatmul.mubr.bf16.gmra.mxu0 %v754
        %v996 = vpop.f32.mrf.mxu0
        %v997 = vadd.f32 0.0, %v996
        %v998 = vpop.f32.mrf.mxu0
        %v999 = vpop.f32.mrf.mxu0
        %v1000 = vadd.f32 0.0, %v999
        %v1001 = vpop.f32.mrf.mxu0
        %1002 = vdwg.mxu0
        %s1003 = scalar_lea.vmem %s1, 128
        %v1004 = vld [vmem:[%s1003] sm:$0xf]
        %v1005 = vld [vmem:[%s1003 + $0x4] sm:$0xf]
        %v1006 = vld [vmem:[%s1003 + $0x8] sm:$0xf]
        %v1007 = vld [vmem:[%s1003 + $0xc] sm:$0xf]
        %v1008 = vld [vmem:[%s1003 + $0x10] sm:$0xf]
        %v1009 = vld [vmem:[%s1003 + $0x14] sm:$0xf]
        %v1010 = vld [vmem:[%s1003 + $0x18] sm:$0xf]
        %v1011 = vld [vmem:[%s1003 + $0x1c] sm:$0xf]
        %v1012 = vld [vmem:[%s1003 + $0x20] sm:$0xf]
        %v1013 = vld [vmem:[%s1003 + $0x24] sm:$0xf]
        %v1014 = vld [vmem:[%s1003 + $0x28] sm:$0xf]
        %v1015 = vld [vmem:[%s1003 + $0x2c] sm:$0xf]
        %v1016 = vld [vmem:[%s1003 + $0x30] sm:$0xf]
        %v1017 = vld [vmem:[%s1003 + $0x34] sm:$0xf]
        %v1018 = vld [vmem:[%s1003 + $0x38] sm:$0xf]
        %v1019 = vld [vmem:[%s1003 + $0x3c] sm:$0xf]
        %v1036 = vunpack.c.l.b16 %v1004
        %v1037 = vunpack.c.l.b16 %v1005
        %v1038 = vunpack.c.l.b16 %v1006
        %v1039 = vunpack.c.l.b16 %v1007
        %v1040 = vunpack.c.l.b16 %v1008
        %v1041 = vunpack.c.l.b16 %v1009
        %v1042 = vunpack.c.l.b16 %v1010
        %v1043 = vunpack.c.l.b16 %v1011
        %v1044 = vunpack.c.l.b16 %v1012
        %v1045 = vunpack.c.l.b16 %v1013
        %v1046 = vunpack.c.l.b16 %v1014
        %v1047 = vunpack.c.l.b16 %v1015
        %v1048 = vunpack.c.l.b16 %v1016
        %v1049 = vunpack.c.l.b16 %v1017
        %v1050 = vunpack.c.l.b16 %v1018
        %v1051 = vunpack.c.l.b16 %v1019
        %v1052 = vpack.c.b16 %v1037, %v1036
        %v1053 = vpack.c.b16 %v1039, %v1038
        %v1054 = vpack.c.b16 %v1041, %v1040
        %v1055 = vpack.c.b16 %v1043, %v1042
        %v1056 = vpack.c.b16 %v1045, %v1044
        %v1057 = vpack.c.b16 %v1047, %v1046
        %v1058 = vpack.c.b16 %v1049, %v1048
        %v1059 = vpack.c.b16 %v1051, %v1050
        %1068 = vmatprep.subr.bf16.mxu0 0
        %1069 = vmatpush1.bf16.msra.mxu0 %v1059
        %1070 = vmatprep.subr.bf16.mxu0 0
        %1071 = vmatpush1.bf16.msra.mxu0 %v1058
        %1072 = vmatprep.subr.bf16.mxu0 0
        %1073 = vmatpush1.bf16.msra.mxu0 %v1057
        %1074 = vmatprep.subr.bf16.mxu0 0
        %1075 = vmatpush1.bf16.msra.mxu0 %v1056
        %1076 = vmatprep.subr.bf16.mxu0 0
        %1077 = vmatpush1.bf16.msra.mxu0 %v1055
        %1078 = vmatprep.subr.bf16.mxu0 0
        %1079 = vmatpush1.bf16.msra.mxu0 %v1054
        %1080 = vmatprep.subr.bf16.mxu0 0
        %1081 = vmatpush1.bf16.msra.mxu0 %v1053
        %1082 = vmatprep.subr.bf16.mxu0 0
        %1083 = vmatpush1.bf16.msra.mxu0 %v1052
        %1084 = vmatprep.subr.bf16.mxu0 0
        %1085 = vmatpush2.bf16.msra.mxu0 0
        %1086 = vmatprep.subr.bf16.mxu0 0
        %1087 = vmatpush2.bf16.msra.mxu0 0
        %1088 = vmatprep.subr.bf16.mxu0 0
        %1089 = vmatpush2.bf16.msra.mxu0 0
        %1090 = vmatprep.subr.bf16.mxu0 0
        %1091 = vmatpush2.bf16.msra.mxu0 0
        %1092 = vmatprep.subr.bf16.mxu0 0
        %1093 = vmatpush2.bf16.msra.mxu0 0
        %1094 = vmatprep.subr.bf16.mxu0 0
        %1095 = vmatpush2.bf16.msra.mxu0 0
        %1096 = vmatprep.subr.bf16.mxu0 0
        %1097 = vmatpush2.bf16.msra.mxu0 0
        %1098 = vmatprep.subr.bf16.mxu0 0
        %1099 = vmatpush2.bf16.msra.mxu0 0
        %1100 = vmatprep.mubr.bf16.mxu0 0
        %1101 = vmatmul.mubr.bf16.gmra.mxu0 %v741
        %v1102 = vpop.f32.mrf.mxu0
        %v1103 = vadd.f32 0.0, %v1102
        %v1104 = vpop.f32.mrf.mxu0
        %v1105 = vpop.f32.mrf.mxu0
        %v1106 = vadd.f32 0.0, %v1105
        %v1107 = vpop.f32.mrf.mxu0
        %1108 = vmatprep.mubr.bf16.mxu0 0
        %1109 = vmatmul.mubr.bf16.gmra.mxu0 %v742
        %v1110 = vpop.f32.mrf.mxu0
        %v1111 = vadd.f32 0.0, %v1110
        %v1112 = vpop.f32.mrf.mxu0
        %v1113 = vpop.f32.mrf.mxu0
        %v1114 = vadd.f32 0.0, %v1113
        %v1115 = vpop.f32.mrf.mxu0
        %1116 = vmatprep.mubr.bf16.mxu0 0
        %1117 = vmatmul.mubr.bf16.gmra.mxu0 %v743
        %v1118 = vpop.f32.mrf.mxu0
        %v1119 = vadd.f32 0.0, %v1118
        %v1120 = vpop.f32.mrf.mxu0
        %v1121 = vpop.f32.mrf.mxu0
        %v1122 = vadd.f32 0.0, %v1121
        %v1123 = vpop.f32.mrf.mxu0
        %1124 = vmatprep.mubr.bf16.mxu0 0
        %1125 = vmatmul.mubr.bf16.gmra.mxu0 %v744
        %v1126 = vpop.f32.mrf.mxu0
        %v1127 = vadd.f32 0.0, %v1126
        %v1128 = vpop.f32.mrf.mxu0
        %v1129 = vpop.f32.mrf.mxu0
        %v1130 = vadd.f32 0.0, %v1129
        %v1131 = vpop.f32.mrf.mxu0
        %1132 = vmatprep.mubr.bf16.mxu0 0
        %1133 = vmatmul.mubr.bf16.gmra.mxu0 %v745
        %v1134 = vpop.f32.mrf.mxu0
        %v1135 = vadd.f32 0.0, %v1134
        %v1136 = vpop.f32.mrf.mxu0
        %v1137 = vpop.f32.mrf.mxu0
        %v1138 = vadd.f32 0.0, %v1137
        %v1139 = vpop.f32.mrf.mxu0
        %1140 = vmatprep.mubr.bf16.mxu0 0
        %1141 = vmatmul.mubr.bf16.gmra.mxu0 %v746
        %v1142 = vpop.f32.mrf.mxu0
        %v1143 = vadd.f32 0.0, %v1142
        %v1144 = vpop.f32.mrf.mxu0
        %v1145 = vpop.f32.mrf.mxu0
        %v1146 = vadd.f32 0.0, %v1145
        %v1147 = vpop.f32.mrf.mxu0
        %1148 = vmatprep.mubr.bf16.mxu0 0
        %1149 = vmatmul.mubr.bf16.gmra.mxu0 %v747
        %v1150 = vpop.f32.mrf.mxu0
        %v1151 = vadd.f32 0.0, %v1150
        %v1152 = vpop.f32.mrf.mxu0
        %v1153 = vpop.f32.mrf.mxu0
        %v1154 = vadd.f32 0.0, %v1153
        %v1155 = vpop.f32.mrf.mxu0
        %1156 = vmatprep.mubr.bf16.mxu0 0
        %1157 = vmatmul.mubr.bf16.gmra.mxu0 %v748
        %v1158 = vpop.f32.mrf.mxu0
        %v1159 = vadd.f32 0.0, %v1158
        %v1160 = vpop.f32.mrf.mxu0
        %v1161 = vpop.f32.mrf.mxu0
        %v1162 = vadd.f32 0.0, %v1161
        %v1163 = vpop.f32.mrf.mxu0
        %1164 = vmatprep.mubr.bf16.mxu0 0
        %1165 = vmatmul.mubr.bf16.gmra.mxu0 %v749
        %v1166 = vpop.f32.mrf.mxu0
        %v1167 = vadd.f32 0.0, %v1166
        %v1168 = vpop.f32.mrf.mxu0
        %v1169 = vpop.f32.mrf.mxu0
        %v1170 = vadd.f32 0.0, %v1169
        %v1171 = vpop.f32.mrf.mxu0
        %1172 = vmatprep.mubr.bf16.mxu0 0
        %1173 = vmatmul.mubr.bf16.gmra.mxu0 %v750
        %v1174 = vpop.f32.mrf.mxu0
        %v1175 = vadd.f32 0.0, %v1174
        %v1176 = vpop.f32.mrf.mxu0
        %v1177 = vpop.f32.mrf.mxu0
        %v1178 = vadd.f32 0.0, %v1177
        %v1179 = vpop.f32.mrf.mxu0
        %1180 = vmatprep.mubr.bf16.mxu0 0
        %1181 = vmatmul.mubr.bf16.gmra.mxu0 %v751
        %v1182 = vpop.f32.mrf.mxu0
        %v1183 = vadd.f32 0.0, %v1182
        %v1184 = vpop.f32.mrf.mxu0
        %v1185 = vpop.f32.mrf.mxu0
        %v1186 = vadd.f32 0.0, %v1185
        %v1187 = vpop.f32.mrf.mxu0
        %1188 = vmatprep.mubr.bf16.mxu0 0
        %1189 = vmatmul.mubr.bf16.gmra.mxu0 %v752
        %v1190 = vpop.f32.mrf.mxu0
        %v1191 = vadd.f32 0.0, %v1190
        %v1192 = vpop.f32.mrf.mxu0
        %v1193 = vpop.f32.mrf.mxu0
        %v1194 = vadd.f32 0.0, %v1193
        %v1195 = vpop.f32.mrf.mxu0
        %1196 = vmatprep.mubr.bf16.mxu0 0
        %1197 = vmatmul.mubr.bf16.gmra.mxu0 %v753
        %v1198 = vpop.f32.mrf.mxu0
        %v1199 = vadd.f32 0.0, %v1198
        %v1200 = vpop.f32.mrf.mxu0
        %v1201 = vpop.f32.mrf.mxu0
        %v1202 = vadd.f32 0.0, %v1201
        %v1203 = vpop.f32.mrf.mxu0
        %1204 = vmatprep.mubr.bf16.mxu0 0
        %1205 = vmatmul.mubr.bf16.gmra.mxu0 %v754
        %v1206 = vpop.f32.mrf.mxu0
        %v1207 = vadd.f32 0.0, %v1206
        %v1208 = vpop.f32.mrf.mxu0
        %v1209 = vpop.f32.mrf.mxu0
        %v1210 = vadd.f32 0.0, %v1209
        %v1211 = vpop.f32.mrf.mxu0
        %1212 = vmatprep.mubr.bf16.mxu0 0
        %1213 = vmatmul.mubr.bf16.gmra.mxu0 %v759
        %v1214 = vpop.f32.mrf.mxu0
        %v1215 = vadd.f32 0.0, %v1214
        %v1216 = vpop.f32.mrf.mxu0
        %v1217 = vpop.f32.mrf.mxu0
        %v1218 = vadd.f32 0.0, %v1217
        %v1219 = vpop.f32.mrf.mxu0
        %1220 = vmatprep.mubr.bf16.mxu0 0
        %1221 = vmatmul.mubr.bf16.gmra.mxu0 %v760
        %v1222 = vpop.f32.mrf.mxu0
        %v1223 = vadd.f32 0.0, %v1222
        %v1224 = vpop.f32.mrf.mxu0
        %v1225 = vpop.f32.mrf.mxu0
        %v1226 = vadd.f32 0.0, %v1225
        %v1227 = vpop.f32.mrf.mxu0
        %1228 = vdwg.mxu0
        %v1245 = vunpack.c.l.b16 %v762
        %v1246 = vunpack.c.l.b16 %v763
        %v1247 = vunpack.c.l.b16 %v764
        %v1248 = vunpack.c.l.b16 %v765
        %v1249 = vunpack.c.l.b16 %v766
        %v1250 = vunpack.c.l.b16 %v767
        %v1251 = vunpack.c.l.b16 %v768
        %v1252 = vunpack.c.l.b16 %v769
        %v1253 = vunpack.c.l.b16 %v770
        %v1254 = vunpack.c.l.b16 %v771
        %v1255 = vunpack.c.l.b16 %v772
        %v1256 = vunpack.c.l.b16 %v773
        %v1257 = vunpack.c.l.b16 %v774
        %v1258 = vunpack.c.l.b16 %v775
        %v1259 = vunpack.c.l.b16 %v776
        %v1260 = vunpack.c.l.b16 %v777
        %v1261 = vpack.c.b16 %v1246, %v1245
        %v1262 = vpack.c.b16 %v1248, %v1247
        %v1263 = vpack.c.b16 %v1250, %v1249
        %v1264 = vpack.c.b16 %v1252, %v1251
        %v1265 = vpack.c.b16 %v1254, %v1253
        %v1266 = vpack.c.b16 %v1256, %v1255
        %v1267 = vpack.c.b16 %v1258, %v1257
        %v1268 = vpack.c.b16 %v1260, %v1259
        %1277 = vmatprep.subr.bf16.mxu0 0
        %1278 = vmatpush1.bf16.msra.mxu0 %v1268
        %1279 = vmatprep.subr.bf16.mxu0 0
        %1280 = vmatpush1.bf16.msra.mxu0 %v1267
        %1281 = vmatprep.subr.bf16.mxu0 0
        %1282 = vmatpush1.bf16.msra.mxu0 %v1266
        %1283 = vmatprep.subr.bf16.mxu0 0
        %1284 = vmatpush1.bf16.msra.mxu0 %v1265
        %1285 = vmatprep.subr.bf16.mxu0 0
        %1286 = vmatpush1.bf16.msra.mxu0 %v1264
        %1287 = vmatprep.subr.bf16.mxu0 0
        %1288 = vmatpush1.bf16.msra.mxu0 %v1263
        %1289 = vmatprep.subr.bf16.mxu0 0
        %1290 = vmatpush1.bf16.msra.mxu0 %v1262
        %1291 = vmatprep.subr.bf16.mxu0 0
        %1292 = vmatpush1.bf16.msra.mxu0 %v1261
        %1293 = vmatprep.subr.bf16.mxu0 0
        %1294 = vmatpush2.bf16.msra.mxu0 0
        %1295 = vmatprep.subr.bf16.mxu0 0
        %1296 = vmatpush2.bf16.msra.mxu0 0
        %1297 = vmatprep.subr.bf16.mxu0 0
        %1298 = vmatpush2.bf16.msra.mxu0 0
        %1299 = vmatprep.subr.bf16.mxu0 0
        %1300 = vmatpush2.bf16.msra.mxu0 0
        %1301 = vmatprep.subr.bf16.mxu0 0
        %1302 = vmatpush2.bf16.msra.mxu0 0
        %1303 = vmatprep.subr.bf16.mxu0 0
        %1304 = vmatpush2.bf16.msra.mxu0 0
        %1305 = vmatprep.subr.bf16.mxu0 0
        %1306 = vmatpush2.bf16.msra.mxu0 0
        %1307 = vmatprep.subr.bf16.mxu0 0
        %1308 = vmatpush2.bf16.msra.mxu0 0
        %1309 = vmatprep.mubr.bf16.mxu0 0
        %1310 = vmatmul.mubr.bf16.gmra.mxu0 %v691
        %v1311 = vpop.f32.mrf.mxu0
        %v1312 = vadd.f32 %v877, %v1311
        %v1313 = vpop.f32.mrf.mxu0
        %v1314 = vpop.f32.mrf.mxu0
        %v1315 = vadd.f32 %v880, %v1314
        %v1316 = vpop.f32.mrf.mxu0
        %1317 = vmatprep.mubr.bf16.mxu0 0
        %1318 = vmatmul.mubr.bf16.gmra.mxu0 %v692
        %v1319 = vpop.f32.mrf.mxu0
        %v1320 = vadd.f32 %v885, %v1319
        %v1321 = vpop.f32.mrf.mxu0
        %v1322 = vpop.f32.mrf.mxu0
        %v1323 = vadd.f32 %v888, %v1322
        %v1324 = vpop.f32.mrf.mxu0
        %1325 = vmatprep.mubr.bf16.mxu0 0
        %1326 = vmatmul.mubr.bf16.gmra.mxu0 %v693
        %v1327 = vpop.f32.mrf.mxu0
        %v1328 = vadd.f32 %v893, %v1327
        %v1329 = vpop.f32.mrf.mxu0
        %v1330 = vpop.f32.mrf.mxu0
        %v1331 = vadd.f32 %v896, %v1330
        %v1332 = vpop.f32.mrf.mxu0
        %1333 = vmatprep.mubr.bf16.mxu0 0
        %1334 = vmatmul.mubr.bf16.gmra.mxu0 %v694
        %v1335 = vpop.f32.mrf.mxu0
        %v1336 = vadd.f32 %v901, %v1335
        %v1337 = vpop.f32.mrf.mxu0
        %v1338 = vpop.f32.mrf.mxu0
        %v1339 = vadd.f32 %v904, %v1338
        %v1340 = vpop.f32.mrf.mxu0
        %1341 = vmatprep.mubr.bf16.mxu0 0
        %1342 = vmatmul.mubr.bf16.gmra.mxu0 %v695
        %v1343 = vpop.f32.mrf.mxu0
        %v1344 = vadd.f32 %v909, %v1343
        %v1345 = vpop.f32.mrf.mxu0
        %v1346 = vpop.f32.mrf.mxu0
        %v1347 = vadd.f32 %v912, %v1346
        %v1348 = vpop.f32.mrf.mxu0
        %1349 = vmatprep.mubr.bf16.mxu0 0
        %1350 = vmatmul.mubr.bf16.gmra.mxu0 %v696
        %v1351 = vpop.f32.mrf.mxu0
        %v1352 = vadd.f32 %v917, %v1351
        %v1353 = vpop.f32.mrf.mxu0
        %v1354 = vpop.f32.mrf.mxu0
        %v1355 = vadd.f32 %v920, %v1354
        %v1356 = vpop.f32.mrf.mxu0
        %1357 = vmatprep.mubr.bf16.mxu0 0
        %1358 = vmatmul.mubr.bf16.gmra.mxu0 %v697
        %v1359 = vpop.f32.mrf.mxu0
        %v1360 = vadd.f32 %v925, %v1359
        %v1361 = vpop.f32.mrf.mxu0
        %v1362 = vpop.f32.mrf.mxu0
        %v1363 = vadd.f32 %v928, %v1362
        %v1364 = vpop.f32.mrf.mxu0
        %1365 = vmatprep.mubr.bf16.mxu0 0
        %1366 = vmatmul.mubr.bf16.gmra.mxu0 %v698
        %v1367 = vpop.f32.mrf.mxu0
        %v1368 = vadd.f32 %v933, %v1367
        %v1369 = vpop.f32.mrf.mxu0
        %v1370 = vpop.f32.mrf.mxu0
        %v1371 = vadd.f32 %v936, %v1370
        %v1372 = vpop.f32.mrf.mxu0
        %1373 = vmatprep.mubr.bf16.mxu0 0
        %1374 = vmatmul.mubr.bf16.gmra.mxu0 %v699
        %v1375 = vpop.f32.mrf.mxu0
        %v1376 = vadd.f32 %v941, %v1375
        %v1377 = vpop.f32.mrf.mxu0
        %v1378 = vpop.f32.mrf.mxu0
        %v1379 = vadd.f32 %v944, %v1378
        %v1380 = vpop.f32.mrf.mxu0
        %1381 = vmatprep.mubr.bf16.mxu0 0
        %1382 = vmatmul.mubr.bf16.gmra.mxu0 %v700
        %v1383 = vpop.f32.mrf.mxu0
        %v1384 = vadd.f32 %v949, %v1383
        %v1385 = vpop.f32.mrf.mxu0
        %v1386 = vpop.f32.mrf.mxu0
        %v1387 = vadd.f32 %v952, %v1386
        %v1388 = vpop.f32.mrf.mxu0
        %1389 = vmatprep.mubr.bf16.mxu0 0
        %1390 = vmatmul.mubr.bf16.gmra.mxu0 %v701
        %v1391 = vpop.f32.mrf.mxu0
        %v1392 = vadd.f32 %v957, %v1391
        %v1393 = vpop.f32.mrf.mxu0
        %v1394 = vpop.f32.mrf.mxu0
        %v1395 = vadd.f32 %v960, %v1394
        %v1396 = vpop.f32.mrf.mxu0
        %1397 = vmatprep.mubr.bf16.mxu0 0
        %1398 = vmatmul.mubr.bf16.gmra.mxu0 %v702
        %v1399 = vpop.f32.mrf.mxu0
        %v1400 = vadd.f32 %v965, %v1399
        %v1401 = vpop.f32.mrf.mxu0
        %v1402 = vpop.f32.mrf.mxu0
        %v1403 = vadd.f32 %v968, %v1402
        %v1404 = vpop.f32.mrf.mxu0
        %1405 = vmatprep.mubr.bf16.mxu0 0
        %1406 = vmatmul.mubr.bf16.gmra.mxu0 %v703
        %v1407 = vpop.f32.mrf.mxu0
        %v1408 = vadd.f32 %v973, %v1407
        %v1409 = vpop.f32.mrf.mxu0
        %v1410 = vpop.f32.mrf.mxu0
        %v1411 = vadd.f32 %v976, %v1410
        %v1412 = vpop.f32.mrf.mxu0
        %1413 = vmatprep.mubr.bf16.mxu0 0
        %1414 = vmatmul.mubr.bf16.gmra.mxu0 %v704
        %v1415 = vpop.f32.mrf.mxu0
        %v1416 = vadd.f32 %v981, %v1415
        %v1417 = vpop.f32.mrf.mxu0
        %v1418 = vpop.f32.mrf.mxu0
        %v1419 = vadd.f32 %v984, %v1418
        %v1420 = vpop.f32.mrf.mxu0
        %1421 = vmatprep.mubr.bf16.mxu0 0
        %1422 = vmatmul.mubr.bf16.gmra.mxu0 %v705
        %v1423 = vpop.f32.mrf.mxu0
        %v1424 = vadd.f32 %v989, %v1423
        %v1425 = vpop.f32.mrf.mxu0
        %v1426 = vpop.f32.mrf.mxu0
        %v1427 = vadd.f32 %v992, %v1426
        %v1428 = vpop.f32.mrf.mxu0
        %1429 = vmatprep.mubr.bf16.mxu0 0
        %1430 = vmatmul.mubr.bf16.gmra.mxu0 %v706
        %v1431 = vpop.f32.mrf.mxu0
        %v1432 = vadd.f32 %v997, %v1431
        %v1433 = vpop.f32.mrf.mxu0
        %v1434 = vpop.f32.mrf.mxu0
        %v1435 = vadd.f32 %v1000, %v1434
        %v1436 = vpop.f32.mrf.mxu0
        %1437 = vdwg.mxu0
        %v1438 = vadd.f32 %v1312, %v1103
        %v1439 = vadd.f32 %v1315, %v1106
        %v1440 = vadd.f32 %v1320, %v1111
        %v1441 = vadd.f32 %v1323, %v1114
        %v1442 = vadd.f32 %v1328, %v1119
        %v1443 = vadd.f32 %v1331, %v1122
        %v1444 = vadd.f32 %v1336, %v1127
        %v1445 = vadd.f32 %v1339, %v1130
        %v1446 = vadd.f32 %v1344, %v1135
        %v1447 = vadd.f32 %v1347, %v1138
        %v1448 = vadd.f32 %v1352, %v1143
        %v1449 = vadd.f32 %v1355, %v1146
        %v1450 = vadd.f32 %v1360, %v1151
        %v1451 = vadd.f32 %v1363, %v1154
        %v1452 = vadd.f32 %v1368, %v1159
        %v1453 = vadd.f32 %v1371, %v1162
        %v1454 = vadd.f32 %v1376, %v1167
        %v1455 = vadd.f32 %v1379, %v1170
        %v1456 = vadd.f32 %v1384, %v1175
        %v1457 = vadd.f32 %v1387, %v1178
        %v1458 = vadd.f32 %v1392, %v1183
        %v1459 = vadd.f32 %v1395, %v1186
        %v1460 = vadd.f32 %v1400, %v1191
        %v1461 = vadd.f32 %v1403, %v1194
        %v1462 = vadd.f32 %v1408, %v1199
        %v1463 = vadd.f32 %v1411, %v1202
        %v1464 = vadd.f32 %v1416, %v1207
        %v1465 = vadd.f32 %v1419, %v1210
        %v1466 = vadd.f32 %v1424, %v1215
        %v1467 = vadd.f32 %v1427, %v1218
        %v1468 = vadd.f32 %v1432, %v1223
        %v1469 = vadd.f32 %v1435, %v1226
        %v1470 = vld [vmem:[%s2] sm:$0x1]
        %v1472 = vlaneseq
        %v1473 = vshrl.u32 %v1472, 7
        %v1474 = vsub.s32 0, %v1473
        %v1475 = vrot.slane %v1470, %v1474
        %v1477 = vadd.f32 %v1438, %v1475
        %v1478 = vadd.f32 %v1439, %v1475
        %v1479 = vadd.f32 %v1440, %v1475
        %v1480 = vadd.f32 %v1441, %v1475
        %v1481 = vadd.f32 %v1442, %v1475
        %v1482 = vadd.f32 %v1443, %v1475
        %v1483 = vadd.f32 %v1444, %v1475
        %v1484 = vadd.f32 %v1445, %v1475
        %v1485 = vadd.f32 %v1446, %v1475
        %v1486 = vadd.f32 %v1447, %v1475
        %v1487 = vadd.f32 %v1448, %v1475
        %v1488 = vadd.f32 %v1449, %v1475
        %v1489 = vadd.f32 %v1450, %v1475
        %v1490 = vadd.f32 %v1451, %v1475
        %v1491 = vadd.f32 %v1452, %v1475
        %v1492 = vadd.f32 %v1453, %v1475
        %v1493 = vadd.f32 %v1454, %v1475
        %v1494 = vadd.f32 %v1455, %v1475
        %v1495 = vadd.f32 %v1456, %v1475
        %v1496 = vadd.f32 %v1457, %v1475
        %v1497 = vadd.f32 %v1458, %v1475
        %v1498 = vadd.f32 %v1459, %v1475
        %v1499 = vadd.f32 %v1460, %v1475
        %v1500 = vadd.f32 %v1461, %v1475
        %v1501 = vadd.f32 %v1462, %v1475
        %v1502 = vadd.f32 %v1463, %v1475
        %v1503 = vadd.f32 %v1464, %v1475
        %v1504 = vadd.f32 %v1465, %v1475
        %v1505 = vadd.f32 %v1466, %v1475
        %v1506 = vadd.f32 %v1467, %v1475
        %v1507 = vadd.f32 %v1468, %v1475
        %v1508 = vadd.f32 %v1469, %v1475
        %v1509 = vmax.f32 %v1477, 0.0
        %v1510 = vmax.f32 %v1478, 0.0
        %v1511 = vmax.f32 %v1479, 0.0
        %v1512 = vmax.f32 %v1480, 0.0
        %v1513 = vmax.f32 %v1481, 0.0
        %v1514 = vmax.f32 %v1482, 0.0
        %v1515 = vmax.f32 %v1483, 0.0
        %v1516 = vmax.f32 %v1484, 0.0
        %v1517 = vmax.f32 %v1485, 0.0
        %v1518 = vmax.f32 %v1486, 0.0
        %v1519 = vmax.f32 %v1487, 0.0
        %v1520 = vmax.f32 %v1488, 0.0
        %v1521 = vmax.f32 %v1489, 0.0
        %v1522 = vmax.f32 %v1490, 0.0
        %v1523 = vmax.f32 %v1491, 0.0
        %v1524 = vmax.f32 %v1492, 0.0
        %v1525 = vmax.f32 %v1493, 0.0
        %v1526 = vmax.f32 %v1494, 0.0
        %v1527 = vmax.f32 %v1495, 0.0
        %v1528 = vmax.f32 %v1496, 0.0
        %v1529 = vmax.f32 %v1497, 0.0
        %v1530 = vmax.f32 %v1498, 0.0
        %v1531 = vmax.f32 %v1499, 0.0
        %v1532 = vmax.f32 %v1500, 0.0
        %v1533 = vmax.f32 %v1501, 0.0
        %v1534 = vmax.f32 %v1502, 0.0
        %v1535 = vmax.f32 %v1503, 0.0
        %v1536 = vmax.f32 %v1504, 0.0
        %v1537 = vmax.f32 %v1505, 0.0
        %v1538 = vmax.f32 %v1506, 0.0
        %v1539 = vmax.f32 %v1507, 0.0
        %v1540 = vmax.f32 %v1508, 0.0
        %1541 = vst [vmem:[#allocation2 + $0x20] sm:$0xff] %v1509
        %1542 = vst [vmem:[#allocation2 + $0x28] sm:$0xff] %v1510
        %1543 = vst [vmem:[#allocation2 + $0x30] sm:$0xff] %v1511
        %1544 = vst [vmem:[#allocation2 + $0x38] sm:$0xff] %v1512
        %1545 = vst [vmem:[#allocation2 + $0x40] sm:$0xff] %v1513
        %1546 = vst [vmem:[#allocation2 + $0x48] sm:$0xff] %v1514
        %1547 = vst [vmem:[#allocation2 + $0x50] sm:$0xff] %v1515
        %1548 = vst [vmem:[#allocation2 + $0x58] sm:$0xff] %v1516
        %1549 = vst [vmem:[#allocation2 + $0x60] sm:$0xff] %v1517
        %1550 = vst [vmem:[#allocation2 + $0x68] sm:$0xff] %v1518
        %1551 = vst [vmem:[#allocation2 + $0x70] sm:$0xff] %v1519
        %1552 = vst [vmem:[#allocation2 + $0x78] sm:$0xff] %v1520
        %1553 = vst [vmem:[#allocation2 + $0x80] sm:$0xff] %v1521
        %1554 = vst [vmem:[#allocation2 + $0x88] sm:$0xff] %v1522
        %1555 = vst [vmem:[#allocation2 + $0x90] sm:$0xff] %v1523
        %1556 = vst [vmem:[#allocation2 + $0x98] sm:$0xff] %v1524
        %1557 = vst [vmem:[#allocation2 + $0xa0] sm:$0xff] %v1525
        %1558 = vst [vmem:[#allocation2 + $0xa8] sm:$0xff] %v1526
        %1559 = vst [vmem:[#allocation2 + $0xb0] sm:$0xff] %v1527
        %1560 = vst [vmem:[#allocation2 + $0xb8] sm:$0xff] %v1528
        %1561 = vst [vmem:[#allocation2 + $0xc0] sm:$0xff] %v1529
        %1562 = vst [vmem:[#allocation2 + $0xc8] sm:$0xff] %v1530
        %1563 = vst [vmem:[#allocation2 + $0xd0] sm:$0xff] %v1531
        %1564 = vst [vmem:[#allocation2 + $0xd8] sm:$0xff] %v1532
        %1565 = vst [vmem:[#allocation2 + $0xe0] sm:$0xff] %v1533
        %1566 = vst [vmem:[#allocation2 + $0xe8] sm:$0xff] %v1534
        %1567 = vst [vmem:[#allocation2 + $0xf0] sm:$0xff] %v1535
        %1568 = vst [vmem:[#allocation2 + $0xf8] sm:$0xff] %v1536
        %1569 = vst [vmem:[#allocation2 + $0x100] sm:$0xff] %v1537
        %1570 = vst [vmem:[#allocation2 + $0x108] sm:$0xff] %v1538
        %1571 = vst [vmem:[#allocation2 + $0x110] sm:$0xff] %v1539
        %1572 = vst [vmem:[#allocation2 + $0x118] sm:$0xff] %v1540
        %v1573 = vpack.c.bf16 %v1510, %v1509
        %v1574 = vpack.c.bf16 %v1512, %v1511
        %v1575 = vpack.c.bf16 %v1514, %v1513
        %v1576 = vpack.c.bf16 %v1516, %v1515
        %v1577 = vpack.c.bf16 %v1518, %v1517
        %v1578 = vpack.c.bf16 %v1520, %v1519
        %v1579 = vpack.c.bf16 %v1522, %v1521
        %v1580 = vpack.c.bf16 %v1524, %v1523
        %v1581 = vpack.c.bf16 %v1526, %v1525
        %v1582 = vpack.c.bf16 %v1528, %v1527
        %v1583 = vpack.c.bf16 %v1530, %v1529
        %v1584 = vpack.c.bf16 %v1532, %v1531
        %v1585 = vpack.c.bf16 %v1534, %v1533
        %v1586 = vpack.c.bf16 %v1536, %v1535
        %v1587 = vpack.c.bf16 %v1538, %v1537
        %v1588 = vpack.c.bf16 %v1540, %v1539
        %v1589 = vld [vmem:[#allocation2 + $0x1f] sm:$0xff]
        %v1590 = vld [vmem:[#allocation2 + $0x27] sm:$0xff]
        %v1591 = vld [vmem:[#allocation2 + $0x2f] sm:$0xff]
        %v1592 = vld [vmem:[#allocation2 + $0x37] sm:$0xff]
        %v1593 = vld [vmem:[#allocation2 + $0x3f] sm:$0xff]
        %v1594 = vld [vmem:[#allocation2 + $0x47] sm:$0xff]
        %v1595 = vld [vmem:[#allocation2 + $0x4f] sm:$0xff]
        %v1596 = vld [vmem:[#allocation2 + $0x57] sm:$0xff]
        %v1597 = vld [vmem:[#allocation2 + $0x5f] sm:$0xff]
        %v1598 = vld [vmem:[#allocation2 + $0x67] sm:$0xff]
        %v1599 = vld [vmem:[#allocation2 + $0x6f] sm:$0xff]
        %v1600 = vld [vmem:[#allocation2 + $0x77] sm:$0xff]
        %v1601 = vld [vmem:[#allocation2 + $0x7f] sm:$0xff]
        %v1602 = vld [vmem:[#allocation2 + $0x87] sm:$0xff]
        %v1603 = vld [vmem:[#allocation2 + $0x8f] sm:$0xff]
        %v1604 = vld [vmem:[#allocation2 + $0x97] sm:$0xff]
        %v1605 = vld [vmem:[#allocation2 + $0x9f] sm:$0xff]
        %v1606 = vld [vmem:[#allocation2 + $0xa7] sm:$0xff]
        %v1607 = vld [vmem:[#allocation2 + $0xaf] sm:$0xff]
        %v1608 = vld [vmem:[#allocation2 + $0xb7] sm:$0xff]
        %v1609 = vld [vmem:[#allocation2 + $0xbf] sm:$0xff]
        %v1610 = vld [vmem:[#allocation2 + $0xc7] sm:$0xff]
        %v1611 = vld [vmem:[#allocation2 + $0xcf] sm:$0xff]
        %v1612 = vld [vmem:[#allocation2 + $0xd7] sm:$0xff]
        %v1613 = vld [vmem:[#allocation2 + $0xdf] sm:$0xff]
        %v1614 = vld [vmem:[#allocation2 + $0xe7] sm:$0xff]
        %v1615 = vld [vmem:[#allocation2 + $0xef] sm:$0xff]
        %v1616 = vld [vmem:[#allocation2 + $0xf7] sm:$0xff]
        %v1617 = vld [vmem:[#allocation2 + $0xff] sm:$0xff]
        %v1618 = vld [vmem:[#allocation2 + $0x107] sm:$0xff]
        %v1619 = vld [vmem:[#allocation2 + $0x10f] sm:$0xff]
        %v1620 = vld [vmem:[#allocation2 + $0x117] sm:$0xff]
        %v1621 = vpack.c.bf16 %v1590, %v1589
        %v1622 = vpack.c.bf16 %v1592, %v1591
        %v1623 = vpack.c.bf16 %v1594, %v1593
        %v1624 = vpack.c.bf16 %v1596, %v1595
        %v1625 = vpack.c.bf16 %v1598, %v1597
        %v1626 = vpack.c.bf16 %v1600, %v1599
        %v1627 = vpack.c.bf16 %v1602, %v1601
        %v1628 = vpack.c.bf16 %v1604, %v1603
        %v1629 = vpack.c.bf16 %v1606, %v1605
        %v1630 = vpack.c.bf16 %v1608, %v1607
        %v1631 = vpack.c.bf16 %v1610, %v1609
        %v1632 = vpack.c.bf16 %v1612, %v1611
        %v1633 = vpack.c.bf16 %v1614, %v1613
        %v1634 = vpack.c.bf16 %v1616, %v1615
        %v1635 = vpack.c.bf16 %v1618, %v1617
        %v1636 = vpack.c.bf16 %v1620, %v1619
        %v1637 = vld [vmem:[#allocation2 + $0x21] sm:$0xff]
        %v1638 = vld [vmem:[#allocation2 + $0x29] sm:$0xff]
        %v1639 = vld [vmem:[#allocation2 + $0x31] sm:$0xff]
        %v1640 = vld [vmem:[#allocation2 + $0x39] sm:$0xff]
        %v1641 = vld [vmem:[#allocation2 + $0x41] sm:$0xff]
        %v1642 = vld [vmem:[#allocation2 + $0x49] sm:$0xff]
        %v1643 = vld [vmem:[#allocation2 + $0x51] sm:$0xff]
        %v1644 = vld [vmem:[#allocation2 + $0x59] sm:$0xff]
        %v1645 = vld [vmem:[#allocation2 + $0x61] sm:$0xff]
        %v1646 = vld [vmem:[#allocation2 + $0x69] sm:$0xff]
        %v1647 = vld [vmem:[#allocation2 + $0x71] sm:$0xff]
        %v1648 = vld [vmem:[#allocation2 + $0x79] sm:$0xff]
        %v1649 = vld [vmem:[#allocation2 + $0x81] sm:$0xff]
        %v1650 = vld [vmem:[#allocation2 + $0x89] sm:$0xff]
        %v1651 = vld [vmem:[#allocation2 + $0x91] sm:$0xff]
        %v1652 = vld [vmem:[#allocation2 + $0x99] sm:$0xff]
        %v1653 = vld [vmem:[#allocation2 + $0xa1] sm:$0xff]
        %v1654 = vld [vmem:[#allocation2 + $0xa9] sm:$0xff]
        %v1655 = vld [vmem:[#allocation2 + $0xb1] sm:$0xff]
        %v1656 = vld [vmem:[#allocation2 + $0xb9] sm:$0xff]
        %v1657 = vld [vmem:[#allocation2 + $0xc1] sm:$0xff]
        %v1658 = vld [vmem:[#allocation2 + $0xc9] sm:$0xff]
        %v1659 = vld [vmem:[#allocation2 + $0xd1] sm:$0xff]
        %v1660 = vld [vmem:[#allocation2 + $0xd9] sm:$0xff]
        %v1661 = vld [vmem:[#allocation2 + $0xe1] sm:$0xff]
        %v1662 = vld [vmem:[#allocation2 + $0xe9] sm:$0xff]
        %v1663 = vld [vmem:[#allocation2 + $0xf1] sm:$0xff]
        %v1664 = vld [vmem:[#allocation2 + $0xf9] sm:$0xff]
        %v1665 = vld [vmem:[#allocation2 + $0x101] sm:$0xff]
        %v1666 = vld [vmem:[#allocation2 + $0x109] sm:$0xff]
        %v1667 = vld [vmem:[#allocation2 + $0x111] sm:$0xff]
        %v1668 = vld [vmem:[#allocation2 + $0x119] sm:$0xff]
        %v1669 = vpack.c.bf16 %v1638, %v1637
        %v1670 = vpack.c.bf16 %v1640, %v1639
        %v1671 = vpack.c.bf16 %v1642, %v1641
        %v1672 = vpack.c.bf16 %v1644, %v1643
        %v1673 = vpack.c.bf16 %v1646, %v1645
        %v1674 = vpack.c.bf16 %v1648, %v1647
        %v1675 = vpack.c.bf16 %v1650, %v1649
        %v1676 = vpack.c.bf16 %v1652, %v1651
        %v1677 = vpack.c.bf16 %v1654, %v1653
        %v1678 = vpack.c.bf16 %v1656, %v1655
        %v1679 = vpack.c.bf16 %v1658, %v1657
        %v1680 = vpack.c.bf16 %v1660, %v1659
        %v1681 = vpack.c.bf16 %v1662, %v1661
        %v1682 = vpack.c.bf16 %v1664, %v1663
        %v1683 = vpack.c.bf16 %v1666, %v1665
        %v1684 = vpack.c.bf16 %v1668, %v1667
        %s1685 = scalar_lea.vmem %s1, 256
        %v1686 = vld [vmem:[%s1685] sm:$0xf]
        %v1687 = vld [vmem:[%s1685 + $0x4] sm:$0xf]
        %v1688 = vld [vmem:[%s1685 + $0x8] sm:$0xf]
        %v1689 = vld [vmem:[%s1685 + $0xc] sm:$0xf]
        %v1690 = vld [vmem:[%s1685 + $0x10] sm:$0xf]
        %v1691 = vld [vmem:[%s1685 + $0x14] sm:$0xf]
        %v1692 = vld [vmem:[%s1685 + $0x18] sm:$0xf]
        %v1693 = vld [vmem:[%s1685 + $0x1c] sm:$0xf]
        %v1694 = vld [vmem:[%s1685 + $0x20] sm:$0xf]
        %v1695 = vld [vmem:[%s1685 + $0x24] sm:$0xf]
        %v1696 = vld [vmem:[%s1685 + $0x28] sm:$0xf]
        %v1697 = vld [vmem:[%s1685 + $0x2c] sm:$0xf]
        %v1698 = vld [vmem:[%s1685 + $0x30] sm:$0xf]
        %v1699 = vld [vmem:[%s1685 + $0x34] sm:$0xf]
        %v1700 = vld [vmem:[%s1685 + $0x38] sm:$0xf]
        %v1701 = vld [vmem:[%s1685 + $0x3c] sm:$0xf]
        %s1702 = scalar_lea.vmem %s1, 192
        %v1703 = vld [vmem:[%s1702] sm:$0xf]
        %v1704 = vld [vmem:[%s1702 + $0x4] sm:$0xf]
        %v1705 = vld [vmem:[%s1702 + $0x8] sm:$0xf]
        %v1706 = vld [vmem:[%s1702 + $0xc] sm:$0xf]
        %v1707 = vld [vmem:[%s1702 + $0x10] sm:$0xf]
        %v1708 = vld [vmem:[%s1702 + $0x14] sm:$0xf]
        %v1709 = vld [vmem:[%s1702 + $0x18] sm:$0xf]
        %v1710 = vld [vmem:[%s1702 + $0x1c] sm:$0xf]
        %v1711 = vld [vmem:[%s1702 + $0x20] sm:$0xf]
        %v1712 = vld [vmem:[%s1702 + $0x24] sm:$0xf]
        %v1713 = vld [vmem:[%s1702 + $0x28] sm:$0xf]
        %v1714 = vld [vmem:[%s1702 + $0x2c] sm:$0xf]
        %v1715 = vld [vmem:[%s1702 + $0x30] sm:$0xf]
        %v1716 = vld [vmem:[%s1702 + $0x34] sm:$0xf]
        %v1717 = vld [vmem:[%s1702 + $0x38] sm:$0xf]
        %v1718 = vld [vmem:[%s1702 + $0x3c] sm:$0xf]
        %v1735 = vunpack.c.l.b16 %v1703
        %v1736 = vunpack.c.l.b16 %v1704
        %v1737 = vunpack.c.l.b16 %v1705
        %v1738 = vunpack.c.l.b16 %v1706
        %v1739 = vunpack.c.l.b16 %v1707
        %v1740 = vunpack.c.l.b16 %v1708
        %v1741 = vunpack.c.l.b16 %v1709
        %v1742 = vunpack.c.l.b16 %v1710
        %v1743 = vunpack.c.l.b16 %v1711
        %v1744 = vunpack.c.l.b16 %v1712
        %v1745 = vunpack.c.l.b16 %v1713
        %v1746 = vunpack.c.l.b16 %v1714
        %v1747 = vunpack.c.l.b16 %v1715
        %v1748 = vunpack.c.l.b16 %v1716
        %v1749 = vunpack.c.l.b16 %v1717
        %v1750 = vunpack.c.l.b16 %v1718
        %v1751 = vpack.c.b16 %v1736, %v1735
        %v1752 = vpack.c.b16 %v1738, %v1737
        %v1753 = vpack.c.b16 %v1740, %v1739
        %v1754 = vpack.c.b16 %v1742, %v1741
        %v1755 = vpack.c.b16 %v1744, %v1743
        %v1756 = vpack.c.b16 %v1746, %v1745
        %v1757 = vpack.c.b16 %v1748, %v1747
        %v1758 = vpack.c.b16 %v1750, %v1749
        %1767 = vmatprep.subr.bf16.mxu0 0
        %1768 = vmatpush1.bf16.msra.mxu0 %v1758
        %1769 = vmatprep.subr.bf16.mxu0 0
        %1770 = vmatpush1.bf16.msra.mxu0 %v1757
        %1771 = vmatprep.subr.bf16.mxu0 0
        %1772 = vmatpush1.bf16.msra.mxu0 %v1756
        %1773 = vmatprep.subr.bf16.mxu0 0
        %1774 = vmatpush1.bf16.msra.mxu0 %v1755
        %1775 = vmatprep.subr.bf16.mxu0 0
        %1776 = vmatpush1.bf16.msra.mxu0 %v1754
        %1777 = vmatprep.subr.bf16.mxu0 0
        %1778 = vmatpush1.bf16.msra.mxu0 %v1753
        %1779 = vmatprep.subr.bf16.mxu0 0
        %1780 = vmatpush1.bf16.msra.mxu0 %v1752
        %1781 = vmatprep.subr.bf16.mxu0 0
        %1782 = vmatpush1.bf16.msra.mxu0 %v1751
        %1783 = vmatprep.subr.bf16.mxu0 0
        %1784 = vmatpush2.bf16.msra.mxu0 0
        %1785 = vmatprep.subr.bf16.mxu0 0
        %1786 = vmatpush2.bf16.msra.mxu0 0
        %1787 = vmatprep.subr.bf16.mxu0 0
        %1788 = vmatpush2.bf16.msra.mxu0 0
        %1789 = vmatprep.subr.bf16.mxu0 0
        %1790 = vmatpush2.bf16.msra.mxu0 0
        %1791 = vmatprep.subr.bf16.mxu0 0
        %1792 = vmatpush2.bf16.msra.mxu0 0
        %1793 = vmatprep.subr.bf16.mxu0 0
        %1794 = vmatpush2.bf16.msra.mxu0 0
        %1795 = vmatprep.subr.bf16.mxu0 0
        %1796 = vmatpush2.bf16.msra.mxu0 0
        %1797 = vmatprep.subr.bf16.mxu0 0
        %1798 = vmatpush2.bf16.msra.mxu0 0
        %1799 = vmatprep.mubr.bf16.mxu0 0
        %1800 = vmatmul.mubr.bf16.gmra.mxu0 %v1621
        %v1801 = vpop.f32.mrf.mxu0
        %v1802 = vadd.f32 0.0, %v1801
        %v1803 = vpop.f32.mrf.mxu0
        %v1804 = vpop.f32.mrf.mxu0
        %v1805 = vadd.f32 0.0, %v1804
        %v1806 = vpop.f32.mrf.mxu0
        %1807 = vmatprep.mubr.bf16.mxu0 0
        %1808 = vmatmul.mubr.bf16.gmra.mxu0 %v1622
        %v1809 = vpop.f32.mrf.mxu0
        %v1810 = vadd.f32 0.0, %v1809
        %v1811 = vpop.f32.mrf.mxu0
        %v1812 = vpop.f32.mrf.mxu0
        %v1813 = vadd.f32 0.0, %v1812
        %v1814 = vpop.f32.mrf.mxu0
        %1815 = vmatprep.mubr.bf16.mxu0 0
        %1816 = vmatmul.mubr.bf16.gmra.mxu0 %v1623
        %v1817 = vpop.f32.mrf.mxu0
        %v1818 = vadd.f32 0.0, %v1817
        %v1819 = vpop.f32.mrf.mxu0
        %v1820 = vpop.f32.mrf.mxu0
        %v1821 = vadd.f32 0.0, %v1820
        %v1822 = vpop.f32.mrf.mxu0
        %1823 = vmatprep.mubr.bf16.mxu0 0
        %1824 = vmatmul.mubr.bf16.gmra.mxu0 %v1624
        %v1825 = vpop.f32.mrf.mxu0
        %v1826 = vadd.f32 0.0, %v1825
        %v1827 = vpop.f32.mrf.mxu0
        %v1828 = vpop.f32.mrf.mxu0
        %v1829 = vadd.f32 0.0, %v1828
        %v1830 = vpop.f32.mrf.mxu0
        %1831 = vmatprep.mubr.bf16.mxu0 0
        %1832 = vmatmul.mubr.bf16.gmra.mxu0 %v1625
        %v1833 = vpop.f32.mrf.mxu0
        %v1834 = vadd.f32 0.0, %v1833
        %v1835 = vpop.f32.mrf.mxu0
        %v1836 = vpop.f32.mrf.mxu0
        %v1837 = vadd.f32 0.0, %v1836
        %v1838 = vpop.f32.mrf.mxu0
        %1839 = vmatprep.mubr.bf16.mxu0 0
        %1840 = vmatmul.mubr.bf16.gmra.mxu0 %v1626
        %v1841 = vpop.f32.mrf.mxu0
        %v1842 = vadd.f32 0.0, %v1841
        %v1843 = vpop.f32.mrf.mxu0
        %v1844 = vpop.f32.mrf.mxu0
        %v1845 = vadd.f32 0.0, %v1844
        %v1846 = vpop.f32.mrf.mxu0
        %1847 = vmatprep.mubr.bf16.mxu0 0
        %1848 = vmatmul.mubr.bf16.gmra.mxu0 %v1627
        %v1849 = vpop.f32.mrf.mxu0
        %v1850 = vadd.f32 0.0, %v1849
        %v1851 = vpop.f32.mrf.mxu0
        %v1852 = vpop.f32.mrf.mxu0
        %v1853 = vadd.f32 0.0, %v1852
        %v1854 = vpop.f32.mrf.mxu0
        %1855 = vmatprep.mubr.bf16.mxu0 0
        %1856 = vmatmul.mubr.bf16.gmra.mxu0 %v1628
        %v1857 = vpop.f32.mrf.mxu0
        %v1858 = vadd.f32 0.0, %v1857
        %v1859 = vpop.f32.mrf.mxu0
        %v1860 = vpop.f32.mrf.mxu0
        %v1861 = vadd.f32 0.0, %v1860
        %v1862 = vpop.f32.mrf.mxu0
        %1863 = vmatprep.mubr.bf16.mxu0 0
        %1864 = vmatmul.mubr.bf16.gmra.mxu0 %v1629
        %v1865 = vpop.f32.mrf.mxu0
        %v1866 = vadd.f32 0.0, %v1865
        %v1867 = vpop.f32.mrf.mxu0
        %v1868 = vpop.f32.mrf.mxu0
        %v1869 = vadd.f32 0.0, %v1868
        %v1870 = vpop.f32.mrf.mxu0
        %1871 = vmatprep.mubr.bf16.mxu0 0
        %1872 = vmatmul.mubr.bf16.gmra.mxu0 %v1630
        %v1873 = vpop.f32.mrf.mxu0
        %v1874 = vadd.f32 0.0, %v1873
        %v1875 = vpop.f32.mrf.mxu0
        %v1876 = vpop.f32.mrf.mxu0
        %v1877 = vadd.f32 0.0, %v1876
        %v1878 = vpop.f32.mrf.mxu0
        %1879 = vmatprep.mubr.bf16.mxu0 0
        %1880 = vmatmul.mubr.bf16.gmra.mxu0 %v1631
        %v1881 = vpop.f32.mrf.mxu0
        %v1882 = vadd.f32 0.0, %v1881
        %v1883 = vpop.f32.mrf.mxu0
        %v1884 = vpop.f32.mrf.mxu0
        %v1885 = vadd.f32 0.0, %v1884
        %v1886 = vpop.f32.mrf.mxu0
        %1887 = vmatprep.mubr.bf16.mxu0 0
        %1888 = vmatmul.mubr.bf16.gmra.mxu0 %v1632
        %v1889 = vpop.f32.mrf.mxu0
        %v1890 = vadd.f32 0.0, %v1889
        %v1891 = vpop.f32.mrf.mxu0
        %v1892 = vpop.f32.mrf.mxu0
        %v1893 = vadd.f32 0.0, %v1892
        %v1894 = vpop.f32.mrf.mxu0
        %1895 = vmatprep.mubr.bf16.mxu0 0
        %1896 = vmatmul.mubr.bf16.gmra.mxu0 %v1633
        %v1897 = vpop.f32.mrf.mxu0
        %v1898 = vadd.f32 0.0, %v1897
        %v1899 = vpop.f32.mrf.mxu0
        %v1900 = vpop.f32.mrf.mxu0
        %v1901 = vadd.f32 0.0, %v1900
        %v1902 = vpop.f32.mrf.mxu0
        %1903 = vmatprep.mubr.bf16.mxu0 0
        %1904 = vmatmul.mubr.bf16.gmra.mxu0 %v1634
        %v1905 = vpop.f32.mrf.mxu0
        %v1906 = vadd.f32 0.0, %v1905
        %v1907 = vpop.f32.mrf.mxu0
        %v1908 = vpop.f32.mrf.mxu0
        %v1909 = vadd.f32 0.0, %v1908
        %v1910 = vpop.f32.mrf.mxu0
        %1911 = vmatprep.mubr.bf16.mxu0 0
        %1912 = vmatmul.mubr.bf16.gmra.mxu0 %v1635
        %v1913 = vpop.f32.mrf.mxu0
        %v1914 = vadd.f32 0.0, %v1913
        %v1915 = vpop.f32.mrf.mxu0
        %v1916 = vpop.f32.mrf.mxu0
        %v1917 = vadd.f32 0.0, %v1916
        %v1918 = vpop.f32.mrf.mxu0
        %1919 = vmatprep.mubr.bf16.mxu0 0
        %1920 = vmatmul.mubr.bf16.gmra.mxu0 %v1636
        %v1921 = vpop.f32.mrf.mxu0
        %v1922 = vadd.f32 0.0, %v1921
        %v1923 = vpop.f32.mrf.mxu0
        %v1924 = vpop.f32.mrf.mxu0
        %v1925 = vadd.f32 0.0, %v1924
        %v1926 = vpop.f32.mrf.mxu0
        %1927 = vdwg.mxu0
        %s1928 = scalar_lea.vmem %s1, 320
        %v1929 = vld [vmem:[%s1928] sm:$0xf]
        %v1930 = vld [vmem:[%s1928 + $0x4] sm:$0xf]
        %v1931 = vld [vmem:[%s1928 + $0x8] sm:$0xf]
        %v1932 = vld [vmem:[%s1928 + $0xc] sm:$0xf]
        %v1933 = vld [vmem:[%s1928 + $0x10] sm:$0xf]
        %v1934 = vld [vmem:[%s1928 + $0x14] sm:$0xf]
        %v1935 = vld [vmem:[%s1928 + $0x18] sm:$0xf]
        %v1936 = vld [vmem:[%s1928 + $0x1c] sm:$0xf]
        %v1937 = vld [vmem:[%s1928 + $0x20] sm:$0xf]
        %v1938 = vld [vmem:[%s1928 + $0x24] sm:$0xf]
        %v1939 = vld [vmem:[%s1928 + $0x28] sm:$0xf]
        %v1940 = vld [vmem:[%s1928 + $0x2c] sm:$0xf]
        %v1941 = vld [vmem:[%s1928 + $0x30] sm:$0xf]
        %v1942 = vld [vmem:[%s1928 + $0x34] sm:$0xf]
        %v1943 = vld [vmem:[%s1928 + $0x38] sm:$0xf]
        %v1944 = vld [vmem:[%s1928 + $0x3c] sm:$0xf]
        %v1961 = vunpack.c.l.b16 %v1929
        %v1962 = vunpack.c.l.b16 %v1930
        %v1963 = vunpack.c.l.b16 %v1931
        %v1964 = vunpack.c.l.b16 %v1932
        %v1965 = vunpack.c.l.b16 %v1933
        %v1966 = vunpack.c.l.b16 %v1934
        %v1967 = vunpack.c.l.b16 %v1935
        %v1968 = vunpack.c.l.b16 %v1936
        %v1969 = vunpack.c.l.b16 %v1937
        %v1970 = vunpack.c.l.b16 %v1938
        %v1971 = vunpack.c.l.b16 %v1939
        %v1972 = vunpack.c.l.b16 %v1940
        %v1973 = vunpack.c.l.b16 %v1941
        %v1974 = vunpack.c.l.b16 %v1942
        %v1975 = vunpack.c.l.b16 %v1943
        %v1976 = vunpack.c.l.b16 %v1944
        %v1977 = vpack.c.b16 %v1962, %v1961
        %v1978 = vpack.c.b16 %v1964, %v1963
        %v1979 = vpack.c.b16 %v1966, %v1965
        %v1980 = vpack.c.b16 %v1968, %v1967
        %v1981 = vpack.c.b16 %v1970, %v1969
        %v1982 = vpack.c.b16 %v1972, %v1971
        %v1983 = vpack.c.b16 %v1974, %v1973
        %v1984 = vpack.c.b16 %v1976, %v1975
        %1993 = vmatprep.subr.bf16.mxu0 0
        %1994 = vmatpush1.bf16.msra.mxu0 %v1984
        %1995 = vmatprep.subr.bf16.mxu0 0
        %1996 = vmatpush1.bf16.msra.mxu0 %v1983
        %1997 = vmatprep.subr.bf16.mxu0 0
        %1998 = vmatpush1.bf16.msra.mxu0 %v1982
        %1999 = vmatprep.subr.bf16.mxu0 0
        %2000 = vmatpush1.bf16.msra.mxu0 %v1981
        %2001 = vmatprep.subr.bf16.mxu0 0
        %2002 = vmatpush1.bf16.msra.mxu0 %v1980
        %2003 = vmatprep.subr.bf16.mxu0 0
        %2004 = vmatpush1.bf16.msra.mxu0 %v1979
        %2005 = vmatprep.subr.bf16.mxu0 0
        %2006 = vmatpush1.bf16.msra.mxu0 %v1978
        %2007 = vmatprep.subr.bf16.mxu0 0
        %2008 = vmatpush1.bf16.msra.mxu0 %v1977
        %2009 = vmatprep.subr.bf16.mxu0 0
        %2010 = vmatpush2.bf16.msra.mxu0 0
        %2011 = vmatprep.subr.bf16.mxu0 0
        %2012 = vmatpush2.bf16.msra.mxu0 0
        %2013 = vmatprep.subr.bf16.mxu0 0
        %2014 = vmatpush2.bf16.msra.mxu0 0
        %2015 = vmatprep.subr.bf16.mxu0 0
        %2016 = vmatpush2.bf16.msra.mxu0 0
        %2017 = vmatprep.subr.bf16.mxu0 0
        %2018 = vmatpush2.bf16.msra.mxu0 0
        %2019 = vmatprep.subr.bf16.mxu0 0
        %2020 = vmatpush2.bf16.msra.mxu0 0
        %2021 = vmatprep.subr.bf16.mxu0 0
        %2022 = vmatpush2.bf16.msra.mxu0 0
        %2023 = vmatprep.subr.bf16.mxu0 0
        %2024 = vmatpush2.bf16.msra.mxu0 0
        %2025 = vmatprep.mubr.bf16.mxu0 0
        %2026 = vmatmul.mubr.bf16.gmra.mxu0 %v1669
        %v2027 = vpop.f32.mrf.mxu0
        %v2028 = vadd.f32 0.0, %v2027
        %v2029 = vpop.f32.mrf.mxu0
        %v2030 = vpop.f32.mrf.mxu0
        %v2031 = vadd.f32 0.0, %v2030
        %v2032 = vpop.f32.mrf.mxu0
        %2033 = vmatprep.mubr.bf16.mxu0 0
        %2034 = vmatmul.mubr.bf16.gmra.mxu0 %v1670
        %v2035 = vpop.f32.mrf.mxu0
        %v2036 = vadd.f32 0.0, %v2035
        %v2037 = vpop.f32.mrf.mxu0
        %v2038 = vpop.f32.mrf.mxu0
        %v2039 = vadd.f32 0.0, %v2038
        %v2040 = vpop.f32.mrf.mxu0
        %2041 = vmatprep.mubr.bf16.mxu0 0
        %2042 = vmatmul.mubr.bf16.gmra.mxu0 %v1671
        %v2043 = vpop.f32.mrf.mxu0
        %v2044 = vadd.f32 0.0, %v2043
        %v2045 = vpop.f32.mrf.mxu0
        %v2046 = vpop.f32.mrf.mxu0
        %v2047 = vadd.f32 0.0, %v2046
        %v2048 = vpop.f32.mrf.mxu0
        %2049 = vmatprep.mubr.bf16.mxu0 0
        %2050 = vmatmul.mubr.bf16.gmra.mxu0 %v1672
        %v2051 = vpop.f32.mrf.mxu0
        %v2052 = vadd.f32 0.0, %v2051
        %v2053 = vpop.f32.mrf.mxu0
        %v2054 = vpop.f32.mrf.mxu0
        %v2055 = vadd.f32 0.0, %v2054
        %v2056 = vpop.f32.mrf.mxu0
        %2057 = vmatprep.mubr.bf16.mxu0 0
        %2058 = vmatmul.mubr.bf16.gmra.mxu0 %v1673
        %v2059 = vpop.f32.mrf.mxu0
        %v2060 = vadd.f32 0.0, %v2059
        %v2061 = vpop.f32.mrf.mxu0
        %v2062 = vpop.f32.mrf.mxu0
        %v2063 = vadd.f32 0.0, %v2062
        %v2064 = vpop.f32.mrf.mxu0
        %2065 = vmatprep.mubr.bf16.mxu0 0
        %2066 = vmatmul.mubr.bf16.gmra.mxu0 %v1674
        %v2067 = vpop.f32.mrf.mxu0
        %v2068 = vadd.f32 0.0, %v2067
        %v2069 = vpop.f32.mrf.mxu0
        %v2070 = vpop.f32.mrf.mxu0
        %v2071 = vadd.f32 0.0, %v2070
        %v2072 = vpop.f32.mrf.mxu0
        %2073 = vmatprep.mubr.bf16.mxu0 0
        %2074 = vmatmul.mubr.bf16.gmra.mxu0 %v1675
        %v2075 = vpop.f32.mrf.mxu0
        %v2076 = vadd.f32 0.0, %v2075
        %v2077 = vpop.f32.mrf.mxu0
        %v2078 = vpop.f32.mrf.mxu0
        %v2079 = vadd.f32 0.0, %v2078
        %v2080 = vpop.f32.mrf.mxu0
        %2081 = vmatprep.mubr.bf16.mxu0 0
        %2082 = vmatmul.mubr.bf16.gmra.mxu0 %v1676
        %v2083 = vpop.f32.mrf.mxu0
        %v2084 = vadd.f32 0.0, %v2083
        %v2085 = vpop.f32.mrf.mxu0
        %v2086 = vpop.f32.mrf.mxu0
        %v2087 = vadd.f32 0.0, %v2086
        %v2088 = vpop.f32.mrf.mxu0
        %2089 = vmatprep.mubr.bf16.mxu0 0
        %2090 = vmatmul.mubr.bf16.gmra.mxu0 %v1677
        %v2091 = vpop.f32.mrf.mxu0
        %v2092 = vadd.f32 0.0, %v2091
        %v2093 = vpop.f32.mrf.mxu0
        %v2094 = vpop.f32.mrf.mxu0
        %v2095 = vadd.f32 0.0, %v2094
        %v2096 = vpop.f32.mrf.mxu0
        %2097 = vmatprep.mubr.bf16.mxu0 0
        %2098 = vmatmul.mubr.bf16.gmra.mxu0 %v1678
        %v2099 = vpop.f32.mrf.mxu0
        %v2100 = vadd.f32 0.0, %v2099
        %v2101 = vpop.f32.mrf.mxu0
        %v2102 = vpop.f32.mrf.mxu0
        %v2103 = vadd.f32 0.0, %v2102
        %v2104 = vpop.f32.mrf.mxu0
        %2105 = vmatprep.mubr.bf16.mxu0 0
        %2106 = vmatmul.mubr.bf16.gmra.mxu0 %v1679
        %v2107 = vpop.f32.mrf.mxu0
        %v2108 = vadd.f32 0.0, %v2107
        %v2109 = vpop.f32.mrf.mxu0
        %v2110 = vpop.f32.mrf.mxu0
        %v2111 = vadd.f32 0.0, %v2110
        %v2112 = vpop.f32.mrf.mxu0
        %2113 = vmatprep.mubr.bf16.mxu0 0
        %2114 = vmatmul.mubr.bf16.gmra.mxu0 %v1680
        %v2115 = vpop.f32.mrf.mxu0
        %v2116 = vadd.f32 0.0, %v2115
        %v2117 = vpop.f32.mrf.mxu0
        %v2118 = vpop.f32.mrf.mxu0
        %v2119 = vadd.f32 0.0, %v2118
        %v2120 = vpop.f32.mrf.mxu0
        %2121 = vmatprep.mubr.bf16.mxu0 0
        %2122 = vmatmul.mubr.bf16.gmra.mxu0 %v1681
        %v2123 = vpop.f32.mrf.mxu0
        %v2124 = vadd.f32 0.0, %v2123
        %v2125 = vpop.f32.mrf.mxu0
        %v2126 = vpop.f32.mrf.mxu0
        %v2127 = vadd.f32 0.0, %v2126
        %v2128 = vpop.f32.mrf.mxu0
        %2129 = vmatprep.mubr.bf16.mxu0 0
        %2130 = vmatmul.mubr.bf16.gmra.mxu0 %v1682
        %v2131 = vpop.f32.mrf.mxu0
        %v2132 = vadd.f32 0.0, %v2131
        %v2133 = vpop.f32.mrf.mxu0
        %v2134 = vpop.f32.mrf.mxu0
        %v2135 = vadd.f32 0.0, %v2134
        %v2136 = vpop.f32.mrf.mxu0
        %2137 = vmatprep.mubr.bf16.mxu0 0
        %2138 = vmatmul.mubr.bf16.gmra.mxu0 %v1683
        %v2139 = vpop.f32.mrf.mxu0
        %v2140 = vadd.f32 0.0, %v2139
        %v2141 = vpop.f32.mrf.mxu0
        %v2142 = vpop.f32.mrf.mxu0
        %v2143 = vadd.f32 0.0, %v2142
        %v2144 = vpop.f32.mrf.mxu0
        %2145 = vmatprep.mubr.bf16.mxu0 0
        %2146 = vmatmul.mubr.bf16.gmra.mxu0 %v1684
        %v2147 = vpop.f32.mrf.mxu0
        %v2148 = vadd.f32 0.0, %v2147
        %v2149 = vpop.f32.mrf.mxu0
        %v2150 = vpop.f32.mrf.mxu0
        %v2151 = vadd.f32 0.0, %v2150
        %v2152 = vpop.f32.mrf.mxu0
        %2153 = vdwg.mxu0
        %vm2154 = vcmp.ge.s32.totalorder %v627, 1
        %vm2155 = vcmp.ge.s32.totalorder %v628, 1
        %vm2156 = vcmp.ge.s32.totalorder %v629, 1
        %vm2157 = vcmp.ge.s32.totalorder %v630, 1
        %vm2158 = vcmp.ge.s32.totalorder %v631, 1
        %vm2159 = vcmp.ge.s32.totalorder %v632, 1
        %vm2160 = vcmp.ge.s32.totalorder %v633, 1
        %vm2161 = vcmp.ge.s32.totalorder %v634, 1
        %vm2162 = vcmp.ge.s32.totalorder %v635, 1
        %vm2163 = vcmp.ge.s32.totalorder %v636, 1
        %vm2164 = vcmp.ge.s32.totalorder %v637, 1
        %vm2165 = vcmp.ge.s32.totalorder %v638, 1
        %vm2166 = vcmp.ge.s32.totalorder %v639, 1
        %vm2167 = vcmp.ge.s32.totalorder %v640, 1
        %vm2168 = vcmp.ge.s32.totalorder %v641, 1
        %vm2169 = vcmp.ge.s32.totalorder %v642, 1
        %vm2170 = vcmp.ge.s32.totalorder %v643, 1
        %vm2171 = vcmp.ge.s32.totalorder %v644, 1
        %vm2172 = vcmp.ge.s32.totalorder %v645, 1
        %vm2173 = vcmp.ge.s32.totalorder %v646, 1
        %vm2174 = vcmp.ge.s32.totalorder %v647, 1
        %vm2175 = vcmp.ge.s32.totalorder %v648, 1
        %vm2176 = vcmp.ge.s32.totalorder %v649, 1
        %vm2177 = vcmp.ge.s32.totalorder %v650, 1
        %vm2178 = vcmp.ge.s32.totalorder %v651, 1
        %vm2179 = vcmp.ge.s32.totalorder %v652, 1
        %vm2180 = vcmp.ge.s32.totalorder %v653, 1
        %vm2181 = vcmp.ge.s32.totalorder %v654, 1
        %vm2182 = vcmp.ge.s32.totalorder %v655, 1
        %vm2183 = vcmp.ge.s32.totalorder %v656, 1
        %vm2184 = vcmp.ge.s32.totalorder %v657, 1
        %vm2185 = vcmp.ge.s32.totalorder %v658, 1
        %v2186 = vsel %vm2154, 1, 0
        %v2187 = vsel %vm2155, 1, 0
        %v2188 = vsel %vm2156, 1, 0
        %v2189 = vsel %vm2157, 1, 0
        %v2190 = vsel %vm2158, 1, 0
        %v2191 = vsel %vm2159, 1, 0
        %v2192 = vsel %vm2160, 1, 0
        %v2193 = vsel %vm2161, 1, 0
        %v2194 = vsel %vm2162, 1, 0
        %v2195 = vsel %vm2163, 1, 0
        %v2196 = vsel %vm2164, 1, 0
        %v2197 = vsel %vm2165, 1, 0
        %v2198 = vsel %vm2166, 1, 0
        %v2199 = vsel %vm2167, 1, 0
        %v2200 = vsel %vm2168, 1, 0
        %v2201 = vsel %vm2169, 1, 0
        %v2202 = vsel %vm2170, 1, 0
        %v2203 = vsel %vm2171, 1, 0
        %v2204 = vsel %vm2172, 1, 0
        %v2205 = vsel %vm2173, 1, 0
        %v2206 = vsel %vm2174, 1, 0
        %v2207 = vsel %vm2175, 1, 0
        %v2208 = vsel %vm2176, 1, 0
        %v2209 = vsel %vm2177, 1, 0
        %v2210 = vsel %vm2178, 1, 0
        %v2211 = vsel %vm2179, 1, 0
        %v2212 = vsel %vm2180, 1, 0
        %v2213 = vsel %vm2181, 1, 0
        %v2214 = vsel %vm2182, 1, 0
        %v2215 = vsel %vm2183, 1, 0
        %v2216 = vsel %vm2184, 1, 0
        %v2217 = vsel %vm2185, 1, 0
        %vm2218 = vcmp.eq.s32.totalorder %v2186, 1
        %vm2219 = vcmp.eq.s32.totalorder %v2187, 1
        %vm2220 = vcmp.eq.s32.totalorder %v2188, 1
        %vm2221 = vcmp.eq.s32.totalorder %v2189, 1
        %vm2222 = vcmp.eq.s32.totalorder %v2190, 1
        %vm2223 = vcmp.eq.s32.totalorder %v2191, 1
        %vm2224 = vcmp.eq.s32.totalorder %v2192, 1
        %vm2225 = vcmp.eq.s32.totalorder %v2193, 1
        %vm2226 = vcmp.eq.s32.totalorder %v2194, 1
        %vm2227 = vcmp.eq.s32.totalorder %v2195, 1
        %vm2228 = vcmp.eq.s32.totalorder %v2196, 1
        %vm2229 = vcmp.eq.s32.totalorder %v2197, 1
        %vm2230 = vcmp.eq.s32.totalorder %v2198, 1
        %vm2231 = vcmp.eq.s32.totalorder %v2199, 1
        %vm2232 = vcmp.eq.s32.totalorder %v2200, 1
        %vm2233 = vcmp.eq.s32.totalorder %v2201, 1
        %vm2234 = vcmp.eq.s32.totalorder %v2202, 1
        %vm2235 = vcmp.eq.s32.totalorder %v2203, 1
        %vm2236 = vcmp.eq.s32.totalorder %v2204, 1
        %vm2237 = vcmp.eq.s32.totalorder %v2205, 1
        %vm2238 = vcmp.eq.s32.totalorder %v2206, 1
        %vm2239 = vcmp.eq.s32.totalorder %v2207, 1
        %vm2240 = vcmp.eq.s32.totalorder %v2208, 1
        %vm2241 = vcmp.eq.s32.totalorder %v2209, 1
        %vm2242 = vcmp.eq.s32.totalorder %v2210, 1
        %vm2243 = vcmp.eq.s32.totalorder %v2211, 1
        %vm2244 = vcmp.eq.s32.totalorder %v2212, 1
        %vm2245 = vcmp.eq.s32.totalorder %v2213, 1
        %vm2246 = vcmp.eq.s32.totalorder %v2214, 1
        %vm2247 = vcmp.eq.s32.totalorder %v2215, 1
        %vm2248 = vcmp.eq.s32.totalorder %v2216, 1
        %vm2249 = vcmp.eq.s32.totalorder %v2217, 1
        %v2250 = vsel %vm2218, %v1802, 0.0
        %v2251 = vsel %vm2219, %v1805, 0.0
        %v2252 = vsel %vm2220, %v1810, 0.0
        %v2253 = vsel %vm2221, %v1813, 0.0
        %v2254 = vsel %vm2222, %v1818, 0.0
        %v2255 = vsel %vm2223, %v1821, 0.0
        %v2256 = vsel %vm2224, %v1826, 0.0
        %v2257 = vsel %vm2225, %v1829, 0.0
        %v2258 = vsel %vm2226, %v1834, 0.0
        %v2259 = vsel %vm2227, %v1837, 0.0
        %v2260 = vsel %vm2228, %v1842, 0.0
        %v2261 = vsel %vm2229, %v1845, 0.0
        %v2262 = vsel %vm2230, %v1850, 0.0
        %v2263 = vsel %vm2231, %v1853, 0.0
        %v2264 = vsel %vm2232, %v1858, 0.0
        %v2265 = vsel %vm2233, %v1861, 0.0
        %v2266 = vsel %vm2234, %v1866, 0.0
        %v2267 = vsel %vm2235, %v1869, 0.0
        %v2268 = vsel %vm2236, %v1874, 0.0
        %v2269 = vsel %vm2237, %v1877, 0.0
        %v2270 = vsel %vm2238, %v1882, 0.0
        %v2271 = vsel %vm2239, %v1885, 0.0
        %v2272 = vsel %vm2240, %v1890, 0.0
        %v2273 = vsel %vm2241, %v1893, 0.0
        %v2274 = vsel %vm2242, %v1898, 0.0
        %v2275 = vsel %vm2243, %v1901, 0.0
        %v2276 = vsel %vm2244, %v1906, 0.0
        %v2277 = vsel %vm2245, %v1909, 0.0
        %v2278 = vsel %vm2246, %v1914, 0.0
        %v2279 = vsel %vm2247, %v1917, 0.0
        %v2280 = vsel %vm2248, %v1922, 0.0
        %v2281 = vsel %vm2249, %v1925, 0.0
        %vm2282 = vcmp.lt.s32.totalorder %v627, 15
        %vm2283 = vcmp.lt.s32.totalorder %v628, 15
        %vm2284 = vcmp.lt.s32.totalorder %v629, 15
        %vm2285 = vcmp.lt.s32.totalorder %v630, 15
        %vm2286 = vcmp.lt.s32.totalorder %v631, 15
        %vm2287 = vcmp.lt.s32.totalorder %v632, 15
        %vm2288 = vcmp.lt.s32.totalorder %v633, 15
        %vm2289 = vcmp.lt.s32.totalorder %v634, 15
        %vm2290 = vcmp.lt.s32.totalorder %v635, 15
        %vm2291 = vcmp.lt.s32.totalorder %v636, 15
        %vm2292 = vcmp.lt.s32.totalorder %v637, 15
        %vm2293 = vcmp.lt.s32.totalorder %v638, 15
        %vm2294 = vcmp.lt.s32.totalorder %v639, 15
        %vm2295 = vcmp.lt.s32.totalorder %v640, 15
        %vm2296 = vcmp.lt.s32.totalorder %v641, 15
        %vm2297 = vcmp.lt.s32.totalorder %v642, 15
        %vm2298 = vcmp.lt.s32.totalorder %v643, 15
        %vm2299 = vcmp.lt.s32.totalorder %v644, 15
        %vm2300 = vcmp.lt.s32.totalorder %v645, 15
        %vm2301 = vcmp.lt.s32.totalorder %v646, 15
        %vm2302 = vcmp.lt.s32.totalorder %v647, 15
        %vm2303 = vcmp.lt.s32.totalorder %v648, 15
        %vm2304 = vcmp.lt.s32.totalorder %v649, 15
        %vm2305 = vcmp.lt.s32.totalorder %v650, 15
        %vm2306 = vcmp.lt.s32.totalorder %v651, 15
        %vm2307 = vcmp.lt.s32.totalorder %v652, 15
        %vm2308 = vcmp.lt.s32.totalorder %v653, 15
        %vm2309 = vcmp.lt.s32.totalorder %v654, 15
        %vm2310 = vcmp.lt.s32.totalorder %v655, 15
        %vm2311 = vcmp.lt.s32.totalorder %v656, 15
        %vm2312 = vcmp.lt.s32.totalorder %v657, 15
        %vm2313 = vcmp.lt.s32.totalorder %v658, 15
        %v2314 = vsel %vm2282, 1, 0
        %v2315 = vsel %vm2283, 1, 0
        %v2316 = vsel %vm2284, 1, 0
        %v2317 = vsel %vm2285, 1, 0
        %v2318 = vsel %vm2286, 1, 0
        %v2319 = vsel %vm2287, 1, 0
        %v2320 = vsel %vm2288, 1, 0
        %v2321 = vsel %vm2289, 1, 0
        %v2322 = vsel %vm2290, 1, 0
        %v2323 = vsel %vm2291, 1, 0
        %v2324 = vsel %vm2292, 1, 0
        %v2325 = vsel %vm2293, 1, 0
        %v2326 = vsel %vm2294, 1, 0
        %v2327 = vsel %vm2295, 1, 0
        %v2328 = vsel %vm2296, 1, 0
        %v2329 = vsel %vm2297, 1, 0
        %v2330 = vsel %vm2298, 1, 0
        %v2331 = vsel %vm2299, 1, 0
        %v2332 = vsel %vm2300, 1, 0
        %v2333 = vsel %vm2301, 1, 0
        %v2334 = vsel %vm2302, 1, 0
        %v2335 = vsel %vm2303, 1, 0
        %v2336 = vsel %vm2304, 1, 0
        %v2337 = vsel %vm2305, 1, 0
        %v2338 = vsel %vm2306, 1, 0
        %v2339 = vsel %vm2307, 1, 0
        %v2340 = vsel %vm2308, 1, 0
        %v2341 = vsel %vm2309, 1, 0
        %v2342 = vsel %vm2310, 1, 0
        %v2343 = vsel %vm2311, 1, 0
        %v2344 = vsel %vm2312, 1, 0
        %v2345 = vsel %vm2313, 1, 0
        %vm2346 = vcmp.eq.s32.totalorder %v2314, 1
        %vm2347 = vcmp.eq.s32.totalorder %v2315, 1
        %vm2348 = vcmp.eq.s32.totalorder %v2316, 1
        %vm2349 = vcmp.eq.s32.totalorder %v2317, 1
        %vm2350 = vcmp.eq.s32.totalorder %v2318, 1
        %vm2351 = vcmp.eq.s32.totalorder %v2319, 1
        %vm2352 = vcmp.eq.s32.totalorder %v2320, 1
        %vm2353 = vcmp.eq.s32.totalorder %v2321, 1
        %vm2354 = vcmp.eq.s32.totalorder %v2322, 1
        %vm2355 = vcmp.eq.s32.totalorder %v2323, 1
        %vm2356 = vcmp.eq.s32.totalorder %v2324, 1
        %vm2357 = vcmp.eq.s32.totalorder %v2325, 1
        %vm2358 = vcmp.eq.s32.totalorder %v2326, 1
        %vm2359 = vcmp.eq.s32.totalorder %v2327, 1
        %vm2360 = vcmp.eq.s32.totalorder %v2328, 1
        %vm2361 = vcmp.eq.s32.totalorder %v2329, 1
        %vm2362 = vcmp.eq.s32.totalorder %v2330, 1
        %vm2363 = vcmp.eq.s32.totalorder %v2331, 1
        %vm2364 = vcmp.eq.s32.totalorder %v2332, 1
        %vm2365 = vcmp.eq.s32.totalorder %v2333, 1
        %vm2366 = vcmp.eq.s32.totalorder %v2334, 1
        %vm2367 = vcmp.eq.s32.totalorder %v2335, 1
        %vm2368 = vcmp.eq.s32.totalorder %v2336, 1
        %vm2369 = vcmp.eq.s32.totalorder %v2337, 1
        %vm2370 = vcmp.eq.s32.totalorder %v2338, 1
        %vm2371 = vcmp.eq.s32.totalorder %v2339, 1
        %vm2372 = vcmp.eq.s32.totalorder %v2340, 1
        %vm2373 = vcmp.eq.s32.totalorder %v2341, 1
        %vm2374 = vcmp.eq.s32.totalorder %v2342, 1
        %vm2375 = vcmp.eq.s32.totalorder %v2343, 1
        %vm2376 = vcmp.eq.s32.totalorder %v2344, 1
        %vm2377 = vcmp.eq.s32.totalorder %v2345, 1
        %v2378 = vsel %vm2346, %v2028, 0.0
        %v2379 = vsel %vm2347, %v2031, 0.0
        %v2380 = vsel %vm2348, %v2036, 0.0
        %v2381 = vsel %vm2349, %v2039, 0.0
        %v2382 = vsel %vm2350, %v2044, 0.0
        %v2383 = vsel %vm2351, %v2047, 0.0
        %v2384 = vsel %vm2352, %v2052, 0.0
        %v2385 = vsel %vm2353, %v2055, 0.0
        %v2386 = vsel %vm2354, %v2060, 0.0
        %v2387 = vsel %vm2355, %v2063, 0.0
        %v2388 = vsel %vm2356, %v2068, 0.0
        %v2389 = vsel %vm2357, %v2071, 0.0
        %v2390 = vsel %vm2358, %v2076, 0.0
        %v2391 = vsel %vm2359, %v2079, 0.0
        %v2392 = vsel %vm2360, %v2084, 0.0
        %v2393 = vsel %vm2361, %v2087, 0.0
        %v2394 = vsel %vm2362, %v2092, 0.0
        %v2395 = vsel %vm2363, %v2095, 0.0
        %v2396 = vsel %vm2364, %v2100, 0.0
        %v2397 = vsel %vm2365, %v2103, 0.0
        %v2398 = vsel %vm2366, %v2108, 0.0
        %v2399 = vsel %vm2367, %v2111, 0.0
        %v2400 = vsel %vm2368, %v2116, 0.0
        %v2401 = vsel %vm2369, %v2119, 0.0
        %v2402 = vsel %vm2370, %v2124, 0.0
        %v2403 = vsel %vm2371, %v2127, 0.0
        %v2404 = vsel %vm2372, %v2132, 0.0
        %v2405 = vsel %vm2373, %v2135, 0.0
        %v2406 = vsel %vm2374, %v2140, 0.0
        %v2407 = vsel %vm2375, %v2143, 0.0
        %v2408 = vsel %vm2376, %v2148, 0.0
        %v2409 = vsel %vm2377, %v2151, 0.0
        %v2426 = vunpack.c.l.b16 %v1686
        %v2427 = vunpack.c.l.b16 %v1687
        %v2428 = vunpack.c.l.b16 %v1688
        %v2429 = vunpack.c.l.b16 %v1689
        %v2430 = vunpack.c.l.b16 %v1690
        %v2431 = vunpack.c.l.b16 %v1691
        %v2432 = vunpack.c.l.b16 %v1692
        %v2433 = vunpack.c.l.b16 %v1693
        %v2434 = vunpack.c.l.b16 %v1694
        %v2435 = vunpack.c.l.b16 %v1695
        %v2436 = vunpack.c.l.b16 %v1696
        %v2437 = vunpack.c.l.b16 %v1697
        %v2438 = vunpack.c.l.b16 %v1698
        %v2439 = vunpack.c.l.b16 %v1699
        %v2440 = vunpack.c.l.b16 %v1700
        %v2441 = vunpack.c.l.b16 %v1701
        %v2442 = vpack.c.b16 %v2427, %v2426
        %v2443 = vpack.c.b16 %v2429, %v2428
        %v2444 = vpack.c.b16 %v2431, %v2430
        %v2445 = vpack.c.b16 %v2433, %v2432
        %v2446 = vpack.c.b16 %v2435, %v2434
        %v2447 = vpack.c.b16 %v2437, %v2436
        %v2448 = vpack.c.b16 %v2439, %v2438
        %v2449 = vpack.c.b16 %v2441, %v2440
        %2458 = vmatprep.subr.bf16.mxu0 0
        %2459 = vmatpush1.bf16.msra.mxu0 %v2449
        %2460 = vmatprep.subr.bf16.mxu0 0
        %2461 = vmatpush1.bf16.msra.mxu0 %v2448
        %2462 = vmatprep.subr.bf16.mxu0 0
        %2463 = vmatpush1.bf16.msra.mxu0 %v2447
        %2464 = vmatprep.subr.bf16.mxu0 0
        %2465 = vmatpush1.bf16.msra.mxu0 %v2446
        %2466 = vmatprep.subr.bf16.mxu0 0
        %2467 = vmatpush1.bf16.msra.mxu0 %v2445
        %2468 = vmatprep.subr.bf16.mxu0 0
        %2469 = vmatpush1.bf16.msra.mxu0 %v2444
        %2470 = vmatprep.subr.bf16.mxu0 0
        %2471 = vmatpush1.bf16.msra.mxu0 %v2443
        %2472 = vmatprep.subr.bf16.mxu0 0
        %2473 = vmatpush1.bf16.msra.mxu0 %v2442
        %2474 = vmatprep.subr.bf16.mxu0 0
        %2475 = vmatpush2.bf16.msra.mxu0 0
        %2476 = vmatprep.subr.bf16.mxu0 0
        %2477 = vmatpush2.bf16.msra.mxu0 0
        %2478 = vmatprep.subr.bf16.mxu0 0
        %2479 = vmatpush2.bf16.msra.mxu0 0
        %2480 = vmatprep.subr.bf16.mxu0 0
        %2481 = vmatpush2.bf16.msra.mxu0 0
        %2482 = vmatprep.subr.bf16.mxu0 0
        %2483 = vmatpush2.bf16.msra.mxu0 0
        %2484 = vmatprep.subr.bf16.mxu0 0
        %2485 = vmatpush2.bf16.msra.mxu0 0
        %2486 = vmatprep.subr.bf16.mxu0 0
        %2487 = vmatpush2.bf16.msra.mxu0 0
        %2488 = vmatprep.subr.bf16.mxu0 0
        %2489 = vmatpush2.bf16.msra.mxu0 0
        %2490 = vmatprep.mubr.bf16.mxu0 0
        %2491 = vmatmul.mubr.bf16.gmra.mxu0 %v1573
        %v2492 = vpop.f32.mrf.mxu0
        %v2493 = vadd.f32 %v2250, %v2492
        %v2494 = vpop.f32.mrf.mxu0
        %v2495 = vpop.f32.mrf.mxu0
        %v2496 = vadd.f32 %v2251, %v2495
        %v2497 = vpop.f32.mrf.mxu0
        %2498 = vmatprep.mubr.bf16.mxu0 0
        %2499 = vmatmul.mubr.bf16.gmra.mxu0 %v1574
        %v2500 = vpop.f32.mrf.mxu0
        %v2501 = vadd.f32 %v2252, %v2500
        %v2502 = vpop.f32.mrf.mxu0
        %v2503 = vpop.f32.mrf.mxu0
        %v2504 = vadd.f32 %v2253, %v2503
        %v2505 = vpop.f32.mrf.mxu0
        %2506 = vmatprep.mubr.bf16.mxu0 0
        %2507 = vmatmul.mubr.bf16.gmra.mxu0 %v1575
        %v2508 = vpop.f32.mrf.mxu0
        %v2509 = vadd.f32 %v2254, %v2508
        %v2510 = vpop.f32.mrf.mxu0
        %v2511 = vpop.f32.mrf.mxu0
        %v2512 = vadd.f32 %v2255, %v2511
        %v2513 = vpop.f32.mrf.mxu0
        %2514 = vmatprep.mubr.bf16.mxu0 0
        %2515 = vmatmul.mubr.bf16.gmra.mxu0 %v1576
        %v2516 = vpop.f32.mrf.mxu0
        %v2517 = vadd.f32 %v2256, %v2516
        %v2518 = vpop.f32.mrf.mxu0
        %v2519 = vpop.f32.mrf.mxu0
        %v2520 = vadd.f32 %v2257, %v2519
        %v2521 = vpop.f32.mrf.mxu0
        %2522 = vmatprep.mubr.bf16.mxu0 0
        %2523 = vmatmul.mubr.bf16.gmra.mxu0 %v1577
        %v2524 = vpop.f32.mrf.mxu0
        %v2525 = vadd.f32 %v2258, %v2524
        %v2526 = vpop.f32.mrf.mxu0
        %v2527 = vpop.f32.mrf.mxu0
        %v2528 = vadd.f32 %v2259, %v2527
        %v2529 = vpop.f32.mrf.mxu0
        %2530 = vmatprep.mubr.bf16.mxu0 0
        %2531 = vmatmul.mubr.bf16.gmra.mxu0 %v1578
        %v2532 = vpop.f32.mrf.mxu0
        %v2533 = vadd.f32 %v2260, %v2532
        %v2534 = vpop.f32.mrf.mxu0
        %v2535 = vpop.f32.mrf.mxu0
        %v2536 = vadd.f32 %v2261, %v2535
        %v2537 = vpop.f32.mrf.mxu0
        %2538 = vmatprep.mubr.bf16.mxu0 0
        %2539 = vmatmul.mubr.bf16.gmra.mxu0 %v1579
        %v2540 = vpop.f32.mrf.mxu0
        %v2541 = vadd.f32 %v2262, %v2540
        %v2542 = vpop.f32.mrf.mxu0
        %v2543 = vpop.f32.mrf.mxu0
        %v2544 = vadd.f32 %v2263, %v2543
        %v2545 = vpop.f32.mrf.mxu0
        %2546 = vmatprep.mubr.bf16.mxu0 0
        %2547 = vmatmul.mubr.bf16.gmra.mxu0 %v1580
        %v2548 = vpop.f32.mrf.mxu0
        %v2549 = vadd.f32 %v2264, %v2548
        %v2550 = vpop.f32.mrf.mxu0
        %v2551 = vpop.f32.mrf.mxu0
        %v2552 = vadd.f32 %v2265, %v2551
        %v2553 = vpop.f32.mrf.mxu0
        %2554 = vmatprep.mubr.bf16.mxu0 0
        %2555 = vmatmul.mubr.bf16.gmra.mxu0 %v1581
        %v2556 = vpop.f32.mrf.mxu0
        %v2557 = vadd.f32 %v2266, %v2556
        %v2558 = vpop.f32.mrf.mxu0
        %v2559 = vpop.f32.mrf.mxu0
        %v2560 = vadd.f32 %v2267, %v2559
        %v2561 = vpop.f32.mrf.mxu0
        %2562 = vmatprep.mubr.bf16.mxu0 0
        %2563 = vmatmul.mubr.bf16.gmra.mxu0 %v1582
        %v2564 = vpop.f32.mrf.mxu0
        %v2565 = vadd.f32 %v2268, %v2564
        %v2566 = vpop.f32.mrf.mxu0
        %v2567 = vpop.f32.mrf.mxu0
        %v2568 = vadd.f32 %v2269, %v2567
        %v2569 = vpop.f32.mrf.mxu0
        %2570 = vmatprep.mubr.bf16.mxu0 0
        %2571 = vmatmul.mubr.bf16.gmra.mxu0 %v1583
        %v2572 = vpop.f32.mrf.mxu0
        %v2573 = vadd.f32 %v2270, %v2572
        %v2574 = vpop.f32.mrf.mxu0
        %v2575 = vpop.f32.mrf.mxu0
        %v2576 = vadd.f32 %v2271, %v2575
        %v2577 = vpop.f32.mrf.mxu0
        %2578 = vmatprep.mubr.bf16.mxu0 0
        %2579 = vmatmul.mubr.bf16.gmra.mxu0 %v1584
        %v2580 = vpop.f32.mrf.mxu0
        %v2581 = vadd.f32 %v2272, %v2580
        %v2582 = vpop.f32.mrf.mxu0
        %v2583 = vpop.f32.mrf.mxu0
        %v2584 = vadd.f32 %v2273, %v2583
        %v2585 = vpop.f32.mrf.mxu0
        %2586 = vmatprep.mubr.bf16.mxu0 0
        %2587 = vmatmul.mubr.bf16.gmra.mxu0 %v1585
        %v2588 = vpop.f32.mrf.mxu0
        %v2589 = vadd.f32 %v2274, %v2588
        %v2590 = vpop.f32.mrf.mxu0
        %v2591 = vpop.f32.mrf.mxu0
        %v2592 = vadd.f32 %v2275, %v2591
        %v2593 = vpop.f32.mrf.mxu0
        %2594 = vmatprep.mubr.bf16.mxu0 0
        %2595 = vmatmul.mubr.bf16.gmra.mxu0 %v1586
        %v2596 = vpop.f32.mrf.mxu0
        %v2597 = vadd.f32 %v2276, %v2596
        %v2598 = vpop.f32.mrf.mxu0
        %v2599 = vpop.f32.mrf.mxu0
        %v2600 = vadd.f32 %v2277, %v2599
        %v2601 = vpop.f32.mrf.mxu0
        %2602 = vmatprep.mubr.bf16.mxu0 0
        %2603 = vmatmul.mubr.bf16.gmra.mxu0 %v1587
        %v2604 = vpop.f32.mrf.mxu0
        %v2605 = vadd.f32 %v2278, %v2604
        %v2606 = vpop.f32.mrf.mxu0
        %v2607 = vpop.f32.mrf.mxu0
        %v2608 = vadd.f32 %v2279, %v2607
        %v2609 = vpop.f32.mrf.mxu0
        %2610 = vmatprep.mubr.bf16.mxu0 0
        %2611 = vmatmul.mubr.bf16.gmra.mxu0 %v1588
        %v2612 = vpop.f32.mrf.mxu0
        %v2613 = vadd.f32 %v2280, %v2612
        %v2614 = vpop.f32.mrf.mxu0
        %v2615 = vpop.f32.mrf.mxu0
        %v2616 = vadd.f32 %v2281, %v2615
        %v2617 = vpop.f32.mrf.mxu0
        %2618 = vdwg.mxu0
        %v2619 = vadd.f32 %v2493, %v2378
        %v2620 = vadd.f32 %v2496, %v2379
        %v2621 = vadd.f32 %v2501, %v2380
        %v2622 = vadd.f32 %v2504, %v2381
        %v2623 = vadd.f32 %v2509, %v2382
        %v2624 = vadd.f32 %v2512, %v2383
        %v2625 = vadd.f32 %v2517, %v2384
        %v2626 = vadd.f32 %v2520, %v2385
        %v2627 = vadd.f32 %v2525, %v2386
        %v2628 = vadd.f32 %v2528, %v2387
        %v2629 = vadd.f32 %v2533, %v2388
        %v2630 = vadd.f32 %v2536, %v2389
        %v2631 = vadd.f32 %v2541, %v2390
        %v2632 = vadd.f32 %v2544, %v2391
        %v2633 = vadd.f32 %v2549, %v2392
        %v2634 = vadd.f32 %v2552, %v2393
        %v2635 = vadd.f32 %v2557, %v2394
        %v2636 = vadd.f32 %v2560, %v2395
        %v2637 = vadd.f32 %v2565, %v2396
        %v2638 = vadd.f32 %v2568, %v2397
        %v2639 = vadd.f32 %v2573, %v2398
        %v2640 = vadd.f32 %v2576, %v2399
        %v2641 = vadd.f32 %v2581, %v2400
        %v2642 = vadd.f32 %v2584, %v2401
        %v2643 = vadd.f32 %v2589, %v2402
        %v2644 = vadd.f32 %v2592, %v2403
        %v2645 = vadd.f32 %v2597, %v2404
        %v2646 = vadd.f32 %v2600, %v2405
        %v2647 = vadd.f32 %v2605, %v2406
        %v2648 = vadd.f32 %v2608, %v2407
        %v2649 = vadd.f32 %v2613, %v2408
        %v2650 = vadd.f32 %v2616, %v2409
        %s2651 = scalar_lea.vmem %s2, 1
        %v2652 = vld [vmem:[%s2651] sm:$0x1]
        %v2654 = vlaneseq
        %v2655 = vshrl.u32 %v2654, 7
        %v2656 = vsub.s32 0, %v2655
        %v2657 = vrot.slane %v2652, %v2656
        %v2659 = vadd.f32 %v2619, %v2657
        %v2660 = vadd.f32 %v2620, %v2657
        %v2661 = vadd.f32 %v2621, %v2657
        %v2662 = vadd.f32 %v2622, %v2657
        %v2663 = vadd.f32 %v2623, %v2657
        %v2664 = vadd.f32 %v2624, %v2657
        %v2665 = vadd.f32 %v2625, %v2657
        %v2666 = vadd.f32 %v2626, %v2657
        %v2667 = vadd.f32 %v2627, %v2657
        %v2668 = vadd.f32 %v2628, %v2657
        %v2669 = vadd.f32 %v2629, %v2657
        %v2670 = vadd.f32 %v2630, %v2657
        %v2671 = vadd.f32 %v2631, %v2657
        %v2672 = vadd.f32 %v2632, %v2657
        %v2673 = vadd.f32 %v2633, %v2657
        %v2674 = vadd.f32 %v2634, %v2657
        %v2675 = vadd.f32 %v2635, %v2657
        %v2676 = vadd.f32 %v2636, %v2657
        %v2677 = vadd.f32 %v2637, %v2657
        %v2678 = vadd.f32 %v2638, %v2657
        %v2679 = vadd.f32 %v2639, %v2657
        %v2680 = vadd.f32 %v2640, %v2657
        %v2681 = vadd.f32 %v2641, %v2657
        %v2682 = vadd.f32 %v2642, %v2657
        %v2683 = vadd.f32 %v2643, %v2657
        %v2684 = vadd.f32 %v2644, %v2657
        %v2685 = vadd.f32 %v2645, %v2657
        %v2686 = vadd.f32 %v2646, %v2657
        %v2687 = vadd.f32 %v2647, %v2657
        %v2688 = vadd.f32 %v2648, %v2657
        %v2689 = vadd.f32 %v2649, %v2657
        %v2690 = vadd.f32 %v2650, %v2657
        %v2691 = vmax.f32 %v2659, 0.0
        %v2692 = vmax.f32 %v2660, 0.0
        %v2693 = vmax.f32 %v2661, 0.0
        %v2694 = vmax.f32 %v2662, 0.0
        %v2695 = vmax.f32 %v2663, 0.0
        %v2696 = vmax.f32 %v2664, 0.0
        %v2697 = vmax.f32 %v2665, 0.0
        %v2698 = vmax.f32 %v2666, 0.0
        %v2699 = vmax.f32 %v2667, 0.0
        %v2700 = vmax.f32 %v2668, 0.0
        %v2701 = vmax.f32 %v2669, 0.0
        %v2702 = vmax.f32 %v2670, 0.0
        %v2703 = vmax.f32 %v2671, 0.0
        %v2704 = vmax.f32 %v2672, 0.0
        %v2705 = vmax.f32 %v2673, 0.0
        %v2706 = vmax.f32 %v2674, 0.0
        %v2707 = vmax.f32 %v2675, 0.0
        %v2708 = vmax.f32 %v2676, 0.0
        %v2709 = vmax.f32 %v2677, 0.0
        %v2710 = vmax.f32 %v2678, 0.0
        %v2711 = vmax.f32 %v2679, 0.0
        %v2712 = vmax.f32 %v2680, 0.0
        %v2713 = vmax.f32 %v2681, 0.0
        %v2714 = vmax.f32 %v2682, 0.0
        %v2715 = vmax.f32 %v2683, 0.0
        %v2716 = vmax.f32 %v2684, 0.0
        %v2717 = vmax.f32 %v2685, 0.0
        %v2718 = vmax.f32 %v2686, 0.0
        %v2719 = vmax.f32 %v2687, 0.0
        %v2720 = vmax.f32 %v2688, 0.0
        %v2721 = vmax.f32 %v2689, 0.0
        %v2722 = vmax.f32 %v2690, 0.0
        %2723 = vst [vmem:[#allocation2 + $0x20] sm:$0xff] %v2691
        %2724 = vst [vmem:[#allocation2 + $0x28] sm:$0xff] %v2692
        %2725 = vst [vmem:[#allocation2 + $0x30] sm:$0xff] %v2693
        %2726 = vst [vmem:[#allocation2 + $0x38] sm:$0xff] %v2694
        %2727 = vst [vmem:[#allocation2 + $0x40] sm:$0xff] %v2695
        %2728 = vst [vmem:[#allocation2 + $0x48] sm:$0xff] %v2696
        %2729 = vst [vmem:[#allocation2 + $0x50] sm:$0xff] %v2697
        %2730 = vst [vmem:[#allocation2 + $0x58] sm:$0xff] %v2698
        %2731 = vst [vmem:[#allocation2 + $0x60] sm:$0xff] %v2699
        %2732 = vst [vmem:[#allocation2 + $0x68] sm:$0xff] %v2700
        %2733 = vst [vmem:[#allocation2 + $0x70] sm:$0xff] %v2701
        %2734 = vst [vmem:[#allocation2 + $0x78] sm:$0xff] %v2702
        %2735 = vst [vmem:[#allocation2 + $0x80] sm:$0xff] %v2703
        %2736 = vst [vmem:[#allocation2 + $0x88] sm:$0xff] %v2704
        %2737 = vst [vmem:[#allocation2 + $0x90] sm:$0xff] %v2705
        %2738 = vst [vmem:[#allocation2 + $0x98] sm:$0xff] %v2706
        %2739 = vst [vmem:[#allocation2 + $0xa0] sm:$0xff] %v2707
        %2740 = vst [vmem:[#allocation2 + $0xa8] sm:$0xff] %v2708
        %2741 = vst [vmem:[#allocation2 + $0xb0] sm:$0xff] %v2709
        %2742 = vst [vmem:[#allocation2 + $0xb8] sm:$0xff] %v2710
        %2743 = vst [vmem:[#allocation2 + $0xc0] sm:$0xff] %v2711
        %2744 = vst [vmem:[#allocation2 + $0xc8] sm:$0xff] %v2712
        %2745 = vst [vmem:[#allocation2 + $0xd0] sm:$0xff] %v2713
        %2746 = vst [vmem:[#allocation2 + $0xd8] sm:$0xff] %v2714
        %2747 = vst [vmem:[#allocation2 + $0xe0] sm:$0xff] %v2715
        %2748 = vst [vmem:[#allocation2 + $0xe8] sm:$0xff] %v2716
        %2749 = vst [vmem:[#allocation2 + $0xf0] sm:$0xff] %v2717
        %2750 = vst [vmem:[#allocation2 + $0xf8] sm:$0xff] %v2718
        %2751 = vst [vmem:[#allocation2 + $0x100] sm:$0xff] %v2719
        %2752 = vst [vmem:[#allocation2 + $0x108] sm:$0xff] %v2720
        %2753 = vst [vmem:[#allocation2 + $0x110] sm:$0xff] %v2721
        %2754 = vst [vmem:[#allocation2 + $0x118] sm:$0xff] %v2722
        %v2755 = vpack.c.bf16 %v2692, %v2691
        %v2756 = vpack.c.bf16 %v2694, %v2693
        %v2757 = vpack.c.bf16 %v2696, %v2695
        %v2758 = vpack.c.bf16 %v2698, %v2697
        %v2759 = vpack.c.bf16 %v2700, %v2699
        %v2760 = vpack.c.bf16 %v2702, %v2701
        %v2761 = vpack.c.bf16 %v2704, %v2703
        %v2762 = vpack.c.bf16 %v2706, %v2705
        %v2763 = vpack.c.bf16 %v2708, %v2707
        %v2764 = vpack.c.bf16 %v2710, %v2709
        %v2765 = vpack.c.bf16 %v2712, %v2711
        %v2766 = vpack.c.bf16 %v2714, %v2713
        %v2767 = vpack.c.bf16 %v2716, %v2715
        %v2768 = vpack.c.bf16 %v2718, %v2717
        %v2769 = vpack.c.bf16 %v2720, %v2719
        %v2770 = vpack.c.bf16 %v2722, %v2721
        %v2771 = vld [vmem:[#allocation2] sm:$0xff]
        %v2772 = vld [vmem:[#allocation2 + $0x8] sm:$0xff]
        %v2773 = vld [vmem:[#allocation2 + $0x10] sm:$0xff]
        %v2774 = vld [vmem:[#allocation2 + $0x18] sm:$0xff]
        %v2775 = vld [vmem:[#allocation2 + $0x20] sm:$0xff]
        %v2776 = vld [vmem:[#allocation2 + $0x28] sm:$0xff]
        %v2777 = vld [vmem:[#allocation2 + $0x30] sm:$0xff]
        %v2778 = vld [vmem:[#allocation2 + $0x38] sm:$0xff]
        %v2779 = vld [vmem:[#allocation2 + $0x40] sm:$0xff]
        %v2780 = vld [vmem:[#allocation2 + $0x48] sm:$0xff]
        %v2781 = vld [vmem:[#allocation2 + $0x50] sm:$0xff]
        %v2782 = vld [vmem:[#allocation2 + $0x58] sm:$0xff]
        %v2783 = vld [vmem:[#allocation2 + $0x60] sm:$0xff]
        %v2784 = vld [vmem:[#allocation2 + $0x68] sm:$0xff]
        %v2785 = vld [vmem:[#allocation2 + $0x70] sm:$0xff]
        %v2786 = vld [vmem:[#allocation2 + $0x78] sm:$0xff]
        %v2787 = vld [vmem:[#allocation2 + $0x80] sm:$0xff]
        %v2788 = vld [vmem:[#allocation2 + $0x88] sm:$0xff]
        %v2789 = vld [vmem:[#allocation2 + $0x90] sm:$0xff]
        %v2790 = vld [vmem:[#allocation2 + $0x98] sm:$0xff]
        %v2791 = vld [vmem:[#allocation2 + $0xa0] sm:$0xff]
        %v2792 = vld [vmem:[#allocation2 + $0xa8] sm:$0xff]
        %v2793 = vld [vmem:[#allocation2 + $0xb0] sm:$0xff]
        %v2794 = vld [vmem:[#allocation2 + $0xb8] sm:$0xff]
        %v2795 = vld [vmem:[#allocation2 + $0xc0] sm:$0xff]
        %v2796 = vld [vmem:[#allocation2 + $0xc8] sm:$0xff]
        %v2797 = vld [vmem:[#allocation2 + $0xd0] sm:$0xff]
        %v2798 = vld [vmem:[#allocation2 + $0xd8] sm:$0xff]
        %v2799 = vld [vmem:[#allocation2 + $0xe0] sm:$0xff]
        %v2800 = vld [vmem:[#allocation2 + $0xe8] sm:$0xff]
        %v2801 = vld [vmem:[#allocation2 + $0xf0] sm:$0xff]
        %v2802 = vld [vmem:[#allocation2 + $0xf8] sm:$0xff]
        %v2803 = vpack.c.bf16 %v2772, %v2771
        %v2804 = vpack.c.bf16 %v2774, %v2773
        %v2805 = vpack.c.bf16 %v2776, %v2775
        %v2806 = vpack.c.bf16 %v2778, %v2777
        %v2807 = vpack.c.bf16 %v2780, %v2779
        %v2808 = vpack.c.bf16 %v2782, %v2781
        %v2809 = vpack.c.bf16 %v2784, %v2783
        %v2810 = vpack.c.bf16 %v2786, %v2785
        %v2811 = vpack.c.bf16 %v2788, %v2787
        %v2812 = vpack.c.bf16 %v2790, %v2789
        %v2813 = vpack.c.bf16 %v2792, %v2791
        %v2814 = vpack.c.bf16 %v2794, %v2793
        %v2815 = vpack.c.bf16 %v2796, %v2795
        %v2816 = vpack.c.bf16 %v2798, %v2797
        %v2817 = vpack.c.bf16 %v2800, %v2799
        %v2818 = vpack.c.bf16 %v2802, %v2801
        %v2819 = vld [vmem:[#allocation2 + $0x40] sm:$0xff]
        %v2820 = vld [vmem:[#allocation2 + $0x48] sm:$0xff]
        %v2821 = vld [vmem:[#allocation2 + $0x50] sm:$0xff]
        %v2822 = vld [vmem:[#allocation2 + $0x58] sm:$0xff]
        %v2823 = vld [vmem:[#allocation2 + $0x60] sm:$0xff]
        %v2824 = vld [vmem:[#allocation2 + $0x68] sm:$0xff]
        %v2825 = vld [vmem:[#allocation2 + $0x70] sm:$0xff]
        %v2826 = vld [vmem:[#allocation2 + $0x78] sm:$0xff]
        %v2827 = vld [vmem:[#allocation2 + $0x80] sm:$0xff]
        %v2828 = vld [vmem:[#allocation2 + $0x88] sm:$0xff]
        %v2829 = vld [vmem:[#allocation2 + $0x90] sm:$0xff]
        %v2830 = vld [vmem:[#allocation2 + $0x98] sm:$0xff]
        %v2831 = vld [vmem:[#allocation2 + $0xa0] sm:$0xff]
        %v2832 = vld [vmem:[#allocation2 + $0xa8] sm:$0xff]
        %v2833 = vld [vmem:[#allocation2 + $0xb0] sm:$0xff]
        %v2834 = vld [vmem:[#allocation2 + $0xb8] sm:$0xff]
        %v2835 = vld [vmem:[#allocation2 + $0xc0] sm:$0xff]
        %v2836 = vld [vmem:[#allocation2 + $0xc8] sm:$0xff]
        %v2837 = vld [vmem:[#allocation2 + $0xd0] sm:$0xff]
        %v2838 = vld [vmem:[#allocation2 + $0xd8] sm:$0xff]
        %v2839 = vld [vmem:[#allocation2 + $0xe0] sm:$0xff]
        %v2840 = vld [vmem:[#allocation2 + $0xe8] sm:$0xff]
        %v2841 = vld [vmem:[#allocation2 + $0xf0] sm:$0xff]
        %v2842 = vld [vmem:[#allocation2 + $0xf8] sm:$0xff]
        %v2843 = vld [vmem:[#allocation2 + $0x100] sm:$0xff]
        %v2844 = vld [vmem:[#allocation2 + $0x108] sm:$0xff]
        %v2845 = vld [vmem:[#allocation2 + $0x110] sm:$0xff]
        %v2846 = vld [vmem:[#allocation2 + $0x118] sm:$0xff]
        %v2847 = vld [vmem:[#allocation2 + $0x120] sm:$0xff]
        %v2848 = vld [vmem:[#allocation2 + $0x128] sm:$0xff]
        %v2849 = vld [vmem:[#allocation2 + $0x130] sm:$0xff]
        %v2850 = vld [vmem:[#allocation2 + $0x138] sm:$0xff]
        %v2851 = vpack.c.bf16 %v2820, %v2819
        %v2852 = vpack.c.bf16 %v2822, %v2821
        %v2853 = vpack.c.bf16 %v2824, %v2823
        %v2854 = vpack.c.bf16 %v2826, %v2825
        %v2855 = vpack.c.bf16 %v2828, %v2827
        %v2856 = vpack.c.bf16 %v2830, %v2829
        %v2857 = vpack.c.bf16 %v2832, %v2831
        %v2858 = vpack.c.bf16 %v2834, %v2833
        %v2859 = vpack.c.bf16 %v2836, %v2835
        %v2860 = vpack.c.bf16 %v2838, %v2837
        %v2861 = vpack.c.bf16 %v2840, %v2839
        %v2862 = vpack.c.bf16 %v2842, %v2841
        %v2863 = vpack.c.bf16 %v2844, %v2843
        %v2864 = vpack.c.bf16 %v2846, %v2845
        %v2865 = vpack.c.bf16 %v2848, %v2847
        %v2866 = vpack.c.bf16 %v2850, %v2849
        %s2867 = scalar_lea.vmem %s1, 448
        %v2868 = vld [vmem:[%s2867] sm:$0xf]
        %v2869 = vld [vmem:[%s2867 + $0x4] sm:$0xf]
        %v2870 = vld [vmem:[%s2867 + $0x8] sm:$0xf]
        %v2871 = vld [vmem:[%s2867 + $0xc] sm:$0xf]
        %v2872 = vld [vmem:[%s2867 + $0x10] sm:$0xf]
        %v2873 = vld [vmem:[%s2867 + $0x14] sm:$0xf]
        %v2874 = vld [vmem:[%s2867 + $0x18] sm:$0xf]
        %v2875 = vld [vmem:[%s2867 + $0x1c] sm:$0xf]
        %v2876 = vld [vmem:[%s2867 + $0x20] sm:$0xf]
        %v2877 = vld [vmem:[%s2867 + $0x24] sm:$0xf]
        %v2878 = vld [vmem:[%s2867 + $0x28] sm:$0xf]
        %v2879 = vld [vmem:[%s2867 + $0x2c] sm:$0xf]
        %v2880 = vld [vmem:[%s2867 + $0x30] sm:$0xf]
        %v2881 = vld [vmem:[%s2867 + $0x34] sm:$0xf]
        %v2882 = vld [vmem:[%s2867 + $0x38] sm:$0xf]
        %v2883 = vld [vmem:[%s2867 + $0x3c] sm:$0xf]
        %s2884 = scalar_lea.vmem %s1, 384
        %v2885 = vld [vmem:[%s2884] sm:$0xf]
        %v2886 = vld [vmem:[%s2884 + $0x4] sm:$0xf]
        %v2887 = vld [vmem:[%s2884 + $0x8] sm:$0xf]
        %v2888 = vld [vmem:[%s2884 + $0xc] sm:$0xf]
        %v2889 = vld [vmem:[%s2884 + $0x10] sm:$0xf]
        %v2890 = vld [vmem:[%s2884 + $0x14] sm:$0xf]
        %v2891 = vld [vmem:[%s2884 + $0x18] sm:$0xf]
        %v2892 = vld [vmem:[%s2884 + $0x1c] sm:$0xf]
        %v2893 = vld [vmem:[%s2884 + $0x20] sm:$0xf]
        %v2894 = vld [vmem:[%s2884 + $0x24] sm:$0xf]
        %v2895 = vld [vmem:[%s2884 + $0x28] sm:$0xf]
        %v2896 = vld [vmem:[%s2884 + $0x2c] sm:$0xf]
        %v2897 = vld [vmem:[%s2884 + $0x30] sm:$0xf]
        %v2898 = vld [vmem:[%s2884 + $0x34] sm:$0xf]
        %v2899 = vld [vmem:[%s2884 + $0x38] sm:$0xf]
        %v2900 = vld [vmem:[%s2884 + $0x3c] sm:$0xf]
        %v2917 = vunpack.c.l.b16 %v2885
        %v2918 = vunpack.c.l.b16 %v2886
        %v2919 = vunpack.c.l.b16 %v2887
        %v2920 = vunpack.c.l.b16 %v2888
        %v2921 = vunpack.c.l.b16 %v2889
        %v2922 = vunpack.c.l.b16 %v2890
        %v2923 = vunpack.c.l.b16 %v2891
        %v2924 = vunpack.c.l.b16 %v2892
        %v2925 = vunpack.c.l.b16 %v2893
        %v2926 = vunpack.c.l.b16 %v2894
        %v2927 = vunpack.c.l.b16 %v2895
        %v2928 = vunpack.c.l.b16 %v2896
        %v2929 = vunpack.c.l.b16 %v2897
        %v2930 = vunpack.c.l.b16 %v2898
        %v2931 = vunpack.c.l.b16 %v2899
        %v2932 = vunpack.c.l.b16 %v2900
        %v2933 = vpack.c.b16 %v2918, %v2917
        %v2934 = vpack.c.b16 %v2920, %v2919
        %v2935 = vpack.c.b16 %v2922, %v2921
        %v2936 = vpack.c.b16 %v2924, %v2923
        %v2937 = vpack.c.b16 %v2926, %v2925
        %v2938 = vpack.c.b16 %v2928, %v2927
        %v2939 = vpack.c.b16 %v2930, %v2929
        %v2940 = vpack.c.b16 %v2932, %v2931
        %2949 = vmatprep.subr.bf16.mxu0 0
        %2950 = vmatpush1.bf16.msra.mxu0 %v2940
        %2951 = vmatprep.subr.bf16.mxu0 0
        %2952 = vmatpush1.bf16.msra.mxu0 %v2939
        %2953 = vmatprep.subr.bf16.mxu0 0
        %2954 = vmatpush1.bf16.msra.mxu0 %v2938
        %2955 = vmatprep.subr.bf16.mxu0 0
        %2956 = vmatpush1.bf16.msra.mxu0 %v2937
        %2957 = vmatprep.subr.bf16.mxu0 0
        %2958 = vmatpush1.bf16.msra.mxu0 %v2936
        %2959 = vmatprep.subr.bf16.mxu0 0
        %2960 = vmatpush1.bf16.msra.mxu0 %v2935
        %2961 = vmatprep.subr.bf16.mxu0 0
        %2962 = vmatpush1.bf16.msra.mxu0 %v2934
        %2963 = vmatprep.subr.bf16.mxu0 0
        %2964 = vmatpush1.bf16.msra.mxu0 %v2933
        %2965 = vmatprep.subr.bf16.mxu0 0
        %2966 = vmatpush2.bf16.msra.mxu0 0
        %2967 = vmatprep.subr.bf16.mxu0 0
        %2968 = vmatpush2.bf16.msra.mxu0 0
        %2969 = vmatprep.subr.bf16.mxu0 0
        %2970 = vmatpush2.bf16.msra.mxu0 0
        %2971 = vmatprep.subr.bf16.mxu0 0
        %2972 = vmatpush2.bf16.msra.mxu0 0
        %2973 = vmatprep.subr.bf16.mxu0 0
        %2974 = vmatpush2.bf16.msra.mxu0 0
        %2975 = vmatprep.subr.bf16.mxu0 0
        %2976 = vmatpush2.bf16.msra.mxu0 0
        %2977 = vmatprep.subr.bf16.mxu0 0
        %2978 = vmatpush2.bf16.msra.mxu0 0
        %2979 = vmatprep.subr.bf16.mxu0 0
        %2980 = vmatpush2.bf16.msra.mxu0 0
        %2981 = vmatprep.mubr.bf16.mxu0 0
        %2982 = vmatmul.mubr.bf16.gmra.mxu0 %v2803
        %v2983 = vpop.f32.mrf.mxu0
        %v2984 = vadd.f32 0.0, %v2983
        %v2985 = vpop.f32.mrf.mxu0
        %v2986 = vpop.f32.mrf.mxu0
        %v2987 = vadd.f32 0.0, %v2986
        %v2988 = vpop.f32.mrf.mxu0
        %2989 = vmatprep.mubr.bf16.mxu0 0
        %2990 = vmatmul.mubr.bf16.gmra.mxu0 %v2804
        %v2991 = vpop.f32.mrf.mxu0
        %v2992 = vadd.f32 0.0, %v2991
        %v2993 = vpop.f32.mrf.mxu0
        %v2994 = vpop.f32.mrf.mxu0
        %v2995 = vadd.f32 0.0, %v2994
        %v2996 = vpop.f32.mrf.mxu0
        %2997 = vmatprep.mubr.bf16.mxu0 0
        %2998 = vmatmul.mubr.bf16.gmra.mxu0 %v2805
        %v2999 = vpop.f32.mrf.mxu0
        %v3000 = vadd.f32 0.0, %v2999
        %v3001 = vpop.f32.mrf.mxu0
        %v3002 = vpop.f32.mrf.mxu0
        %v3003 = vadd.f32 0.0, %v3002
        %v3004 = vpop.f32.mrf.mxu0
        %3005 = vmatprep.mubr.bf16.mxu0 0
        %3006 = vmatmul.mubr.bf16.gmra.mxu0 %v2806
        %v3007 = vpop.f32.mrf.mxu0
        %v3008 = vadd.f32 0.0, %v3007
        %v3009 = vpop.f32.mrf.mxu0
        %v3010 = vpop.f32.mrf.mxu0
        %v3011 = vadd.f32 0.0, %v3010
        %v3012 = vpop.f32.mrf.mxu0
        %3013 = vmatprep.mubr.bf16.mxu0 0
        %3014 = vmatmul.mubr.bf16.gmra.mxu0 %v2807
        %v3015 = vpop.f32.mrf.mxu0
        %v3016 = vadd.f32 0.0, %v3015
        %v3017 = vpop.f32.mrf.mxu0
        %v3018 = vpop.f32.mrf.mxu0
        %v3019 = vadd.f32 0.0, %v3018
        %v3020 = vpop.f32.mrf.mxu0
        %3021 = vmatprep.mubr.bf16.mxu0 0
        %3022 = vmatmul.mubr.bf16.gmra.mxu0 %v2808
        %v3023 = vpop.f32.mrf.mxu0
        %v3024 = vadd.f32 0.0, %v3023
        %v3025 = vpop.f32.mrf.mxu0
        %v3026 = vpop.f32.mrf.mxu0
        %v3027 = vadd.f32 0.0, %v3026
        %v3028 = vpop.f32.mrf.mxu0
        %3029 = vmatprep.mubr.bf16.mxu0 0
        %3030 = vmatmul.mubr.bf16.gmra.mxu0 %v2809
        %v3031 = vpop.f32.mrf.mxu0
        %v3032 = vadd.f32 0.0, %v3031
        %v3033 = vpop.f32.mrf.mxu0
        %v3034 = vpop.f32.mrf.mxu0
        %v3035 = vadd.f32 0.0, %v3034
        %v3036 = vpop.f32.mrf.mxu0
        %3037 = vmatprep.mubr.bf16.mxu0 0
        %3038 = vmatmul.mubr.bf16.gmra.mxu0 %v2810
        %v3039 = vpop.f32.mrf.mxu0
        %v3040 = vadd.f32 0.0, %v3039
        %v3041 = vpop.f32.mrf.mxu0
        %v3042 = vpop.f32.mrf.mxu0
        %v3043 = vadd.f32 0.0, %v3042
        %v3044 = vpop.f32.mrf.mxu0
        %3045 = vmatprep.mubr.bf16.mxu0 0
        %3046 = vmatmul.mubr.bf16.gmra.mxu0 %v2811
        %v3047 = vpop.f32.mrf.mxu0
        %v3048 = vadd.f32 0.0, %v3047
        %v3049 = vpop.f32.mrf.mxu0
        %v3050 = vpop.f32.mrf.mxu0
        %v3051 = vadd.f32 0.0, %v3050
        %v3052 = vpop.f32.mrf.mxu0
        %3053 = vmatprep.mubr.bf16.mxu0 0
        %3054 = vmatmul.mubr.bf16.gmra.mxu0 %v2812
        %v3055 = vpop.f32.mrf.mxu0
        %v3056 = vadd.f32 0.0, %v3055
        %v3057 = vpop.f32.mrf.mxu0
        %v3058 = vpop.f32.mrf.mxu0
        %v3059 = vadd.f32 0.0, %v3058
        %v3060 = vpop.f32.mrf.mxu0
        %3061 = vmatprep.mubr.bf16.mxu0 0
        %3062 = vmatmul.mubr.bf16.gmra.mxu0 %v2813
        %v3063 = vpop.f32.mrf.mxu0
        %v3064 = vadd.f32 0.0, %v3063
        %v3065 = vpop.f32.mrf.mxu0
        %v3066 = vpop.f32.mrf.mxu0
        %v3067 = vadd.f32 0.0, %v3066
        %v3068 = vpop.f32.mrf.mxu0
        %3069 = vmatprep.mubr.bf16.mxu0 0
        %3070 = vmatmul.mubr.bf16.gmra.mxu0 %v2814
        %v3071 = vpop.f32.mrf.mxu0
        %v3072 = vadd.f32 0.0, %v3071
        %v3073 = vpop.f32.mrf.mxu0
        %v3074 = vpop.f32.mrf.mxu0
        %v3075 = vadd.f32 0.0, %v3074
        %v3076 = vpop.f32.mrf.mxu0
        %3077 = vmatprep.mubr.bf16.mxu0 0
        %3078 = vmatmul.mubr.bf16.gmra.mxu0 %v2815
        %v3079 = vpop.f32.mrf.mxu0
        %v3080 = vadd.f32 0.0, %v3079
        %v3081 = vpop.f32.mrf.mxu0
        %v3082 = vpop.f32.mrf.mxu0
        %v3083 = vadd.f32 0.0, %v3082
        %v3084 = vpop.f32.mrf.mxu0
        %3085 = vmatprep.mubr.bf16.mxu0 0
        %3086 = vmatmul.mubr.bf16.gmra.mxu0 %v2816
        %v3087 = vpop.f32.mrf.mxu0
        %v3088 = vadd.f32 0.0, %v3087
        %v3089 = vpop.f32.mrf.mxu0
        %v3090 = vpop.f32.mrf.mxu0
        %v3091 = vadd.f32 0.0, %v3090
        %v3092 = vpop.f32.mrf.mxu0
        %3093 = vmatprep.mubr.bf16.mxu0 0
        %3094 = vmatmul.mubr.bf16.gmra.mxu0 %v2817
        %v3095 = vpop.f32.mrf.mxu0
        %v3096 = vadd.f32 0.0, %v3095
        %v3097 = vpop.f32.mrf.mxu0
        %v3098 = vpop.f32.mrf.mxu0
        %v3099 = vadd.f32 0.0, %v3098
        %v3100 = vpop.f32.mrf.mxu0
        %3101 = vmatprep.mubr.bf16.mxu0 0
        %3102 = vmatmul.mubr.bf16.gmra.mxu0 %v2818
        %v3103 = vpop.f32.mrf.mxu0
        %v3104 = vadd.f32 0.0, %v3103
        %v3105 = vpop.f32.mrf.mxu0
        %v3106 = vpop.f32.mrf.mxu0
        %v3107 = vadd.f32 0.0, %v3106
        %v3108 = vpop.f32.mrf.mxu0
        %3109 = vdwg.mxu0
        %s3110 = scalar_lea.vmem %s1, 512
        %v3111 = vld [vmem:[%s3110] sm:$0xf]
        %v3112 = vld [vmem:[%s3110 + $0x4] sm:$0xf]
        %v3113 = vld [vmem:[%s3110 + $0x8] sm:$0xf]
        %v3114 = vld [vmem:[%s3110 + $0xc] sm:$0xf]
        %v3115 = vld [vmem:[%s3110 + $0x10] sm:$0xf]
        %v3116 = vld [vmem:[%s3110 + $0x14] sm:$0xf]
        %v3117 = vld [vmem:[%s3110 + $0x18] sm:$0xf]
        %v3118 = vld [vmem:[%s3110 + $0x1c] sm:$0xf]
        %v3119 = vld [vmem:[%s3110 + $0x20] sm:$0xf]
        %v3120 = vld [vmem:[%s3110 + $0x24] sm:$0xf]
        %v3121 = vld [vmem:[%s3110 + $0x28] sm:$0xf]
        %v3122 = vld [vmem:[%s3110 + $0x2c] sm:$0xf]
        %v3123 = vld [vmem:[%s3110 + $0x30] sm:$0xf]
        %v3124 = vld [vmem:[%s3110 + $0x34] sm:$0xf]
        %v3125 = vld [vmem:[%s3110 + $0x38] sm:$0xf]
        %v3126 = vld [vmem:[%s3110 + $0x3c] sm:$0xf]
        %v3143 = vunpack.c.l.b16 %v3111
        %v3144 = vunpack.c.l.b16 %v3112
        %v3145 = vunpack.c.l.b16 %v3113
        %v3146 = vunpack.c.l.b16 %v3114
        %v3147 = vunpack.c.l.b16 %v3115
        %v3148 = vunpack.c.l.b16 %v3116
        %v3149 = vunpack.c.l.b16 %v3117
        %v3150 = vunpack.c.l.b16 %v3118
        %v3151 = vunpack.c.l.b16 %v3119
        %v3152 = vunpack.c.l.b16 %v3120
        %v3153 = vunpack.c.l.b16 %v3121
        %v3154 = vunpack.c.l.b16 %v3122
        %v3155 = vunpack.c.l.b16 %v3123
        %v3156 = vunpack.c.l.b16 %v3124
        %v3157 = vunpack.c.l.b16 %v3125
        %v3158 = vunpack.c.l.b16 %v3126
        %v3159 = vpack.c.b16 %v3144, %v3143
        %v3160 = vpack.c.b16 %v3146, %v3145
        %v3161 = vpack.c.b16 %v3148, %v3147
        %v3162 = vpack.c.b16 %v3150, %v3149
        %v3163 = vpack.c.b16 %v3152, %v3151
        %v3164 = vpack.c.b16 %v3154, %v3153
        %v3165 = vpack.c.b16 %v3156, %v3155
        %v3166 = vpack.c.b16 %v3158, %v3157
        %3175 = vmatprep.subr.bf16.mxu0 0
        %3176 = vmatpush1.bf16.msra.mxu0 %v3166
        %3177 = vmatprep.subr.bf16.mxu0 0
        %3178 = vmatpush1.bf16.msra.mxu0 %v3165
        %3179 = vmatprep.subr.bf16.mxu0 0
        %3180 = vmatpush1.bf16.msra.mxu0 %v3164
        %3181 = vmatprep.subr.bf16.mxu0 0
        %3182 = vmatpush1.bf16.msra.mxu0 %v3163
        %3183 = vmatprep.subr.bf16.mxu0 0
        %3184 = vmatpush1.bf16.msra.mxu0 %v3162
        %3185 = vmatprep.subr.bf16.mxu0 0
        %3186 = vmatpush1.bf16.msra.mxu0 %v3161
        %3187 = vmatprep.subr.bf16.mxu0 0
        %3188 = vmatpush1.bf16.msra.mxu0 %v3160
        %3189 = vmatprep.subr.bf16.mxu0 0
        %3190 = vmatpush1.bf16.msra.mxu0 %v3159
        %3191 = vmatprep.subr.bf16.mxu0 0
        %3192 = vmatpush2.bf16.msra.mxu0 0
        %3193 = vmatprep.subr.bf16.mxu0 0
        %3194 = vmatpush2.bf16.msra.mxu0 0
        %3195 = vmatprep.subr.bf16.mxu0 0
        %3196 = vmatpush2.bf16.msra.mxu0 0
        %3197 = vmatprep.subr.bf16.mxu0 0
        %3198 = vmatpush2.bf16.msra.mxu0 0
        %3199 = vmatprep.subr.bf16.mxu0 0
        %3200 = vmatpush2.bf16.msra.mxu0 0
        %3201 = vmatprep.subr.bf16.mxu0 0
        %3202 = vmatpush2.bf16.msra.mxu0 0
        %3203 = vmatprep.subr.bf16.mxu0 0
        %3204 = vmatpush2.bf16.msra.mxu0 0
        %3205 = vmatprep.subr.bf16.mxu0 0
        %3206 = vmatpush2.bf16.msra.mxu0 0
        %3207 = vmatprep.mubr.bf16.mxu0 0
        %3208 = vmatmul.mubr.bf16.gmra.mxu0 %v2851
        %v3209 = vpop.f32.mrf.mxu0
        %v3210 = vadd.f32 0.0, %v3209
        %v3211 = vpop.f32.mrf.mxu0
        %v3212 = vpop.f32.mrf.mxu0
        %v3213 = vadd.f32 0.0, %v3212
        %v3214 = vpop.f32.mrf.mxu0
        %3215 = vmatprep.mubr.bf16.mxu0 0
        %3216 = vmatmul.mubr.bf16.gmra.mxu0 %v2852
        %v3217 = vpop.f32.mrf.mxu0
        %v3218 = vadd.f32 0.0, %v3217
        %v3219 = vpop.f32.mrf.mxu0
        %v3220 = vpop.f32.mrf.mxu0
        %v3221 = vadd.f32 0.0, %v3220
        %v3222 = vpop.f32.mrf.mxu0
        %3223 = vmatprep.mubr.bf16.mxu0 0
        %3224 = vmatmul.mubr.bf16.gmra.mxu0 %v2853
        %v3225 = vpop.f32.mrf.mxu0
        %v3226 = vadd.f32 0.0, %v3225
        %v3227 = vpop.f32.mrf.mxu0
        %v3228 = vpop.f32.mrf.mxu0
        %v3229 = vadd.f32 0.0, %v3228
        %v3230 = vpop.f32.mrf.mxu0
        %3231 = vmatprep.mubr.bf16.mxu0 0
        %3232 = vmatmul.mubr.bf16.gmra.mxu0 %v2854
        %v3233 = vpop.f32.mrf.mxu0
        %v3234 = vadd.f32 0.0, %v3233
        %v3235 = vpop.f32.mrf.mxu0
        %v3236 = vpop.f32.mrf.mxu0
        %v3237 = vadd.f32 0.0, %v3236
        %v3238 = vpop.f32.mrf.mxu0
        %3239 = vmatprep.mubr.bf16.mxu0 0
        %3240 = vmatmul.mubr.bf16.gmra.mxu0 %v2855
        %v3241 = vpop.f32.mrf.mxu0
        %v3242 = vadd.f32 0.0, %v3241
        %v3243 = vpop.f32.mrf.mxu0
        %v3244 = vpop.f32.mrf.mxu0
        %v3245 = vadd.f32 0.0, %v3244
        %v3246 = vpop.f32.mrf.mxu0
        %3247 = vmatprep.mubr.bf16.mxu0 0
        %3248 = vmatmul.mubr.bf16.gmra.mxu0 %v2856
        %v3249 = vpop.f32.mrf.mxu0
        %v3250 = vadd.f32 0.0, %v3249
        %v3251 = vpop.f32.mrf.mxu0
        %v3252 = vpop.f32.mrf.mxu0
        %v3253 = vadd.f32 0.0, %v3252
        %v3254 = vpop.f32.mrf.mxu0
        %3255 = vmatprep.mubr.bf16.mxu0 0
        %3256 = vmatmul.mubr.bf16.gmra.mxu0 %v2857
        %v3257 = vpop.f32.mrf.mxu0
        %v3258 = vadd.f32 0.0, %v3257
        %v3259 = vpop.f32.mrf.mxu0
        %v3260 = vpop.f32.mrf.mxu0
        %v3261 = vadd.f32 0.0, %v3260
        %v3262 = vpop.f32.mrf.mxu0
        %3263 = vmatprep.mubr.bf16.mxu0 0
        %3264 = vmatmul.mubr.bf16.gmra.mxu0 %v2858
        %v3265 = vpop.f32.mrf.mxu0
        %v3266 = vadd.f32 0.0, %v3265
        %v3267 = vpop.f32.mrf.mxu0
        %v3268 = vpop.f32.mrf.mxu0
        %v3269 = vadd.f32 0.0, %v3268
        %v3270 = vpop.f32.mrf.mxu0
        %3271 = vmatprep.mubr.bf16.mxu0 0
        %3272 = vmatmul.mubr.bf16.gmra.mxu0 %v2859
        %v3273 = vpop.f32.mrf.mxu0
        %v3274 = vadd.f32 0.0, %v3273
        %v3275 = vpop.f32.mrf.mxu0
        %v3276 = vpop.f32.mrf.mxu0
        %v3277 = vadd.f32 0.0, %v3276
        %v3278 = vpop.f32.mrf.mxu0
        %3279 = vmatprep.mubr.bf16.mxu0 0
        %3280 = vmatmul.mubr.bf16.gmra.mxu0 %v2860
        %v3281 = vpop.f32.mrf.mxu0
        %v3282 = vadd.f32 0.0, %v3281
        %v3283 = vpop.f32.mrf.mxu0
        %v3284 = vpop.f32.mrf.mxu0
        %v3285 = vadd.f32 0.0, %v3284
        %v3286 = vpop.f32.mrf.mxu0
        %3287 = vmatprep.mubr.bf16.mxu0 0
        %3288 = vmatmul.mubr.bf16.gmra.mxu0 %v2861
        %v3289 = vpop.f32.mrf.mxu0
        %v3290 = vadd.f32 0.0, %v3289
        %v3291 = vpop.f32.mrf.mxu0
        %v3292 = vpop.f32.mrf.mxu0
        %v3293 = vadd.f32 0.0, %v3292
        %v3294 = vpop.f32.mrf.mxu0
        %3295 = vmatprep.mubr.bf16.mxu0 0
        %3296 = vmatmul.mubr.bf16.gmra.mxu0 %v2862
        %v3297 = vpop.f32.mrf.mxu0
        %v3298 = vadd.f32 0.0, %v3297
        %v3299 = vpop.f32.mrf.mxu0
        %v3300 = vpop.f32.mrf.mxu0
        %v3301 = vadd.f32 0.0, %v3300
        %v3302 = vpop.f32.mrf.mxu0
        %3303 = vmatprep.mubr.bf16.mxu0 0
        %3304 = vmatmul.mubr.bf16.gmra.mxu0 %v2863
        %v3305 = vpop.f32.mrf.mxu0
        %v3306 = vadd.f32 0.0, %v3305
        %v3307 = vpop.f32.mrf.mxu0
        %v3308 = vpop.f32.mrf.mxu0
        %v3309 = vadd.f32 0.0, %v3308
        %v3310 = vpop.f32.mrf.mxu0
        %3311 = vmatprep.mubr.bf16.mxu0 0
        %3312 = vmatmul.mubr.bf16.gmra.mxu0 %v2864
        %v3313 = vpop.f32.mrf.mxu0
        %v3314 = vadd.f32 0.0, %v3313
        %v3315 = vpop.f32.mrf.mxu0
        %v3316 = vpop.f32.mrf.mxu0
        %v3317 = vadd.f32 0.0, %v3316
        %v3318 = vpop.f32.mrf.mxu0
        %3319 = vmatprep.mubr.bf16.mxu0 0
        %3320 = vmatmul.mubr.bf16.gmra.mxu0 %v2865
        %v3321 = vpop.f32.mrf.mxu0
        %v3322 = vadd.f32 0.0, %v3321
        %v3323 = vpop.f32.mrf.mxu0
        %v3324 = vpop.f32.mrf.mxu0
        %v3325 = vadd.f32 0.0, %v3324
        %v3326 = vpop.f32.mrf.mxu0
        %3327 = vmatprep.mubr.bf16.mxu0 0
        %3328 = vmatmul.mubr.bf16.gmra.mxu0 %v2866
        %v3329 = vpop.f32.mrf.mxu0
        %v3330 = vadd.f32 0.0, %v3329
        %v3331 = vpop.f32.mrf.mxu0
        %v3332 = vpop.f32.mrf.mxu0
        %v3333 = vadd.f32 0.0, %v3332
        %v3334 = vpop.f32.mrf.mxu0
        %3335 = vdwg.mxu0
        %v3352 = vunpack.c.l.b16 %v2868
        %v3353 = vunpack.c.l.b16 %v2869
        %v3354 = vunpack.c.l.b16 %v2870
        %v3355 = vunpack.c.l.b16 %v2871
        %v3356 = vunpack.c.l.b16 %v2872
        %v3357 = vunpack.c.l.b16 %v2873
        %v3358 = vunpack.c.l.b16 %v2874
        %v3359 = vunpack.c.l.b16 %v2875
        %v3360 = vunpack.c.l.b16 %v2876
        %v3361 = vunpack.c.l.b16 %v2877
        %v3362 = vunpack.c.l.b16 %v2878
        %v3363 = vunpack.c.l.b16 %v2879
        %v3364 = vunpack.c.l.b16 %v2880
        %v3365 = vunpack.c.l.b16 %v2881
        %v3366 = vunpack.c.l.b16 %v2882
        %v3367 = vunpack.c.l.b16 %v2883
        %v3368 = vpack.c.b16 %v3353, %v3352
        %v3369 = vpack.c.b16 %v3355, %v3354
        %v3370 = vpack.c.b16 %v3357, %v3356
        %v3371 = vpack.c.b16 %v3359, %v3358
        %v3372 = vpack.c.b16 %v3361, %v3360
        %v3373 = vpack.c.b16 %v3363, %v3362
        %v3374 = vpack.c.b16 %v3365, %v3364
        %v3375 = vpack.c.b16 %v3367, %v3366
        %3384 = vmatprep.subr.bf16.mxu0 0
        %3385 = vmatpush1.bf16.msra.mxu0 %v3375
        %3386 = vmatprep.subr.bf16.mxu0 0
        %3387 = vmatpush1.bf16.msra.mxu0 %v3374
        %3388 = vmatprep.subr.bf16.mxu0 0
        %3389 = vmatpush1.bf16.msra.mxu0 %v3373
        %3390 = vmatprep.subr.bf16.mxu0 0
        %3391 = vmatpush1.bf16.msra.mxu0 %v3372
        %3392 = vmatprep.subr.bf16.mxu0 0
        %3393 = vmatpush1.bf16.msra.mxu0 %v3371
        %3394 = vmatprep.subr.bf16.mxu0 0
        %3395 = vmatpush1.bf16.msra.mxu0 %v3370
        %3396 = vmatprep.subr.bf16.mxu0 0
        %3397 = vmatpush1.bf16.msra.mxu0 %v3369
        %3398 = vmatprep.subr.bf16.mxu0 0
        %3399 = vmatpush1.bf16.msra.mxu0 %v3368
        %3400 = vmatprep.subr.bf16.mxu0 0
        %3401 = vmatpush2.bf16.msra.mxu0 0
        %3402 = vmatprep.subr.bf16.mxu0 0
        %3403 = vmatpush2.bf16.msra.mxu0 0
        %3404 = vmatprep.subr.bf16.mxu0 0
        %3405 = vmatpush2.bf16.msra.mxu0 0
        %3406 = vmatprep.subr.bf16.mxu0 0
        %3407 = vmatpush2.bf16.msra.mxu0 0
        %3408 = vmatprep.subr.bf16.mxu0 0
        %3409 = vmatpush2.bf16.msra.mxu0 0
        %3410 = vmatprep.subr.bf16.mxu0 0
        %3411 = vmatpush2.bf16.msra.mxu0 0
        %3412 = vmatprep.subr.bf16.mxu0 0
        %3413 = vmatpush2.bf16.msra.mxu0 0
        %3414 = vmatprep.subr.bf16.mxu0 0
        %3415 = vmatpush2.bf16.msra.mxu0 0
        %3416 = vmatprep.mubr.bf16.mxu0 0
        %3417 = vmatmul.mubr.bf16.gmra.mxu0 %v2755
        %v3418 = vpop.f32.mrf.mxu0
        %v3419 = vadd.f32 %v2984, %v3418
        %v3420 = vpop.f32.mrf.mxu0
        %v3421 = vpop.f32.mrf.mxu0
        %v3422 = vadd.f32 %v2987, %v3421
        %v3423 = vpop.f32.mrf.mxu0
        %3424 = vmatprep.mubr.bf16.mxu0 0
        %3425 = vmatmul.mubr.bf16.gmra.mxu0 %v2756
        %v3426 = vpop.f32.mrf.mxu0
        %v3427 = vadd.f32 %v2992, %v3426
        %v3428 = vpop.f32.mrf.mxu0
        %v3429 = vpop.f32.mrf.mxu0
        %v3430 = vadd.f32 %v2995, %v3429
        %v3431 = vpop.f32.mrf.mxu0
        %3432 = vmatprep.mubr.bf16.mxu0 0
        %3433 = vmatmul.mubr.bf16.gmra.mxu0 %v2757
        %v3434 = vpop.f32.mrf.mxu0
        %v3435 = vadd.f32 %v3000, %v3434
        %v3436 = vpop.f32.mrf.mxu0
        %v3437 = vpop.f32.mrf.mxu0
        %v3438 = vadd.f32 %v3003, %v3437
        %v3439 = vpop.f32.mrf.mxu0
        %3440 = vmatprep.mubr.bf16.mxu0 0
        %3441 = vmatmul.mubr.bf16.gmra.mxu0 %v2758
        %v3442 = vpop.f32.mrf.mxu0
        %v3443 = vadd.f32 %v3008, %v3442
        %v3444 = vpop.f32.mrf.mxu0
        %v3445 = vpop.f32.mrf.mxu0
        %v3446 = vadd.f32 %v3011, %v3445
        %v3447 = vpop.f32.mrf.mxu0
        %3448 = vmatprep.mubr.bf16.mxu0 0
        %3449 = vmatmul.mubr.bf16.gmra.mxu0 %v2759
        %v3450 = vpop.f32.mrf.mxu0
        %v3451 = vadd.f32 %v3016, %v3450
        %v3452 = vpop.f32.mrf.mxu0
        %v3453 = vpop.f32.mrf.mxu0
        %v3454 = vadd.f32 %v3019, %v3453
        %v3455 = vpop.f32.mrf.mxu0
        %3456 = vmatprep.mubr.bf16.mxu0 0
        %3457 = vmatmul.mubr.bf16.gmra.mxu0 %v2760
        %v3458 = vpop.f32.mrf.mxu0
        %v3459 = vadd.f32 %v3024, %v3458
        %v3460 = vpop.f32.mrf.mxu0
        %v3461 = vpop.f32.mrf.mxu0
        %v3462 = vadd.f32 %v3027, %v3461
        %v3463 = vpop.f32.mrf.mxu0
        %3464 = vmatprep.mubr.bf16.mxu0 0
        %3465 = vmatmul.mubr.bf16.gmra.mxu0 %v2761
        %v3466 = vpop.f32.mrf.mxu0
        %v3467 = vadd.f32 %v3032, %v3466
        %v3468 = vpop.f32.mrf.mxu0
        %v3469 = vpop.f32.mrf.mxu0
        %v3470 = vadd.f32 %v3035, %v3469
        %v3471 = vpop.f32.mrf.mxu0
        %3472 = vmatprep.mubr.bf16.mxu0 0
        %3473 = vmatmul.mubr.bf16.gmra.mxu0 %v2762
        %v3474 = vpop.f32.mrf.mxu0
        %v3475 = vadd.f32 %v3040, %v3474
        %v3476 = vpop.f32.mrf.mxu0
        %v3477 = vpop.f32.mrf.mxu0
        %v3478 = vadd.f32 %v3043, %v3477
        %v3479 = vpop.f32.mrf.mxu0
        %3480 = vmatprep.mubr.bf16.mxu0 0
        %3481 = vmatmul.mubr.bf16.gmra.mxu0 %v2763
        %v3482 = vpop.f32.mrf.mxu0
        %v3483 = vadd.f32 %v3048, %v3482
        %v3484 = vpop.f32.mrf.mxu0
        %v3485 = vpop.f32.mrf.mxu0
        %v3486 = vadd.f32 %v3051, %v3485
        %v3487 = vpop.f32.mrf.mxu0
        %3488 = vmatprep.mubr.bf16.mxu0 0
        %3489 = vmatmul.mubr.bf16.gmra.mxu0 %v2764
        %v3490 = vpop.f32.mrf.mxu0
        %v3491 = vadd.f32 %v3056, %v3490
        %v3492 = vpop.f32.mrf.mxu0
        %v3493 = vpop.f32.mrf.mxu0
        %v3494 = vadd.f32 %v3059, %v3493
        %v3495 = vpop.f32.mrf.mxu0
        %3496 = vmatprep.mubr.bf16.mxu0 0
        %3497 = vmatmul.mubr.bf16.gmra.mxu0 %v2765
        %v3498 = vpop.f32.mrf.mxu0
        %v3499 = vadd.f32 %v3064, %v3498
        %v3500 = vpop.f32.mrf.mxu0
        %v3501 = vpop.f32.mrf.mxu0
        %v3502 = vadd.f32 %v3067, %v3501
        %v3503 = vpop.f32.mrf.mxu0
        %3504 = vmatprep.mubr.bf16.mxu0 0
        %3505 = vmatmul.mubr.bf16.gmra.mxu0 %v2766
        %v3506 = vpop.f32.mrf.mxu0
        %v3507 = vadd.f32 %v3072, %v3506
        %v3508 = vpop.f32.mrf.mxu0
        %v3509 = vpop.f32.mrf.mxu0
        %v3510 = vadd.f32 %v3075, %v3509
        %v3511 = vpop.f32.mrf.mxu0
        %3512 = vmatprep.mubr.bf16.mxu0 0
        %3513 = vmatmul.mubr.bf16.gmra.mxu0 %v2767
        %v3514 = vpop.f32.mrf.mxu0
        %v3515 = vadd.f32 %v3080, %v3514
        %v3516 = vpop.f32.mrf.mxu0
        %v3517 = vpop.f32.mrf.mxu0
        %v3518 = vadd.f32 %v3083, %v3517
        %v3519 = vpop.f32.mrf.mxu0
        %3520 = vmatprep.mubr.bf16.mxu0 0
        %3521 = vmatmul.mubr.bf16.gmra.mxu0 %v2768
        %v3522 = vpop.f32.mrf.mxu0
        %v3523 = vadd.f32 %v3088, %v3522
        %v3524 = vpop.f32.mrf.mxu0
        %v3525 = vpop.f32.mrf.mxu0
        %v3526 = vadd.f32 %v3091, %v3525
        %v3527 = vpop.f32.mrf.mxu0
        %3528 = vmatprep.mubr.bf16.mxu0 0
        %3529 = vmatmul.mubr.bf16.gmra.mxu0 %v2769
        %v3530 = vpop.f32.mrf.mxu0
        %v3531 = vadd.f32 %v3096, %v3530
        %v3532 = vpop.f32.mrf.mxu0
        %v3533 = vpop.f32.mrf.mxu0
        %v3534 = vadd.f32 %v3099, %v3533
        %v3535 = vpop.f32.mrf.mxu0
        %3536 = vmatprep.mubr.bf16.mxu0 0
        %3537 = vmatmul.mubr.bf16.gmra.mxu0 %v2770
        %v3538 = vpop.f32.mrf.mxu0
        %v3539 = vadd.f32 %v3104, %v3538
        %v3540 = vpop.f32.mrf.mxu0
        %v3541 = vpop.f32.mrf.mxu0
        %v3542 = vadd.f32 %v3107, %v3541
        %v3543 = vpop.f32.mrf.mxu0
        %3544 = vdwg.mxu0
        %v3545 = vadd.f32 %v3419, %v3210
        %v3546 = vadd.f32 %v3422, %v3213
        %v3547 = vadd.f32 %v3427, %v3218
        %v3548 = vadd.f32 %v3430, %v3221
        %v3549 = vadd.f32 %v3435, %v3226
        %v3550 = vadd.f32 %v3438, %v3229
        %v3551 = vadd.f32 %v3443, %v3234
        %v3552 = vadd.f32 %v3446, %v3237
        %v3553 = vadd.f32 %v3451, %v3242
        %v3554 = vadd.f32 %v3454, %v3245
        %v3555 = vadd.f32 %v3459, %v3250
        %v3556 = vadd.f32 %v3462, %v3253
        %v3557 = vadd.f32 %v3467, %v3258
        %v3558 = vadd.f32 %v3470, %v3261
        %v3559 = vadd.f32 %v3475, %v3266
        %v3560 = vadd.f32 %v3478, %v3269
        %v3561 = vadd.f32 %v3483, %v3274
        %v3562 = vadd.f32 %v3486, %v3277
        %v3563 = vadd.f32 %v3491, %v3282
        %v3564 = vadd.f32 %v3494, %v3285
        %v3565 = vadd.f32 %v3499, %v3290
        %v3566 = vadd.f32 %v3502, %v3293
        %v3567 = vadd.f32 %v3507, %v3298
        %v3568 = vadd.f32 %v3510, %v3301
        %v3569 = vadd.f32 %v3515, %v3306
        %v3570 = vadd.f32 %v3518, %v3309
        %v3571 = vadd.f32 %v3523, %v3314
        %v3572 = vadd.f32 %v3526, %v3317
        %v3573 = vadd.f32 %v3531, %v3322
        %v3574 = vadd.f32 %v3534, %v3325
        %v3575 = vadd.f32 %v3539, %v3330
        %v3576 = vadd.f32 %v3542, %v3333
        %s3577 = scalar_lea.vmem %s2, 2
        %v3578 = vld [vmem:[%s3577] sm:$0x1]
        %v3580 = vlaneseq
        %v3581 = vshrl.u32 %v3580, 7
        %v3582 = vsub.s32 0, %v3581
        %v3583 = vrot.slane %v3578, %v3582
        %v3585 = vadd.f32 %v3545, %v3583
        %v3586 = vadd.f32 %v3546, %v3583
        %v3587 = vadd.f32 %v3547, %v3583
        %v3588 = vadd.f32 %v3548, %v3583
        %v3589 = vadd.f32 %v3549, %v3583
        %v3590 = vadd.f32 %v3550, %v3583
        %v3591 = vadd.f32 %v3551, %v3583
        %v3592 = vadd.f32 %v3552, %v3583
        %v3593 = vadd.f32 %v3553, %v3583
        %v3594 = vadd.f32 %v3554, %v3583
        %v3595 = vadd.f32 %v3555, %v3583
        %v3596 = vadd.f32 %v3556, %v3583
        %v3597 = vadd.f32 %v3557, %v3583
        %v3598 = vadd.f32 %v3558, %v3583
        %v3599 = vadd.f32 %v3559, %v3583
        %v3600 = vadd.f32 %v3560, %v3583
        %v3601 = vadd.f32 %v3561, %v3583
        %v3602 = vadd.f32 %v3562, %v3583
        %v3603 = vadd.f32 %v3563, %v3583
        %v3604 = vadd.f32 %v3564, %v3583
        %v3605 = vadd.f32 %v3565, %v3583
        %v3606 = vadd.f32 %v3566, %v3583
        %v3607 = vadd.f32 %v3567, %v3583
        %v3608 = vadd.f32 %v3568, %v3583
        %v3609 = vadd.f32 %v3569, %v3583
        %v3610 = vadd.f32 %v3570, %v3583
        %v3611 = vadd.f32 %v3571, %v3583
        %v3612 = vadd.f32 %v3572, %v3583
        %v3613 = vadd.f32 %v3573, %v3583
        %v3614 = vadd.f32 %v3574, %v3583
        %v3615 = vadd.f32 %v3575, %v3583
        %v3616 = vadd.f32 %v3576, %v3583
        %v3617 = vmax.f32 %v3585, 0.0
        %v3618 = vmax.f32 %v3586, 0.0
        %v3619 = vmax.f32 %v3587, 0.0
        %v3620 = vmax.f32 %v3588, 0.0
        %v3621 = vmax.f32 %v3589, 0.0
        %v3622 = vmax.f32 %v3590, 0.0
        %v3623 = vmax.f32 %v3591, 0.0
        %v3624 = vmax.f32 %v3592, 0.0
        %v3625 = vmax.f32 %v3593, 0.0
        %v3626 = vmax.f32 %v3594, 0.0
        %v3627 = vmax.f32 %v3595, 0.0
        %v3628 = vmax.f32 %v3596, 0.0
        %v3629 = vmax.f32 %v3597, 0.0
        %v3630 = vmax.f32 %v3598, 0.0
        %v3631 = vmax.f32 %v3599, 0.0
        %v3632 = vmax.f32 %v3600, 0.0
        %v3633 = vmax.f32 %v3601, 0.0
        %v3634 = vmax.f32 %v3602, 0.0
        %v3635 = vmax.f32 %v3603, 0.0
        %v3636 = vmax.f32 %v3604, 0.0
        %v3637 = vmax.f32 %v3605, 0.0
        %v3638 = vmax.f32 %v3606, 0.0
        %v3639 = vmax.f32 %v3607, 0.0
        %v3640 = vmax.f32 %v3608, 0.0
        %v3641 = vmax.f32 %v3609, 0.0
        %v3642 = vmax.f32 %v3610, 0.0
        %v3643 = vmax.f32 %v3611, 0.0
        %v3644 = vmax.f32 %v3612, 0.0
        %v3645 = vmax.f32 %v3613, 0.0
        %v3646 = vmax.f32 %v3614, 0.0
        %v3647 = vmax.f32 %v3615, 0.0
        %v3648 = vmax.f32 %v3616, 0.0
        %3649 = vst [vmem:[#allocation2 + $0x20] sm:$0xff] %v3617
        %3650 = vst [vmem:[#allocation2 + $0x28] sm:$0xff] %v3618
        %3651 = vst [vmem:[#allocation2 + $0x30] sm:$0xff] %v3619
        %3652 = vst [vmem:[#allocation2 + $0x38] sm:$0xff] %v3620
        %3653 = vst [vmem:[#allocation2 + $0x40] sm:$0xff] %v3621
        %3654 = vst [vmem:[#allocation2 + $0x48] sm:$0xff] %v3622
        %3655 = vst [vmem:[#allocation2 + $0x50] sm:$0xff] %v3623
        %3656 = vst [vmem:[#allocation2 + $0x58] sm:$0xff] %v3624
        %3657 = vst [vmem:[#allocation2 + $0x60] sm:$0xff] %v3625
        %3658 = vst [vmem:[#allocation2 + $0x68] sm:$0xff] %v3626
        %3659 = vst [vmem:[#allocation2 + $0x70] sm:$0xff] %v3627
        %3660 = vst [vmem:[#allocation2 + $0x78] sm:$0xff] %v3628
        %3661 = vst [vmem:[#allocation2 + $0x80] sm:$0xff] %v3629
        %3662 = vst [vmem:[#allocation2 + $0x88] sm:$0xff] %v3630
        %3663 = vst [vmem:[#allocation2 + $0x90] sm:$0xff] %v3631
        %3664 = vst [vmem:[#allocation2 + $0x98] sm:$0xff] %v3632
        %3665 = vst [vmem:[#allocation2 + $0xa0] sm:$0xff] %v3633
        %3666 = vst [vmem:[#allocation2 + $0xa8] sm:$0xff] %v3634
        %3667 = vst [vmem:[#allocation2 + $0xb0] sm:$0xff] %v3635
        %3668 = vst [vmem:[#allocation2 + $0xb8] sm:$0xff] %v3636
        %3669 = vst [vmem:[#allocation2 + $0xc0] sm:$0xff] %v3637
        %3670 = vst [vmem:[#allocation2 + $0xc8] sm:$0xff] %v3638
        %3671 = vst [vmem:[#allocation2 + $0xd0] sm:$0xff] %v3639
        %3672 = vst [vmem:[#allocation2 + $0xd8] sm:$0xff] %v3640
        %3673 = vst [vmem:[#allocation2 + $0xe0] sm:$0xff] %v3641
        %3674 = vst [vmem:[#allocation2 + $0xe8] sm:$0xff] %v3642
        %3675 = vst [vmem:[#allocation2 + $0xf0] sm:$0xff] %v3643
        %3676 = vst [vmem:[#allocation2 + $0xf8] sm:$0xff] %v3644
        %3677 = vst [vmem:[#allocation2 + $0x100] sm:$0xff] %v3645
        %3678 = vst [vmem:[#allocation2 + $0x108] sm:$0xff] %v3646
        %3679 = vst [vmem:[#allocation2 + $0x110] sm:$0xff] %v3647
        %3680 = vst [vmem:[#allocation2 + $0x118] sm:$0xff] %v3648
        %v3681 = vpack.c.bf16 %v3618, %v3617
        %v3682 = vpack.c.bf16 %v3620, %v3619
        %v3683 = vpack.c.bf16 %v3622, %v3621
        %v3684 = vpack.c.bf16 %v3624, %v3623
        %v3685 = vpack.c.bf16 %v3626, %v3625
        %v3686 = vpack.c.bf16 %v3628, %v3627
        %v3687 = vpack.c.bf16 %v3630, %v3629
        %v3688 = vpack.c.bf16 %v3632, %v3631
        %v3689 = vpack.c.bf16 %v3634, %v3633
        %v3690 = vpack.c.bf16 %v3636, %v3635
        %v3691 = vpack.c.bf16 %v3638, %v3637
        %v3692 = vpack.c.bf16 %v3640, %v3639
        %v3693 = vpack.c.bf16 %v3642, %v3641
        %v3694 = vpack.c.bf16 %v3644, %v3643
        %v3695 = vpack.c.bf16 %v3646, %v3645
        %v3696 = vpack.c.bf16 %v3648, %v3647
        %v3697 = vld [vmem:[#allocation2 + $0x1e] sm:$0xff]
        %v3698 = vld [vmem:[#allocation2 + $0x26] sm:$0xff]
        %v3699 = vld [vmem:[#allocation2 + $0x2e] sm:$0xff]
        %v3700 = vld [vmem:[#allocation2 + $0x36] sm:$0xff]
        %v3701 = vld [vmem:[#allocation2 + $0x3e] sm:$0xff]
        %v3702 = vld [vmem:[#allocation2 + $0x46] sm:$0xff]
        %v3703 = vld [vmem:[#allocation2 + $0x4e] sm:$0xff]
        %v3704 = vld [vmem:[#allocation2 + $0x56] sm:$0xff]
        %v3705 = vld [vmem:[#allocation2 + $0x5e] sm:$0xff]
        %v3706 = vld [vmem:[#allocation2 + $0x66] sm:$0xff]
        %v3707 = vld [vmem:[#allocation2 + $0x6e] sm:$0xff]
        %v3708 = vld [vmem:[#allocation2 + $0x76] sm:$0xff]
        %v3709 = vld [vmem:[#allocation2 + $0x7e] sm:$0xff]
        %v3710 = vld [vmem:[#allocation2 + $0x86] sm:$0xff]
        %v3711 = vld [vmem:[#allocation2 + $0x8e] sm:$0xff]
        %v3712 = vld [vmem:[#allocation2 + $0x96] sm:$0xff]
        %v3713 = vld [vmem:[#allocation2 + $0x9e] sm:$0xff]
        %v3714 = vld [vmem:[#allocation2 + $0xa6] sm:$0xff]
        %v3715 = vld [vmem:[#allocation2 + $0xae] sm:$0xff]
        %v3716 = vld [vmem:[#allocation2 + $0xb6] sm:$0xff]
        %v3717 = vld [vmem:[#allocation2 + $0xbe] sm:$0xff]
        %v3718 = vld [vmem:[#allocation2 + $0xc6] sm:$0xff]
        %v3719 = vld [vmem:[#allocation2 + $0xce] sm:$0xff]
        %v3720 = vld [vmem:[#allocation2 + $0xd6] sm:$0xff]
        %v3721 = vld [vmem:[#allocation2 + $0xde] sm:$0xff]
        %v3722 = vld [vmem:[#allocation2 + $0xe6] sm:$0xff]
        %v3723 = vld [vmem:[#allocation2 + $0xee] sm:$0xff]
        %v3724 = vld [vmem:[#allocation2 + $0xf6] sm:$0xff]
        %v3725 = vld [vmem:[#allocation2 + $0xfe] sm:$0xff]
        %v3726 = vld [vmem:[#allocation2 + $0x106] sm:$0xff]
        %v3727 = vld [vmem:[#allocation2 + $0x10e] sm:$0xff]
        %v3728 = vld [vmem:[#allocation2 + $0x116] sm:$0xff]
        %v3729 = vpack.c.bf16 %v3698, %v3697
        %v3730 = vpack.c.bf16 %v3700, %v3699
        %v3731 = vpack.c.bf16 %v3702, %v3701
        %v3732 = vpack.c.bf16 %v3704, %v3703
        %v3733 = vpack.c.bf16 %v3706, %v3705
        %v3734 = vpack.c.bf16 %v3708, %v3707
        %v3735 = vpack.c.bf16 %v3710, %v3709
        %v3736 = vpack.c.bf16 %v3712, %v3711
        %v3737 = vpack.c.bf16 %v3714, %v3713
        %v3738 = vpack.c.bf16 %v3716, %v3715
        %v3739 = vpack.c.bf16 %v3718, %v3717
        %v3740 = vpack.c.bf16 %v3720, %v3719
        %v3741 = vpack.c.bf16 %v3722, %v3721
        %v3742 = vpack.c.bf16 %v3724, %v3723
        %v3743 = vpack.c.bf16 %v3726, %v3725
        %v3744 = vpack.c.bf16 %v3728, %v3727
        %v3745 = vld [vmem:[#allocation2 + $0x22] sm:$0xff]
        %v3746 = vld [vmem:[#allocation2 + $0x2a] sm:$0xff]
        %v3747 = vld [vmem:[#allocation2 + $0x32] sm:$0xff]
        %v3748 = vld [vmem:[#allocation2 + $0x3a] sm:$0xff]
        %v3749 = vld [vmem:[#allocation2 + $0x42] sm:$0xff]
        %v3750 = vld [vmem:[#allocation2 + $0x4a] sm:$0xff]
        %v3751 = vld [vmem:[#allocation2 + $0x52] sm:$0xff]
        %v3752 = vld [vmem:[#allocation2 + $0x5a] sm:$0xff]
        %v3753 = vld [vmem:[#allocation2 + $0x62] sm:$0xff]
        %v3754 = vld [vmem:[#allocation2 + $0x6a] sm:$0xff]
        %v3755 = vld [vmem:[#allocation2 + $0x72] sm:$0xff]
        %v3756 = vld [vmem:[#allocation2 + $0x7a] sm:$0xff]
        %v3757 = vld [vmem:[#allocation2 + $0x82] sm:$0xff]
        %v3758 = vld [vmem:[#allocation2 + $0x8a] sm:$0xff]
        %v3759 = vld [vmem:[#allocation2 + $0x92] sm:$0xff]
        %v3760 = vld [vmem:[#allocation2 + $0x9a] sm:$0xff]
        %v3761 = vld [vmem:[#allocation2 + $0xa2] sm:$0xff]
        %v3762 = vld [vmem:[#allocation2 + $0xaa] sm:$0xff]
        %v3763 = vld [vmem:[#allocation2 + $0xb2] sm:$0xff]
        %v3764 = vld [vmem:[#allocation2 + $0xba] sm:$0xff]
        %v3765 = vld [vmem:[#allocation2 + $0xc2] sm:$0xff]
        %v3766 = vld [vmem:[#allocation2 + $0xca] sm:$0xff]
        %v3767 = vld [vmem:[#allocation2 + $0xd2] sm:$0xff]
        %v3768 = vld [vmem:[#allocation2 + $0xda] sm:$0xff]
        %v3769 = vld [vmem:[#allocation2 + $0xe2] sm:$0xff]
        %v3770 = vld [vmem:[#allocation2 + $0xea] sm:$0xff]
        %v3771 = vld [vmem:[#allocation2 + $0xf2] sm:$0xff]
        %v3772 = vld [vmem:[#allocation2 + $0xfa] sm:$0xff]
        %v3773 = vld [vmem:[#allocation2 + $0x102] sm:$0xff]
        %v3774 = vld [vmem:[#allocation2 + $0x10a] sm:$0xff]
        %v3775 = vld [vmem:[#allocation2 + $0x112] sm:$0xff]
        %v3776 = vld [vmem:[#allocation2 + $0x11a] sm:$0xff]
        %v3777 = vpack.c.bf16 %v3746, %v3745
        %v3778 = vpack.c.bf16 %v3748, %v3747
        %v3779 = vpack.c.bf16 %v3750, %v3749
        %v3780 = vpack.c.bf16 %v3752, %v3751
        %v3781 = vpack.c.bf16 %v3754, %v3753
        %v3782 = vpack.c.bf16 %v3756, %v3755
        %v3783 = vpack.c.bf16 %v3758, %v3757
        %v3784 = vpack.c.bf16 %v3760, %v3759
        %v3785 = vpack.c.bf16 %v3762, %v3761
        %v3786 = vpack.c.bf16 %v3764, %v3763
        %v3787 = vpack.c.bf16 %v3766, %v3765
        %v3788 = vpack.c.bf16 %v3768, %v3767
        %v3789 = vpack.c.bf16 %v3770, %v3769
        %v3790 = vpack.c.bf16 %v3772, %v3771
        %v3791 = vpack.c.bf16 %v3774, %v3773
        %v3792 = vpack.c.bf16 %v3776, %v3775
        %s3793 = scalar_lea.vmem %s1, 640
        %v3794 = vld [vmem:[%s3793] sm:$0xf]
        %v3795 = vld [vmem:[%s3793 + $0x4] sm:$0xf]
        %v3796 = vld [vmem:[%s3793 + $0x8] sm:$0xf]
        %v3797 = vld [vmem:[%s3793 + $0xc] sm:$0xf]
        %v3798 = vld [vmem:[%s3793 + $0x10] sm:$0xf]
        %v3799 = vld [vmem:[%s3793 + $0x14] sm:$0xf]
        %v3800 = vld [vmem:[%s3793 + $0x18] sm:$0xf]
        %v3801 = vld [vmem:[%s3793 + $0x1c] sm:$0xf]
        %v3802 = vld [vmem:[%s3793 + $0x20] sm:$0xf]
        %v3803 = vld [vmem:[%s3793 + $0x24] sm:$0xf]
        %v3804 = vld [vmem:[%s3793 + $0x28] sm:$0xf]
        %v3805 = vld [vmem:[%s3793 + $0x2c] sm:$0xf]
        %v3806 = vld [vmem:[%s3793 + $0x30] sm:$0xf]
        %v3807 = vld [vmem:[%s3793 + $0x34] sm:$0xf]
        %v3808 = vld [vmem:[%s3793 + $0x38] sm:$0xf]
        %v3809 = vld [vmem:[%s3793 + $0x3c] sm:$0xf]
        %s3810 = scalar_lea.vmem %s1, 576
        %v3811 = vld [vmem:[%s3810] sm:$0xf]
        %v3812 = vld [vmem:[%s3810 + $0x4] sm:$0xf]
        %v3813 = vld [vmem:[%s3810 + $0x8] sm:$0xf]
        %v3814 = vld [vmem:[%s3810 + $0xc] sm:$0xf]
        %v3815 = vld [vmem:[%s3810 + $0x10] sm:$0xf]
        %v3816 = vld [vmem:[%s3810 + $0x14] sm:$0xf]
        %v3817 = vld [vmem:[%s3810 + $0x18] sm:$0xf]
        %v3818 = vld [vmem:[%s3810 + $0x1c] sm:$0xf]
        %v3819 = vld [vmem:[%s3810 + $0x20] sm:$0xf]
        %v3820 = vld [vmem:[%s3810 + $0x24] sm:$0xf]
        %v3821 = vld [vmem:[%s3810 + $0x28] sm:$0xf]
        %v3822 = vld [vmem:[%s3810 + $0x2c] sm:$0xf]
        %v3823 = vld [vmem:[%s3810 + $0x30] sm:$0xf]
        %v3824 = vld [vmem:[%s3810 + $0x34] sm:$0xf]
        %v3825 = vld [vmem:[%s3810 + $0x38] sm:$0xf]
        %v3826 = vld [vmem:[%s3810 + $0x3c] sm:$0xf]
        %v3843 = vunpack.c.l.b16 %v3811
        %v3844 = vunpack.c.l.b16 %v3812
        %v3845 = vunpack.c.l.b16 %v3813
        %v3846 = vunpack.c.l.b16 %v3814
        %v3847 = vunpack.c.l.b16 %v3815
        %v3848 = vunpack.c.l.b16 %v3816
        %v3849 = vunpack.c.l.b16 %v3817
        %v3850 = vunpack.c.l.b16 %v3818
        %v3851 = vunpack.c.l.b16 %v3819
        %v3852 = vunpack.c.l.b16 %v3820
        %v3853 = vunpack.c.l.b16 %v3821
        %v3854 = vunpack.c.l.b16 %v3822
        %v3855 = vunpack.c.l.b16 %v3823
        %v3856 = vunpack.c.l.b16 %v3824
        %v3857 = vunpack.c.l.b16 %v3825
        %v3858 = vunpack.c.l.b16 %v3826
        %v3859 = vpack.c.b16 %v3844, %v3843
        %v3860 = vpack.c.b16 %v3846, %v3845
        %v3861 = vpack.c.b16 %v3848, %v3847
        %v3862 = vpack.c.b16 %v3850, %v3849
        %v3863 = vpack.c.b16 %v3852, %v3851
        %v3864 = vpack.c.b16 %v3854, %v3853
        %v3865 = vpack.c.b16 %v3856, %v3855
        %v3866 = vpack.c.b16 %v3858, %v3857
        %3875 = vmatprep.subr.bf16.mxu0 0
        %3876 = vmatpush1.bf16.msra.mxu0 %v3866
        %3877 = vmatprep.subr.bf16.mxu0 0
        %3878 = vmatpush1.bf16.msra.mxu0 %v3865
        %3879 = vmatprep.subr.bf16.mxu0 0
        %3880 = vmatpush1.bf16.msra.mxu0 %v3864
        %3881 = vmatprep.subr.bf16.mxu0 0
        %3882 = vmatpush1.bf16.msra.mxu0 %v3863
        %3883 = vmatprep.subr.bf16.mxu0 0
        %3884 = vmatpush1.bf16.msra.mxu0 %v3862
        %3885 = vmatprep.subr.bf16.mxu0 0
        %3886 = vmatpush1.bf16.msra.mxu0 %v3861
        %3887 = vmatprep.subr.bf16.mxu0 0
        %3888 = vmatpush1.bf16.msra.mxu0 %v3860
        %3889 = vmatprep.subr.bf16.mxu0 0
        %3890 = vmatpush1.bf16.msra.mxu0 %v3859
        %3891 = vmatprep.subr.bf16.mxu0 0
        %3892 = vmatpush2.bf16.msra.mxu0 0
        %3893 = vmatprep.subr.bf16.mxu0 0
        %3894 = vmatpush2.bf16.msra.mxu0 0
        %3895 = vmatprep.subr.bf16.mxu0 0
        %3896 = vmatpush2.bf16.msra.mxu0 0
        %3897 = vmatprep.subr.bf16.mxu0 0
        %3898 = vmatpush2.bf16.msra.mxu0 0
        %3899 = vmatprep.subr.bf16.mxu0 0
        %3900 = vmatpush2.bf16.msra.mxu0 0
        %3901 = vmatprep.subr.bf16.mxu0 0
        %3902 = vmatpush2.bf16.msra.mxu0 0
        %3903 = vmatprep.subr.bf16.mxu0 0
        %3904 = vmatpush2.bf16.msra.mxu0 0
        %3905 = vmatprep.subr.bf16.mxu0 0
        %3906 = vmatpush2.bf16.msra.mxu0 0
        %3907 = vmatprep.mubr.bf16.mxu0 0
        %3908 = vmatmul.mubr.bf16.gmra.mxu0 %v3729
        %v3909 = vpop.f32.mrf.mxu0
        %v3910 = vadd.f32 0.0, %v3909
        %v3911 = vpop.f32.mrf.mxu0
        %v3912 = vpop.f32.mrf.mxu0
        %v3913 = vadd.f32 0.0, %v3912
        %v3914 = vpop.f32.mrf.mxu0
        %3915 = vmatprep.mubr.bf16.mxu0 0
        %3916 = vmatmul.mubr.bf16.gmra.mxu0 %v3730
        %v3917 = vpop.f32.mrf.mxu0
        %v3918 = vadd.f32 0.0, %v3917
        %v3919 = vpop.f32.mrf.mxu0
        %v3920 = vpop.f32.mrf.mxu0
        %v3921 = vadd.f32 0.0, %v3920
        %v3922 = vpop.f32.mrf.mxu0
        %3923 = vmatprep.mubr.bf16.mxu0 0
        %3924 = vmatmul.mubr.bf16.gmra.mxu0 %v3731
        %v3925 = vpop.f32.mrf.mxu0
        %v3926 = vadd.f32 0.0, %v3925
        %v3927 = vpop.f32.mrf.mxu0
        %v3928 = vpop.f32.mrf.mxu0
        %v3929 = vadd.f32 0.0, %v3928
        %v3930 = vpop.f32.mrf.mxu0
        %3931 = vmatprep.mubr.bf16.mxu0 0
        %3932 = vmatmul.mubr.bf16.gmra.mxu0 %v3732
        %v3933 = vpop.f32.mrf.mxu0
        %v3934 = vadd.f32 0.0, %v3933
        %v3935 = vpop.f32.mrf.mxu0
        %v3936 = vpop.f32.mrf.mxu0
        %v3937 = vadd.f32 0.0, %v3936
        %v3938 = vpop.f32.mrf.mxu0
        %3939 = vmatprep.mubr.bf16.mxu0 0
        %3940 = vmatmul.mubr.bf16.gmra.mxu0 %v3733
        %v3941 = vpop.f32.mrf.mxu0
        %v3942 = vadd.f32 0.0, %v3941
        %v3943 = vpop.f32.mrf.mxu0
        %v3944 = vpop.f32.mrf.mxu0
        %v3945 = vadd.f32 0.0, %v3944
        %v3946 = vpop.f32.mrf.mxu0
        %3947 = vmatprep.mubr.bf16.mxu0 0
        %3948 = vmatmul.mubr.bf16.gmra.mxu0 %v3734
        %v3949 = vpop.f32.mrf.mxu0
        %v3950 = vadd.f32 0.0, %v3949
        %v3951 = vpop.f32.mrf.mxu0
        %v3952 = vpop.f32.mrf.mxu0
        %v3953 = vadd.f32 0.0, %v3952
        %v3954 = vpop.f32.mrf.mxu0
        %3955 = vmatprep.mubr.bf16.mxu0 0
        %3956 = vmatmul.mubr.bf16.gmra.mxu0 %v3735
        %v3957 = vpop.f32.mrf.mxu0
        %v3958 = vadd.f32 0.0, %v3957
        %v3959 = vpop.f32.mrf.mxu0
        %v3960 = vpop.f32.mrf.mxu0
        %v3961 = vadd.f32 0.0, %v3960
        %v3962 = vpop.f32.mrf.mxu0
        %3963 = vmatprep.mubr.bf16.mxu0 0
        %3964 = vmatmul.mubr.bf16.gmra.mxu0 %v3736
        %v3965 = vpop.f32.mrf.mxu0
        %v3966 = vadd.f32 0.0, %v3965
        %v3967 = vpop.f32.mrf.mxu0
        %v3968 = vpop.f32.mrf.mxu0
        %v3969 = vadd.f32 0.0, %v3968
        %v3970 = vpop.f32.mrf.mxu0
        %3971 = vmatprep.mubr.bf16.mxu0 0
        %3972 = vmatmul.mubr.bf16.gmra.mxu0 %v3737
        %v3973 = vpop.f32.mrf.mxu0
        %v3974 = vadd.f32 0.0, %v3973
        %v3975 = vpop.f32.mrf.mxu0
        %v3976 = vpop.f32.mrf.mxu0
        %v3977 = vadd.f32 0.0, %v3976
        %v3978 = vpop.f32.mrf.mxu0
        %3979 = vmatprep.mubr.bf16.mxu0 0
        %3980 = vmatmul.mubr.bf16.gmra.mxu0 %v3738
        %v3981 = vpop.f32.mrf.mxu0
        %v3982 = vadd.f32 0.0, %v3981
        %v3983 = vpop.f32.mrf.mxu0
        %v3984 = vpop.f32.mrf.mxu0
        %v3985 = vadd.f32 0.0, %v3984
        %v3986 = vpop.f32.mrf.mxu0
        %3987 = vmatprep.mubr.bf16.mxu0 0
        %3988 = vmatmul.mubr.bf16.gmra.mxu0 %v3739
        %v3989 = vpop.f32.mrf.mxu0
        %v3990 = vadd.f32 0.0, %v3989
        %v3991 = vpop.f32.mrf.mxu0
        %v3992 = vpop.f32.mrf.mxu0
        %v3993 = vadd.f32 0.0, %v3992
        %v3994 = vpop.f32.mrf.mxu0
        %3995 = vmatprep.mubr.bf16.mxu0 0
        %3996 = vmatmul.mubr.bf16.gmra.mxu0 %v3740
        %v3997 = vpop.f32.mrf.mxu0
        %v3998 = vadd.f32 0.0, %v3997
        %v3999 = vpop.f32.mrf.mxu0
        %v4000 = vpop.f32.mrf.mxu0
        %v4001 = vadd.f32 0.0, %v4000
        %v4002 = vpop.f32.mrf.mxu0
        %4003 = vmatprep.mubr.bf16.mxu0 0
        %4004 = vmatmul.mubr.bf16.gmra.mxu0 %v3741
        %v4005 = vpop.f32.mrf.mxu0
        %v4006 = vadd.f32 0.0, %v4005
        %v4007 = vpop.f32.mrf.mxu0
        %v4008 = vpop.f32.mrf.mxu0
        %v4009 = vadd.f32 0.0, %v4008
        %v4010 = vpop.f32.mrf.mxu0
        %4011 = vmatprep.mubr.bf16.mxu0 0
        %4012 = vmatmul.mubr.bf16.gmra.mxu0 %v3742
        %v4013 = vpop.f32.mrf.mxu0
        %v4014 = vadd.f32 0.0, %v4013
        %v4015 = vpop.f32.mrf.mxu0
        %v4016 = vpop.f32.mrf.mxu0
        %v4017 = vadd.f32 0.0, %v4016
        %v4018 = vpop.f32.mrf.mxu0
        %4019 = vmatprep.mubr.bf16.mxu0 0
        %4020 = vmatmul.mubr.bf16.gmra.mxu0 %v3743
        %v4021 = vpop.f32.mrf.mxu0
        %v4022 = vadd.f32 0.0, %v4021
        %v4023 = vpop.f32.mrf.mxu0
        %v4024 = vpop.f32.mrf.mxu0
        %v4025 = vadd.f32 0.0, %v4024
        %v4026 = vpop.f32.mrf.mxu0
        %4027 = vmatprep.mubr.bf16.mxu0 0
        %4028 = vmatmul.mubr.bf16.gmra.mxu0 %v3744
        %v4029 = vpop.f32.mrf.mxu0
        %v4030 = vadd.f32 0.0, %v4029
        %v4031 = vpop.f32.mrf.mxu0
        %v4032 = vpop.f32.mrf.mxu0
        %v4033 = vadd.f32 0.0, %v4032
        %v4034 = vpop.f32.mrf.mxu0
        %4035 = vdwg.mxu0
        %s4036 = scalar_lea.vmem %s1, 704
        %v4037 = vld [vmem:[%s4036] sm:$0xf]
        %v4038 = vld [vmem:[%s4036 + $0x4] sm:$0xf]
        %v4039 = vld [vmem:[%s4036 + $0x8] sm:$0xf]
        %v4040 = vld [vmem:[%s4036 + $0xc] sm:$0xf]
        %v4041 = vld [vmem:[%s4036 + $0x10] sm:$0xf]
        %v4042 = vld [vmem:[%s4036 + $0x14] sm:$0xf]
        %v4043 = vld [vmem:[%s4036 + $0x18] sm:$0xf]
        %v4044 = vld [vmem:[%s4036 + $0x1c] sm:$0xf]
        %v4045 = vld [vmem:[%s4036 + $0x20] sm:$0xf]
        %v4046 = vld [vmem:[%s4036 + $0x24] sm:$0xf]
        %v4047 = vld [vmem:[%s4036 + $0x28] sm:$0xf]
        %v4048 = vld [vmem:[%s4036 + $0x2c] sm:$0xf]
        %v4049 = vld [vmem:[%s4036 + $0x30] sm:$0xf]
        %v4050 = vld [vmem:[%s4036 + $0x34] sm:$0xf]
        %v4051 = vld [vmem:[%s4036 + $0x38] sm:$0xf]
        %v4052 = vld [vmem:[%s4036 + $0x3c] sm:$0xf]
        %v4069 = vunpack.c.l.b16 %v4037
        %v4070 = vunpack.c.l.b16 %v4038
        %v4071 = vunpack.c.l.b16 %v4039
        %v4072 = vunpack.c.l.b16 %v4040
        %v4073 = vunpack.c.l.b16 %v4041
        %v4074 = vunpack.c.l.b16 %v4042
        %v4075 = vunpack.c.l.b16 %v4043
        %v4076 = vunpack.c.l.b16 %v4044
        %v4077 = vunpack.c.l.b16 %v4045
        %v4078 = vunpack.c.l.b16 %v4046
        %v4079 = vunpack.c.l.b16 %v4047
        %v4080 = vunpack.c.l.b16 %v4048
        %v4081 = vunpack.c.l.b16 %v4049
        %v4082 = vunpack.c.l.b16 %v4050
        %v4083 = vunpack.c.l.b16 %v4051
        %v4084 = vunpack.c.l.b16 %v4052
        %v4085 = vpack.c.b16 %v4070, %v4069
        %v4086 = vpack.c.b16 %v4072, %v4071
        %v4087 = vpack.c.b16 %v4074, %v4073
        %v4088 = vpack.c.b16 %v4076, %v4075
        %v4089 = vpack.c.b16 %v4078, %v4077
        %v4090 = vpack.c.b16 %v4080, %v4079
        %v4091 = vpack.c.b16 %v4082, %v4081
        %v4092 = vpack.c.b16 %v4084, %v4083
        %4101 = vmatprep.subr.bf16.mxu0 0
        %4102 = vmatpush1.bf16.msra.mxu0 %v4092
        %4103 = vmatprep.subr.bf16.mxu0 0
        %4104 = vmatpush1.bf16.msra.mxu0 %v4091
        %4105 = vmatprep.subr.bf16.mxu0 0
        %4106 = vmatpush1.bf16.msra.mxu0 %v4090
        %4107 = vmatprep.subr.bf16.mxu0 0
        %4108 = vmatpush1.bf16.msra.mxu0 %v4089
        %4109 = vmatprep.subr.bf16.mxu0 0
        %4110 = vmatpush1.bf16.msra.mxu0 %v4088
        %4111 = vmatprep.subr.bf16.mxu0 0
        %4112 = vmatpush1.bf16.msra.mxu0 %v4087
        %4113 = vmatprep.subr.bf16.mxu0 0
        %4114 = vmatpush1.bf16.msra.mxu0 %v4086
        %4115 = vmatprep.subr.bf16.mxu0 0
        %4116 = vmatpush1.bf16.msra.mxu0 %v4085
        %4117 = vmatprep.subr.bf16.mxu0 0
        %4118 = vmatpush2.bf16.msra.mxu0 0
        %4119 = vmatprep.subr.bf16.mxu0 0
        %4120 = vmatpush2.bf16.msra.mxu0 0
        %4121 = vmatprep.subr.bf16.mxu0 0
        %4122 = vmatpush2.bf16.msra.mxu0 0
        %4123 = vmatprep.subr.bf16.mxu0 0
        %4124 = vmatpush2.bf16.msra.mxu0 0
        %4125 = vmatprep.subr.bf16.mxu0 0
        %4126 = vmatpush2.bf16.msra.mxu0 0
        %4127 = vmatprep.subr.bf16.mxu0 0
        %4128 = vmatpush2.bf16.msra.mxu0 0
        %4129 = vmatprep.subr.bf16.mxu0 0
        %4130 = vmatpush2.bf16.msra.mxu0 0
        %4131 = vmatprep.subr.bf16.mxu0 0
        %4132 = vmatpush2.bf16.msra.mxu0 0
        %4133 = vmatprep.mubr.bf16.mxu0 0
        %4134 = vmatmul.mubr.bf16.gmra.mxu0 %v3777
        %v4135 = vpop.f32.mrf.mxu0
        %v4136 = vadd.f32 0.0, %v4135
        %v4137 = vpop.f32.mrf.mxu0
        %v4138 = vpop.f32.mrf.mxu0
        %v4139 = vadd.f32 0.0, %v4138
        %v4140 = vpop.f32.mrf.mxu0
        %4141 = vmatprep.mubr.bf16.mxu0 0
        %4142 = vmatmul.mubr.bf16.gmra.mxu0 %v3778
        %v4143 = vpop.f32.mrf.mxu0
        %v4144 = vadd.f32 0.0, %v4143
        %v4145 = vpop.f32.mrf.mxu0
        %v4146 = vpop.f32.mrf.mxu0
        %v4147 = vadd.f32 0.0, %v4146
        %v4148 = vpop.f32.mrf.mxu0
        %4149 = vmatprep.mubr.bf16.mxu0 0
        %4150 = vmatmul.mubr.bf16.gmra.mxu0 %v3779
        %v4151 = vpop.f32.mrf.mxu0
        %v4152 = vadd.f32 0.0, %v4151
        %v4153 = vpop.f32.mrf.mxu0
        %v4154 = vpop.f32.mrf.mxu0
        %v4155 = vadd.f32 0.0, %v4154
        %v4156 = vpop.f32.mrf.mxu0
        %4157 = vmatprep.mubr.bf16.mxu0 0
        %4158 = vmatmul.mubr.bf16.gmra.mxu0 %v3780
        %v4159 = vpop.f32.mrf.mxu0
        %v4160 = vadd.f32 0.0, %v4159
        %v4161 = vpop.f32.mrf.mxu0
        %v4162 = vpop.f32.mrf.mxu0
        %v4163 = vadd.f32 0.0, %v4162
        %v4164 = vpop.f32.mrf.mxu0
        %4165 = vmatprep.mubr.bf16.mxu0 0
        %4166 = vmatmul.mubr.bf16.gmra.mxu0 %v3781
        %v4167 = vpop.f32.mrf.mxu0
        %v4168 = vadd.f32 0.0, %v4167
        %v4169 = vpop.f32.mrf.mxu0
        %v4170 = vpop.f32.mrf.mxu0
        %v4171 = vadd.f32 0.0, %v4170
        %v4172 = vpop.f32.mrf.mxu0
        %4173 = vmatprep.mubr.bf16.mxu0 0
        %4174 = vmatmul.mubr.bf16.gmra.mxu0 %v3782
        %v4175 = vpop.f32.mrf.mxu0
        %v4176 = vadd.f32 0.0, %v4175
        %v4177 = vpop.f32.mrf.mxu0
        %v4178 = vpop.f32.mrf.mxu0
        %v4179 = vadd.f32 0.0, %v4178
        %v4180 = vpop.f32.mrf.mxu0
        %4181 = vmatprep.mubr.bf16.mxu0 0
        %4182 = vmatmul.mubr.bf16.gmra.mxu0 %v3783
        %v4183 = vpop.f32.mrf.mxu0
        %v4184 = vadd.f32 0.0, %v4183
        %v4185 = vpop.f32.mrf.mxu0
        %v4186 = vpop.f32.mrf.mxu0
        %v4187 = vadd.f32 0.0, %v4186
        %v4188 = vpop.f32.mrf.mxu0
        %4189 = vmatprep.mubr.bf16.mxu0 0
        %4190 = vmatmul.mubr.bf16.gmra.mxu0 %v3784
        %v4191 = vpop.f32.mrf.mxu0
        %v4192 = vadd.f32 0.0, %v4191
        %v4193 = vpop.f32.mrf.mxu0
        %v4194 = vpop.f32.mrf.mxu0
        %v4195 = vadd.f32 0.0, %v4194
        %v4196 = vpop.f32.mrf.mxu0
        %4197 = vmatprep.mubr.bf16.mxu0 0
        %4198 = vmatmul.mubr.bf16.gmra.mxu0 %v3785
        %v4199 = vpop.f32.mrf.mxu0
        %v4200 = vadd.f32 0.0, %v4199
        %v4201 = vpop.f32.mrf.mxu0
        %v4202 = vpop.f32.mrf.mxu0
        %v4203 = vadd.f32 0.0, %v4202
        %v4204 = vpop.f32.mrf.mxu0
        %4205 = vmatprep.mubr.bf16.mxu0 0
        %4206 = vmatmul.mubr.bf16.gmra.mxu0 %v3786
        %v4207 = vpop.f32.mrf.mxu0
        %v4208 = vadd.f32 0.0, %v4207
        %v4209 = vpop.f32.mrf.mxu0
        %v4210 = vpop.f32.mrf.mxu0
        %v4211 = vadd.f32 0.0, %v4210
        %v4212 = vpop.f32.mrf.mxu0
        %4213 = vmatprep.mubr.bf16.mxu0 0
        %4214 = vmatmul.mubr.bf16.gmra.mxu0 %v3787
        %v4215 = vpop.f32.mrf.mxu0
        %v4216 = vadd.f32 0.0, %v4215
        %v4217 = vpop.f32.mrf.mxu0
        %v4218 = vpop.f32.mrf.mxu0
        %v4219 = vadd.f32 0.0, %v4218
        %v4220 = vpop.f32.mrf.mxu0
        %4221 = vmatprep.mubr.bf16.mxu0 0
        %4222 = vmatmul.mubr.bf16.gmra.mxu0 %v3788
        %v4223 = vpop.f32.mrf.mxu0
        %v4224 = vadd.f32 0.0, %v4223
        %v4225 = vpop.f32.mrf.mxu0
        %v4226 = vpop.f32.mrf.mxu0
        %v4227 = vadd.f32 0.0, %v4226
        %v4228 = vpop.f32.mrf.mxu0
        %4229 = vmatprep.mubr.bf16.mxu0 0
        %4230 = vmatmul.mubr.bf16.gmra.mxu0 %v3789
        %v4231 = vpop.f32.mrf.mxu0
        %v4232 = vadd.f32 0.0, %v4231
        %v4233 = vpop.f32.mrf.mxu0
        %v4234 = vpop.f32.mrf.mxu0
        %v4235 = vadd.f32 0.0, %v4234
        %v4236 = vpop.f32.mrf.mxu0
        %4237 = vmatprep.mubr.bf16.mxu0 0
        %4238 = vmatmul.mubr.bf16.gmra.mxu0 %v3790
        %v4239 = vpop.f32.mrf.mxu0
        %v4240 = vadd.f32 0.0, %v4239
        %v4241 = vpop.f32.mrf.mxu0
        %v4242 = vpop.f32.mrf.mxu0
        %v4243 = vadd.f32 0.0, %v4242
        %v4244 = vpop.f32.mrf.mxu0
        %4245 = vmatprep.mubr.bf16.mxu0 0
        %4246 = vmatmul.mubr.bf16.gmra.mxu0 %v3791
        %v4247 = vpop.f32.mrf.mxu0
        %v4248 = vadd.f32 0.0, %v4247
        %v4249 = vpop.f32.mrf.mxu0
        %v4250 = vpop.f32.mrf.mxu0
        %v4251 = vadd.f32 0.0, %v4250
        %v4252 = vpop.f32.mrf.mxu0
        %4253 = vmatprep.mubr.bf16.mxu0 0
        %4254 = vmatmul.mubr.bf16.gmra.mxu0 %v3792
        %v4255 = vpop.f32.mrf.mxu0
        %v4256 = vadd.f32 0.0, %v4255
        %v4257 = vpop.f32.mrf.mxu0
        %v4258 = vpop.f32.mrf.mxu0
        %v4259 = vadd.f32 0.0, %v4258
        %v4260 = vpop.f32.mrf.mxu0
        %4261 = vdwg.mxu0
        %vm4262 = vcmp.ge.s32.totalorder %v627, 2
        %vm4263 = vcmp.ge.s32.totalorder %v628, 2
        %vm4264 = vcmp.ge.s32.totalorder %v629, 2
        %vm4265 = vcmp.ge.s32.totalorder %v630, 2
        %vm4266 = vcmp.ge.s32.totalorder %v631, 2
        %vm4267 = vcmp.ge.s32.totalorder %v632, 2
        %vm4268 = vcmp.ge.s32.totalorder %v633, 2
        %vm4269 = vcmp.ge.s32.totalorder %v634, 2
        %vm4270 = vcmp.ge.s32.totalorder %v635, 2
        %vm4271 = vcmp.ge.s32.totalorder %v636, 2
        %vm4272 = vcmp.ge.s32.totalorder %v637, 2
        %vm4273 = vcmp.ge.s32.totalorder %v638, 2
        %vm4274 = vcmp.ge.s32.totalorder %v639, 2
        %vm4275 = vcmp.ge.s32.totalorder %v640, 2
        %vm4276 = vcmp.ge.s32.totalorder %v641, 2
        %vm4277 = vcmp.ge.s32.totalorder %v642, 2
        %vm4278 = vcmp.ge.s32.totalorder %v643, 2
        %vm4279 = vcmp.ge.s32.totalorder %v644, 2
        %vm4280 = vcmp.ge.s32.totalorder %v645, 2
        %vm4281 = vcmp.ge.s32.totalorder %v646, 2
        %vm4282 = vcmp.ge.s32.totalorder %v647, 2
        %vm4283 = vcmp.ge.s32.totalorder %v648, 2
        %vm4284 = vcmp.ge.s32.totalorder %v649, 2
        %vm4285 = vcmp.ge.s32.totalorder %v650, 2
        %vm4286 = vcmp.ge.s32.totalorder %v651, 2
        %vm4287 = vcmp.ge.s32.totalorder %v652, 2
        %vm4288 = vcmp.ge.s32.totalorder %v653, 2
        %vm4289 = vcmp.ge.s32.totalorder %v654, 2
        %vm4290 = vcmp.ge.s32.totalorder %v655, 2
        %vm4291 = vcmp.ge.s32.totalorder %v656, 2
        %vm4292 = vcmp.ge.s32.totalorder %v657, 2
        %vm4293 = vcmp.ge.s32.totalorder %v658, 2
        %v4294 = vsel %vm4262, 1, 0
        %v4295 = vsel %vm4263, 1, 0
        %v4296 = vsel %vm4264, 1, 0
        %v4297 = vsel %vm4265, 1, 0
        %v4298 = vsel %vm4266, 1, 0
        %v4299 = vsel %vm4267, 1, 0
        %v4300 = vsel %vm4268, 1, 0
        %v4301 = vsel %vm4269, 1, 0
        %v4302 = vsel %vm4270, 1, 0
        %v4303 = vsel %vm4271, 1, 0
        %v4304 = vsel %vm4272, 1, 0
        %v4305 = vsel %vm4273, 1, 0
        %v4306 = vsel %vm4274, 1, 0
        %v4307 = vsel %vm4275, 1, 0
        %v4308 = vsel %vm4276, 1, 0
        %v4309 = vsel %vm4277, 1, 0
        %v4310 = vsel %vm4278, 1, 0
        %v4311 = vsel %vm4279, 1, 0
        %v4312 = vsel %vm4280, 1, 0
        %v4313 = vsel %vm4281, 1, 0
        %v4314 = vsel %vm4282, 1, 0
        %v4315 = vsel %vm4283, 1, 0
        %v4316 = vsel %vm4284, 1, 0
        %v4317 = vsel %vm4285, 1, 0
        %v4318 = vsel %vm4286, 1, 0
        %v4319 = vsel %vm4287, 1, 0
        %v4320 = vsel %vm4288, 1, 0
        %v4321 = vsel %vm4289, 1, 0
        %v4322 = vsel %vm4290, 1, 0
        %v4323 = vsel %vm4291, 1, 0
        %v4324 = vsel %vm4292, 1, 0
        %v4325 = vsel %vm4293, 1, 0
        %vm4326 = vcmp.eq.s32.totalorder %v4294, 1
        %vm4327 = vcmp.eq.s32.totalorder %v4295, 1
        %vm4328 = vcmp.eq.s32.totalorder %v4296, 1
        %vm4329 = vcmp.eq.s32.totalorder %v4297, 1
        %vm4330 = vcmp.eq.s32.totalorder %v4298, 1
        %vm4331 = vcmp.eq.s32.totalorder %v4299, 1
        %vm4332 = vcmp.eq.s32.totalorder %v4300, 1
        %vm4333 = vcmp.eq.s32.totalorder %v4301, 1
        %vm4334 = vcmp.eq.s32.totalorder %v4302, 1
        %vm4335 = vcmp.eq.s32.totalorder %v4303, 1
        %vm4336 = vcmp.eq.s32.totalorder %v4304, 1
        %vm4337 = vcmp.eq.s32.totalorder %v4305, 1
        %vm4338 = vcmp.eq.s32.totalorder %v4306, 1
        %vm4339 = vcmp.eq.s32.totalorder %v4307, 1
        %vm4340 = vcmp.eq.s32.totalorder %v4308, 1
        %vm4341 = vcmp.eq.s32.totalorder %v4309, 1
        %vm4342 = vcmp.eq.s32.totalorder %v4310, 1
        %vm4343 = vcmp.eq.s32.totalorder %v4311, 1
        %vm4344 = vcmp.eq.s32.totalorder %v4312, 1
        %vm4345 = vcmp.eq.s32.totalorder %v4313, 1
        %vm4346 = vcmp.eq.s32.totalorder %v4314, 1
        %vm4347 = vcmp.eq.s32.totalorder %v4315, 1
        %vm4348 = vcmp.eq.s32.totalorder %v4316, 1
        %vm4349 = vcmp.eq.s32.totalorder %v4317, 1
        %vm4350 = vcmp.eq.s32.totalorder %v4318, 1
        %vm4351 = vcmp.eq.s32.totalorder %v4319, 1
        %vm4352 = vcmp.eq.s32.totalorder %v4320, 1
        %vm4353 = vcmp.eq.s32.totalorder %v4321, 1
        %vm4354 = vcmp.eq.s32.totalorder %v4322, 1
        %vm4355 = vcmp.eq.s32.totalorder %v4323, 1
        %vm4356 = vcmp.eq.s32.totalorder %v4324, 1
        %vm4357 = vcmp.eq.s32.totalorder %v4325, 1
        %v4358 = vsel %vm4326, %v3910, 0.0
        %v4359 = vsel %vm4327, %v3913, 0.0
        %v4360 = vsel %vm4328, %v3918, 0.0
        %v4361 = vsel %vm4329, %v3921, 0.0
        %v4362 = vsel %vm4330, %v3926, 0.0
        %v4363 = vsel %vm4331, %v3929, 0.0
        %v4364 = vsel %vm4332, %v3934, 0.0
        %v4365 = vsel %vm4333, %v3937, 0.0
        %v4366 = vsel %vm4334, %v3942, 0.0
        %v4367 = vsel %vm4335, %v3945, 0.0
        %v4368 = vsel %vm4336, %v3950, 0.0
        %v4369 = vsel %vm4337, %v3953, 0.0
        %v4370 = vsel %vm4338, %v3958, 0.0
        %v4371 = vsel %vm4339, %v3961, 0.0
        %v4372 = vsel %vm4340, %v3966, 0.0
        %v4373 = vsel %vm4341, %v3969, 0.0
        %v4374 = vsel %vm4342, %v3974, 0.0
        %v4375 = vsel %vm4343, %v3977, 0.0
        %v4376 = vsel %vm4344, %v3982, 0.0
        %v4377 = vsel %vm4345, %v3985, 0.0
        %v4378 = vsel %vm4346, %v3990, 0.0
        %v4379 = vsel %vm4347, %v3993, 0.0
        %v4380 = vsel %vm4348, %v3998, 0.0
        %v4381 = vsel %vm4349, %v4001, 0.0
        %v4382 = vsel %vm4350, %v4006, 0.0
        %v4383 = vsel %vm4351, %v4009, 0.0
        %v4384 = vsel %vm4352, %v4014, 0.0
        %v4385 = vsel %vm4353, %v4017, 0.0
        %v4386 = vsel %vm4354, %v4022, 0.0
        %v4387 = vsel %vm4355, %v4025, 0.0
        %v4388 = vsel %vm4356, %v4030, 0.0
        %v4389 = vsel %vm4357, %v4033, 0.0
        %vm4390 = vcmp.lt.s32.totalorder %v627, 14
        %vm4391 = vcmp.lt.s32.totalorder %v628, 14
        %vm4392 = vcmp.lt.s32.totalorder %v629, 14
        %vm4393 = vcmp.lt.s32.totalorder %v630, 14
        %vm4394 = vcmp.lt.s32.totalorder %v631, 14
        %vm4395 = vcmp.lt.s32.totalorder %v632, 14
        %vm4396 = vcmp.lt.s32.totalorder %v633, 14
        %vm4397 = vcmp.lt.s32.totalorder %v634, 14
        %vm4398 = vcmp.lt.s32.totalorder %v635, 14
        %vm4399 = vcmp.lt.s32.totalorder %v636, 14
        %vm4400 = vcmp.lt.s32.totalorder %v637, 14
        %vm4401 = vcmp.lt.s32.totalorder %v638, 14
        %vm4402 = vcmp.lt.s32.totalorder %v639, 14
        %vm4403 = vcmp.lt.s32.totalorder %v640, 14
        %vm4404 = vcmp.lt.s32.totalorder %v641, 14
        %vm4405 = vcmp.lt.s32.totalorder %v642, 14
        %vm4406 = vcmp.lt.s32.totalorder %v643, 14
        %vm4407 = vcmp.lt.s32.totalorder %v644, 14
        %vm4408 = vcmp.lt.s32.totalorder %v645, 14
        %vm4409 = vcmp.lt.s32.totalorder %v646, 14
        %vm4410 = vcmp.lt.s32.totalorder %v647, 14
        %vm4411 = vcmp.lt.s32.totalorder %v648, 14
        %vm4412 = vcmp.lt.s32.totalorder %v649, 14
        %vm4413 = vcmp.lt.s32.totalorder %v650, 14
        %vm4414 = vcmp.lt.s32.totalorder %v651, 14
        %vm4415 = vcmp.lt.s32.totalorder %v652, 14
        %vm4416 = vcmp.lt.s32.totalorder %v653, 14
        %vm4417 = vcmp.lt.s32.totalorder %v654, 14
        %vm4418 = vcmp.lt.s32.totalorder %v655, 14
        %vm4419 = vcmp.lt.s32.totalorder %v656, 14
        %vm4420 = vcmp.lt.s32.totalorder %v657, 14
        %vm4421 = vcmp.lt.s32.totalorder %v658, 14
        %v4422 = vsel %vm4390, 1, 0
        %v4423 = vsel %vm4391, 1, 0
        %v4424 = vsel %vm4392, 1, 0
        %v4425 = vsel %vm4393, 1, 0
        %v4426 = vsel %vm4394, 1, 0
        %v4427 = vsel %vm4395, 1, 0
        %v4428 = vsel %vm4396, 1, 0
        %v4429 = vsel %vm4397, 1, 0
        %v4430 = vsel %vm4398, 1, 0
        %v4431 = vsel %vm4399, 1, 0
        %v4432 = vsel %vm4400, 1, 0
        %v4433 = vsel %vm4401, 1, 0
        %v4434 = vsel %vm4402, 1, 0
        %v4435 = vsel %vm4403, 1, 0
        %v4436 = vsel %vm4404, 1, 0
        %v4437 = vsel %vm4405, 1, 0
        %v4438 = vsel %vm4406, 1, 0
        %v4439 = vsel %vm4407, 1, 0
        %v4440 = vsel %vm4408, 1, 0
        %v4441 = vsel %vm4409, 1, 0
        %v4442 = vsel %vm4410, 1, 0
        %v4443 = vsel %vm4411, 1, 0
        %v4444 = vsel %vm4412, 1, 0
        %v4445 = vsel %vm4413, 1, 0
        %v4446 = vsel %vm4414, 1, 0
        %v4447 = vsel %vm4415, 1, 0
        %v4448 = vsel %vm4416, 1, 0
        %v4449 = vsel %vm4417, 1, 0
        %v4450 = vsel %vm4418, 1, 0
        %v4451 = vsel %vm4419, 1, 0
        %v4452 = vsel %vm4420, 1, 0
        %v4453 = vsel %vm4421, 1, 0
        %vm4454 = vcmp.eq.s32.totalorder %v4422, 1
        %vm4455 = vcmp.eq.s32.totalorder %v4423, 1
        %vm4456 = vcmp.eq.s32.totalorder %v4424, 1
        %vm4457 = vcmp.eq.s32.totalorder %v4425, 1
        %vm4458 = vcmp.eq.s32.totalorder %v4426, 1
        %vm4459 = vcmp.eq.s32.totalorder %v4427, 1
        %vm4460 = vcmp.eq.s32.totalorder %v4428, 1
        %vm4461 = vcmp.eq.s32.totalorder %v4429, 1
        %vm4462 = vcmp.eq.s32.totalorder %v4430, 1
        %vm4463 = vcmp.eq.s32.totalorder %v4431, 1
        %vm4464 = vcmp.eq.s32.totalorder %v4432, 1
        %vm4465 = vcmp.eq.s32.totalorder %v4433, 1
        %vm4466 = vcmp.eq.s32.totalorder %v4434, 1
        %vm4467 = vcmp.eq.s32.totalorder %v4435, 1
        %vm4468 = vcmp.eq.s32.totalorder %v4436, 1
        %vm4469 = vcmp.eq.s32.totalorder %v4437, 1
        %vm4470 = vcmp.eq.s32.totalorder %v4438, 1
        %vm4471 = vcmp.eq.s32.totalorder %v4439, 1
        %vm4472 = vcmp.eq.s32.totalorder %v4440, 1
        %vm4473 = vcmp.eq.s32.totalorder %v4441, 1
        %vm4474 = vcmp.eq.s32.totalorder %v4442, 1
        %vm4475 = vcmp.eq.s32.totalorder %v4443, 1
        %vm4476 = vcmp.eq.s32.totalorder %v4444, 1
        %vm4477 = vcmp.eq.s32.totalorder %v4445, 1
        %vm4478 = vcmp.eq.s32.totalorder %v4446, 1
        %vm4479 = vcmp.eq.s32.totalorder %v4447, 1
        %vm4480 = vcmp.eq.s32.totalorder %v4448, 1
        %vm4481 = vcmp.eq.s32.totalorder %v4449, 1
        %vm4482 = vcmp.eq.s32.totalorder %v4450, 1
        %vm4483 = vcmp.eq.s32.totalorder %v4451, 1
        %vm4484 = vcmp.eq.s32.totalorder %v4452, 1
        %vm4485 = vcmp.eq.s32.totalorder %v4453, 1
        %v4486 = vsel %vm4454, %v4136, 0.0
        %v4487 = vsel %vm4455, %v4139, 0.0
        %v4488 = vsel %vm4456, %v4144, 0.0
        %v4489 = vsel %vm4457, %v4147, 0.0
        %v4490 = vsel %vm4458, %v4152, 0.0
        %v4491 = vsel %vm4459, %v4155, 0.0
        %v4492 = vsel %vm4460, %v4160, 0.0
        %v4493 = vsel %vm4461, %v4163, 0.0
        %v4494 = vsel %vm4462, %v4168, 0.0
        %v4495 = vsel %vm4463, %v4171, 0.0
        %v4496 = vsel %vm4464, %v4176, 0.0
        %v4497 = vsel %vm4465, %v4179, 0.0
        %v4498 = vsel %vm4466, %v4184, 0.0
        %v4499 = vsel %vm4467, %v4187, 0.0
        %v4500 = vsel %vm4468, %v4192, 0.0
        %v4501 = vsel %vm4469, %v4195, 0.0
        %v4502 = vsel %vm4470, %v4200, 0.0
        %v4503 = vsel %vm4471, %v4203, 0.0
        %v4504 = vsel %vm4472, %v4208, 0.0
        %v4505 = vsel %vm4473, %v4211, 0.0
        %v4506 = vsel %vm4474, %v4216, 0.0
        %v4507 = vsel %vm4475, %v4219, 0.0
        %v4508 = vsel %vm4476, %v4224, 0.0
        %v4509 = vsel %vm4477, %v4227, 0.0
        %v4510 = vsel %vm4478, %v4232, 0.0
        %v4511 = vsel %vm4479, %v4235, 0.0
        %v4512 = vsel %vm4480, %v4240, 0.0
        %v4513 = vsel %vm4481, %v4243, 0.0
        %v4514 = vsel %vm4482, %v4248, 0.0
        %v4515 = vsel %vm4483, %v4251, 0.0
        %v4516 = vsel %vm4484, %v4256, 0.0
        %v4517 = vsel %vm4485, %v4259, 0.0
        %v4534 = vunpack.c.l.b16 %v3794
        %v4535 = vunpack.c.l.b16 %v3795
        %v4536 = vunpack.c.l.b16 %v3796
        %v4537 = vunpack.c.l.b16 %v3797
        %v4538 = vunpack.c.l.b16 %v3798
        %v4539 = vunpack.c.l.b16 %v3799
        %v4540 = vunpack.c.l.b16 %v3800
        %v4541 = vunpack.c.l.b16 %v3801
        %v4542 = vunpack.c.l.b16 %v3802
        %v4543 = vunpack.c.l.b16 %v3803
        %v4544 = vunpack.c.l.b16 %v3804
        %v4545 = vunpack.c.l.b16 %v3805
        %v4546 = vunpack.c.l.b16 %v3806
        %v4547 = vunpack.c.l.b16 %v3807
        %v4548 = vunpack.c.l.b16 %v3808
        %v4549 = vunpack.c.l.b16 %v3809
        %v4550 = vpack.c.b16 %v4535, %v4534
        %v4551 = vpack.c.b16 %v4537, %v4536
        %v4552 = vpack.c.b16 %v4539, %v4538
        %v4553 = vpack.c.b16 %v4541, %v4540
        %v4554 = vpack.c.b16 %v4543, %v4542
        %v4555 = vpack.c.b16 %v4545, %v4544
        %v4556 = vpack.c.b16 %v4547, %v4546
        %v4557 = vpack.c.b16 %v4549, %v4548
        %4566 = vmatprep.subr.bf16.mxu0 0
        %4567 = vmatpush1.bf16.msra.mxu0 %v4557
        %4568 = vmatprep.subr.bf16.mxu0 0
        %4569 = vmatpush1.bf16.msra.mxu0 %v4556
        %4570 = vmatprep.subr.bf16.mxu0 0
        %4571 = vmatpush1.bf16.msra.mxu0 %v4555
        %4572 = vmatprep.subr.bf16.mxu0 0
        %4573 = vmatpush1.bf16.msra.mxu0 %v4554
        %4574 = vmatprep.subr.bf16.mxu0 0
        %4575 = vmatpush1.bf16.msra.mxu0 %v4553
        %4576 = vmatprep.subr.bf16.mxu0 0
        %4577 = vmatpush1.bf16.msra.mxu0 %v4552
        %4578 = vmatprep.subr.bf16.mxu0 0
        %4579 = vmatpush1.bf16.msra.mxu0 %v4551
        %4580 = vmatprep.subr.bf16.mxu0 0
        %4581 = vmatpush1.bf16.msra.mxu0 %v4550
        %4582 = vmatprep.subr.bf16.mxu0 0
        %4583 = vmatpush2.bf16.msra.mxu0 0
        %4584 = vmatprep.subr.bf16.mxu0 0
        %4585 = vmatpush2.bf16.msra.mxu0 0
        %4586 = vmatprep.subr.bf16.mxu0 0
        %4587 = vmatpush2.bf16.msra.mxu0 0
        %4588 = vmatprep.subr.bf16.mxu0 0
        %4589 = vmatpush2.bf16.msra.mxu0 0
        %4590 = vmatprep.subr.bf16.mxu0 0
        %4591 = vmatpush2.bf16.msra.mxu0 0
        %4592 = vmatprep.subr.bf16.mxu0 0
        %4593 = vmatpush2.bf16.msra.mxu0 0
        %4594 = vmatprep.subr.bf16.mxu0 0
        %4595 = vmatpush2.bf16.msra.mxu0 0
        %4596 = vmatprep.subr.bf16.mxu0 0
        %4597 = vmatpush2.bf16.msra.mxu0 0
        %4598 = vmatprep.mubr.bf16.mxu0 0
        %4599 = vmatmul.mubr.bf16.gmra.mxu0 %v3681
        %v4600 = vpop.f32.mrf.mxu0
        %v4601 = vadd.f32 %v4358, %v4600
        %v4602 = vpop.f32.mrf.mxu0
        %v4603 = vpop.f32.mrf.mxu0
        %v4604 = vadd.f32 %v4359, %v4603
        %v4605 = vpop.f32.mrf.mxu0
        %4606 = vmatprep.mubr.bf16.mxu0 0
        %4607 = vmatmul.mubr.bf16.gmra.mxu0 %v3682
        %v4608 = vpop.f32.mrf.mxu0
        %v4609 = vadd.f32 %v4360, %v4608
        %v4610 = vpop.f32.mrf.mxu0
        %v4611 = vpop.f32.mrf.mxu0
        %v4612 = vadd.f32 %v4361, %v4611
        %v4613 = vpop.f32.mrf.mxu0
        %4614 = vmatprep.mubr.bf16.mxu0 0
        %4615 = vmatmul.mubr.bf16.gmra.mxu0 %v3683
        %v4616 = vpop.f32.mrf.mxu0
        %v4617 = vadd.f32 %v4362, %v4616
        %v4618 = vpop.f32.mrf.mxu0
        %v4619 = vpop.f32.mrf.mxu0
        %v4620 = vadd.f32 %v4363, %v4619
        %v4621 = vpop.f32.mrf.mxu0
        %4622 = vmatprep.mubr.bf16.mxu0 0
        %4623 = vmatmul.mubr.bf16.gmra.mxu0 %v3684
        %v4624 = vpop.f32.mrf.mxu0
        %v4625 = vadd.f32 %v4364, %v4624
        %v4626 = vpop.f32.mrf.mxu0
        %v4627 = vpop.f32.mrf.mxu0
        %v4628 = vadd.f32 %v4365, %v4627
        %v4629 = vpop.f32.mrf.mxu0
        %4630 = vmatprep.mubr.bf16.mxu0 0
        %4631 = vmatmul.mubr.bf16.gmra.mxu0 %v3685
        %v4632 = vpop.f32.mrf.mxu0
        %v4633 = vadd.f32 %v4366, %v4632
        %v4634 = vpop.f32.mrf.mxu0
        %v4635 = vpop.f32.mrf.mxu0
        %v4636 = vadd.f32 %v4367, %v4635
        %v4637 = vpop.f32.mrf.mxu0
        %4638 = vmatprep.mubr.bf16.mxu0 0
        %4639 = vmatmul.mubr.bf16.gmra.mxu0 %v3686
        %v4640 = vpop.f32.mrf.mxu0
        %v4641 = vadd.f32 %v4368, %v4640
        %v4642 = vpop.f32.mrf.mxu0
        %v4643 = vpop.f32.mrf.mxu0
        %v4644 = vadd.f32 %v4369, %v4643
        %v4645 = vpop.f32.mrf.mxu0
        %4646 = vmatprep.mubr.bf16.mxu0 0
        %4647 = vmatmul.mubr.bf16.gmra.mxu0 %v3687
        %v4648 = vpop.f32.mrf.mxu0
        %v4649 = vadd.f32 %v4370, %v4648
        %v4650 = vpop.f32.mrf.mxu0
        %v4651 = vpop.f32.mrf.mxu0
        %v4652 = vadd.f32 %v4371, %v4651
        %v4653 = vpop.f32.mrf.mxu0
        %4654 = vmatprep.mubr.bf16.mxu0 0
        %4655 = vmatmul.mubr.bf16.gmra.mxu0 %v3688
        %v4656 = vpop.f32.mrf.mxu0
        %v4657 = vadd.f32 %v4372, %v4656
        %v4658 = vpop.f32.mrf.mxu0
        %v4659 = vpop.f32.mrf.mxu0
        %v4660 = vadd.f32 %v4373, %v4659
        %v4661 = vpop.f32.mrf.mxu0
        %4662 = vmatprep.mubr.bf16.mxu0 0
        %4663 = vmatmul.mubr.bf16.gmra.mxu0 %v3689
        %v4664 = vpop.f32.mrf.mxu0
        %v4665 = vadd.f32 %v4374, %v4664
        %v4666 = vpop.f32.mrf.mxu0
        %v4667 = vpop.f32.mrf.mxu0
        %v4668 = vadd.f32 %v4375, %v4667
        %v4669 = vpop.f32.mrf.mxu0
        %4670 = vmatprep.mubr.bf16.mxu0 0
        %4671 = vmatmul.mubr.bf16.gmra.mxu0 %v3690
        %v4672 = vpop.f32.mrf.mxu0
        %v4673 = vadd.f32 %v4376, %v4672
        %v4674 = vpop.f32.mrf.mxu0
        %v4675 = vpop.f32.mrf.mxu0
        %v4676 = vadd.f32 %v4377, %v4675
        %v4677 = vpop.f32.mrf.mxu0
        %4678 = vmatprep.mubr.bf16.mxu0 0
        %4679 = vmatmul.mubr.bf16.gmra.mxu0 %v3691
        %v4680 = vpop.f32.mrf.mxu0
        %v4681 = vadd.f32 %v4378, %v4680
        %v4682 = vpop.f32.mrf.mxu0
        %v4683 = vpop.f32.mrf.mxu0
        %v4684 = vadd.f32 %v4379, %v4683
        %v4685 = vpop.f32.mrf.mxu0
        %4686 = vmatprep.mubr.bf16.mxu0 0
        %4687 = vmatmul.mubr.bf16.gmra.mxu0 %v3692
        %v4688 = vpop.f32.mrf.mxu0
        %v4689 = vadd.f32 %v4380, %v4688
        %v4690 = vpop.f32.mrf.mxu0
        %v4691 = vpop.f32.mrf.mxu0
        %v4692 = vadd.f32 %v4381, %v4691
        %v4693 = vpop.f32.mrf.mxu0
        %4694 = vmatprep.mubr.bf16.mxu0 0
        %4695 = vmatmul.mubr.bf16.gmra.mxu0 %v3693
        %v4696 = vpop.f32.mrf.mxu0
        %v4697 = vadd.f32 %v4382, %v4696
        %v4698 = vpop.f32.mrf.mxu0
        %v4699 = vpop.f32.mrf.mxu0
        %v4700 = vadd.f32 %v4383, %v4699
        %v4701 = vpop.f32.mrf.mxu0
        %4702 = vmatprep.mubr.bf16.mxu0 0
        %4703 = vmatmul.mubr.bf16.gmra.mxu0 %v3694
        %v4704 = vpop.f32.mrf.mxu0
        %v4705 = vadd.f32 %v4384, %v4704
        %v4706 = vpop.f32.mrf.mxu0
        %v4707 = vpop.f32.mrf.mxu0
        %v4708 = vadd.f32 %v4385, %v4707
        %v4709 = vpop.f32.mrf.mxu0
        %4710 = vmatprep.mubr.bf16.mxu0 0
        %4711 = vmatmul.mubr.bf16.gmra.mxu0 %v3695
        %v4712 = vpop.f32.mrf.mxu0
        %v4713 = vadd.f32 %v4386, %v4712
        %v4714 = vpop.f32.mrf.mxu0
        %v4715 = vpop.f32.mrf.mxu0
        %v4716 = vadd.f32 %v4387, %v4715
        %v4717 = vpop.f32.mrf.mxu0
        %4718 = vmatprep.mubr.bf16.mxu0 0
        %4719 = vmatmul.mubr.bf16.gmra.mxu0 %v3696
        %v4720 = vpop.f32.mrf.mxu0
        %v4721 = vadd.f32 %v4388, %v4720
        %v4722 = vpop.f32.mrf.mxu0
        %v4723 = vpop.f32.mrf.mxu0
        %v4724 = vadd.f32 %v4389, %v4723
        %v4725 = vpop.f32.mrf.mxu0
        %4726 = vdwg.mxu0
        %v4727 = vadd.f32 %v4601, %v4486
        %v4728 = vadd.f32 %v4604, %v4487
        %v4729 = vadd.f32 %v4609, %v4488
        %v4730 = vadd.f32 %v4612, %v4489
        %v4731 = vadd.f32 %v4617, %v4490
        %v4732 = vadd.f32 %v4620, %v4491
        %v4733 = vadd.f32 %v4625, %v4492
        %v4734 = vadd.f32 %v4628, %v4493
        %v4735 = vadd.f32 %v4633, %v4494
        %v4736 = vadd.f32 %v4636, %v4495
        %v4737 = vadd.f32 %v4641, %v4496
        %v4738 = vadd.f32 %v4644, %v4497
        %v4739 = vadd.f32 %v4649, %v4498
        %v4740 = vadd.f32 %v4652, %v4499
        %v4741 = vadd.f32 %v4657, %v4500
        %v4742 = vadd.f32 %v4660, %v4501
        %v4743 = vadd.f32 %v4665, %v4502
        %v4744 = vadd.f32 %v4668, %v4503
        %v4745 = vadd.f32 %v4673, %v4504
        %v4746 = vadd.f32 %v4676, %v4505
        %v4747 = vadd.f32 %v4681, %v4506
        %v4748 = vadd.f32 %v4684, %v4507
        %v4749 = vadd.f32 %v4689, %v4508
        %v4750 = vadd.f32 %v4692, %v4509
        %v4751 = vadd.f32 %v4697, %v4510
        %v4752 = vadd.f32 %v4700, %v4511
        %v4753 = vadd.f32 %v4705, %v4512
        %v4754 = vadd.f32 %v4708, %v4513
        %v4755 = vadd.f32 %v4713, %v4514
        %v4756 = vadd.f32 %v4716, %v4515
        %v4757 = vadd.f32 %v4721, %v4516
        %v4758 = vadd.f32 %v4724, %v4517
        %s4759 = scalar_lea.vmem %s2, 3
        %v4760 = vld [vmem:[%s4759] sm:$0x1]
        %v4762 = vlaneseq
        %v4763 = vshrl.u32 %v4762, 7
        %v4764 = vsub.s32 0, %v4763
        %v4765 = vrot.slane %v4760, %v4764
        %v4767 = vadd.f32 %v4727, %v4765
        %v4768 = vadd.f32 %v4728, %v4765
        %v4769 = vadd.f32 %v4729, %v4765
        %v4770 = vadd.f32 %v4730, %v4765
        %v4771 = vadd.f32 %v4731, %v4765
        %v4772 = vadd.f32 %v4732, %v4765
        %v4773 = vadd.f32 %v4733, %v4765
        %v4774 = vadd.f32 %v4734, %v4765
        %v4775 = vadd.f32 %v4735, %v4765
        %v4776 = vadd.f32 %v4736, %v4765
        %v4777 = vadd.f32 %v4737, %v4765
        %v4778 = vadd.f32 %v4738, %v4765
        %v4779 = vadd.f32 %v4739, %v4765
        %v4780 = vadd.f32 %v4740, %v4765
        %v4781 = vadd.f32 %v4741, %v4765
        %v4782 = vadd.f32 %v4742, %v4765
        %v4783 = vadd.f32 %v4743, %v4765
        %v4784 = vadd.f32 %v4744, %v4765
        %v4785 = vadd.f32 %v4745, %v4765
        %v4786 = vadd.f32 %v4746, %v4765
        %v4787 = vadd.f32 %v4747, %v4765
        %v4788 = vadd.f32 %v4748, %v4765
        %v4789 = vadd.f32 %v4749, %v4765
        %v4790 = vadd.f32 %v4750, %v4765
        %v4791 = vadd.f32 %v4751, %v4765
        %v4792 = vadd.f32 %v4752, %v4765
        %v4793 = vadd.f32 %v4753, %v4765
        %v4794 = vadd.f32 %v4754, %v4765
        %v4795 = vadd.f32 %v4755, %v4765
        %v4796 = vadd.f32 %v4756, %v4765
        %v4797 = vadd.f32 %v4757, %v4765
        %v4798 = vadd.f32 %v4758, %v4765
        %v4799 = vadd.f32 %v4767, %v210
        %v4800 = vadd.f32 %v4768, %v211
        %v4801 = vadd.f32 %v4769, %v212
        %v4802 = vadd.f32 %v4770, %v213
        %v4803 = vadd.f32 %v4771, %v214
        %v4804 = vadd.f32 %v4772, %v215
        %v4805 = vadd.f32 %v4773, %v216
        %v4806 = vadd.f32 %v4774, %v217
        %v4807 = vadd.f32 %v4775, %v218
        %v4808 = vadd.f32 %v4776, %v219
        %v4809 = vadd.f32 %v4777, %v220
        %v4810 = vadd.f32 %v4778, %v221
        %v4811 = vadd.f32 %v4779, %v222
        %v4812 = vadd.f32 %v4780, %v223
        %v4813 = vadd.f32 %v4781, %v224
        %v4814 = vadd.f32 %v4782, %v225
        %v4815 = vadd.f32 %v4783, %v226
        %v4816 = vadd.f32 %v4784, %v227
        %v4817 = vadd.f32 %v4785, %v228
        %v4818 = vadd.f32 %v4786, %v229
        %v4819 = vadd.f32 %v4787, %v230
        %v4820 = vadd.f32 %v4788, %v231
        %v4821 = vadd.f32 %v4789, %v232
        %v4822 = vadd.f32 %v4790, %v233
        %v4823 = vadd.f32 %v4791, %v234
        %v4824 = vadd.f32 %v4792, %v235
        %v4825 = vadd.f32 %v4793, %v236
        %v4826 = vadd.f32 %v4794, %v237
        %v4827 = vadd.f32 %v4795, %v238
        %v4828 = vadd.f32 %v4796, %v239
        %v4829 = vadd.f32 %v4797, %v240
        %v4830 = vadd.f32 %v4798, %v241
        %v4831 = vmax.f32 %v4799, 0.0
        %v4832 = vmax.f32 %v4800, 0.0
        %v4833 = vmax.f32 %v4801, 0.0
        %v4834 = vmax.f32 %v4802, 0.0
        %v4835 = vmax.f32 %v4803, 0.0
        %v4836 = vmax.f32 %v4804, 0.0
        %v4837 = vmax.f32 %v4805, 0.0
        %v4838 = vmax.f32 %v4806, 0.0
        %v4839 = vmax.f32 %v4807, 0.0
        %v4840 = vmax.f32 %v4808, 0.0
        %v4841 = vmax.f32 %v4809, 0.0
        %v4842 = vmax.f32 %v4810, 0.0
        %v4843 = vmax.f32 %v4811, 0.0
        %v4844 = vmax.f32 %v4812, 0.0
        %v4845 = vmax.f32 %v4813, 0.0
        %v4846 = vmax.f32 %v4814, 0.0
        %v4847 = vmax.f32 %v4815, 0.0
        %v4848 = vmax.f32 %v4816, 0.0
        %v4849 = vmax.f32 %v4817, 0.0
        %v4850 = vmax.f32 %v4818, 0.0
        %v4851 = vmax.f32 %v4819, 0.0
        %v4852 = vmax.f32 %v4820, 0.0
        %v4853 = vmax.f32 %v4821, 0.0
        %v4854 = vmax.f32 %v4822, 0.0
        %v4855 = vmax.f32 %v4823, 0.0
        %v4856 = vmax.f32 %v4824, 0.0
        %v4857 = vmax.f32 %v4825, 0.0
        %v4858 = vmax.f32 %v4826, 0.0
        %v4859 = vmax.f32 %v4827, 0.0
        %v4860 = vmax.f32 %v4828, 0.0
        %v4861 = vmax.f32 %v4829, 0.0
        %v4862 = vmax.f32 %v4830, 0.0
        %4863 = vst [vmem:[%s163] sm:$0xff] %v4831
        %4864 = vst [vmem:[%s163 + $0x8] sm:$0xff] %v4832
        %4865 = vst [vmem:[%s163 + $0x10] sm:$0xff] %v4833
        %4866 = vst [vmem:[%s163 + $0x18] sm:$0xff] %v4834
        %4867 = vst [vmem:[%s163 + $0x20] sm:$0xff] %v4835
        %4868 = vst [vmem:[%s163 + $0x28] sm:$0xff] %v4836
        %4869 = vst [vmem:[%s163 + $0x30] sm:$0xff] %v4837
        %4870 = vst [vmem:[%s163 + $0x38] sm:$0xff] %v4838
        %4871 = vst [vmem:[%s163 + $0x40] sm:$0xff] %v4839
        %4872 = vst [vmem:[%s163 + $0x48] sm:$0xff] %v4840
        %4873 = vst [vmem:[%s163 + $0x50] sm:$0xff] %v4841
        %4874 = vst [vmem:[%s163 + $0x58] sm:$0xff] %v4842
        %4875 = vst [vmem:[%s163 + $0x60] sm:$0xff] %v4843
        %4876 = vst [vmem:[%s163 + $0x68] sm:$0xff] %v4844
        %4877 = vst [vmem:[%s163 + $0x70] sm:$0xff] %v4845
        %4878 = vst [vmem:[%s163 + $0x78] sm:$0xff] %v4846
        %4879 = vst [vmem:[%s163 + $0x80] sm:$0xff] %v4847
        %4880 = vst [vmem:[%s163 + $0x88] sm:$0xff] %v4848
        %4881 = vst [vmem:[%s163 + $0x90] sm:$0xff] %v4849
        %4882 = vst [vmem:[%s163 + $0x98] sm:$0xff] %v4850
        %4883 = vst [vmem:[%s163 + $0xa0] sm:$0xff] %v4851
        %4884 = vst [vmem:[%s163 + $0xa8] sm:$0xff] %v4852
        %4885 = vst [vmem:[%s163 + $0xb0] sm:$0xff] %v4853
        %4886 = vst [vmem:[%s163 + $0xb8] sm:$0xff] %v4854
        %4887 = vst [vmem:[%s163 + $0xc0] sm:$0xff] %v4855
        %4888 = vst [vmem:[%s163 + $0xc8] sm:$0xff] %v4856
        %4889 = vst [vmem:[%s163 + $0xd0] sm:$0xff] %v4857
        %4890 = vst [vmem:[%s163 + $0xd8] sm:$0xff] %v4858
        %4891 = vst [vmem:[%s163 + $0xe0] sm:$0xff] %v4859
        %4892 = vst [vmem:[%s163 + $0xe8] sm:$0xff] %v4860
        %4893 = vst [vmem:[%s163 + $0xf0] sm:$0xff] %v4861
        %4894 = vst [vmem:[%s163 + $0xf8] sm:$0xff] %v4862
        %s4895 = sand.u32 %s93, 1
        %s4896 = scalar_lea.sflag [#allocation4], %s4895
        %s4897 = sand.u32 %s93, 1
        %s4898 = smul.addr %s4897, 256
        %s4899 = scalar_lea.vmem [#allocation3], %s4898
        // Predicated region
        $region33: #{non_bottleneck_1d_forward.1} parent=31 // pred_check
          %p4900 = pneg %p103
        $region34: #{non_bottleneck_1d_forward.1} parent=31 // pred_check_branch
          %4902 = sbr.rel (%p4900) target = $region36
        $region35: #{non_bottleneck_1d_forward.1} parent=31 // pred_region
          %s4904 = ssub.s32 4096, 4096
          %4905 = vsyncadd %s4896, %s4904
          %s4906 = smul.addr %s17, 32
          %s4907 = smul.addr %s4906, 128
          %s4908 = scalar_lea.hbm %s3, %s4907
          %s4909 = sshll.u32 %s4899, 4
          %s4910 = int_to_ptr.vmem [resolvable:$true] %s4909
          %4915 = dma.vmem_to_hbm [thread:$0]  %s4910, 4096, %s4908, %s4896, 128, 128, 8
        $region36: #{non_bottleneck_1d_forward.1} parent=31 // pred_fallthru
          _
      $region32: #{non_bottleneck_1d_forward.1} parent=5 // pred_fallthru
        _
      %p4916 = scmp.le.s32.totalorder 2, %s12
      // Predicated region
      $region37: #{non_bottleneck_1d_forward.1} parent=5 // pred_check
        %p4917 = pneg %p4916
      $region38: #{non_bottleneck_1d_forward.1} parent=5 // pred_check_branch
        %4919 = sbr.rel (%p4917) target = $region40
      $region39: #{non_bottleneck_1d_forward.1} parent=5 // pred_region
        %s4920 = ssub.s32 %s12, 2
        // Predicated region
        $region41: #{non_bottleneck_1d_forward.1} parent=39 // pred_check
          %p4921 = pneg %p109
        $region42: #{non_bottleneck_1d_forward.1} parent=39 // pred_check_branch
          %4923 = sbr.rel (%p4921) target = $region44
        $region43: #{non_bottleneck_1d_forward.1} parent=39 // pred_region
          %s4924 = sand.u32 %s94, 1
          %s4925 = scalar_lea.sflag [#allocation4], %s4924
          %s4926 = sand.u32 %s94, 1
          %s4927 = smul.addr %s4926, 256
          %s4928 = scalar_lea.vmem [#allocation3], %s4927
          %4929 = dma.done %s4925, 4096
        $region44: #{non_bottleneck_1d_forward.1} parent=39 // pred_fallthru
          _
      $region40: #{non_bottleneck_1d_forward.1} parent=5 // pred_fallthru
        _
    $region6: #{non_bottleneck_1d_forward.1} parent=1 // loop_footer
      %s16 = sadd.s32 1, %s12
    $region7: #{non_bottleneck_1d_forward.1} parent=1 // loop_footer_branch
      %11 = sbr.rel target = $region3
    $region8: #{non_bottleneck_1d_forward.1} parent=1 // loop_exit
      _
    %4930 = vsyncpa [#allocation4], 1
    %s4931 = scalar_lea.sflag [#allocation4], 1
    %4932 = vsyncpa %s4931, 1

</llo_original>
